<compile_context>
chip_gen: v7x
topology: tpu7x:2x2x1
jax: 0.10.0
libtpu: 0.0.40
codegen_flags: <defaults>
</compile_context>

<pallas_src>
import functools

import jax
import jax.numpy as jnp
import numpy as np
from jax.experimental import pallas as pl
from jax.experimental.pallas import tpu as pltpu

LANE = 128  # lane-dense output / head width


# ---------------- fused Pallas kernel ----------------

def _fused_blocks_kernel(x_ref, mask_ref, wc_ref, bc_ref, wl_ref, bl_ref, o_ref,
                         *, H, W, pad, nbc):
    """Conv3x3(pad=1) -> ReLU -> global avg pool -> packed linear heads, one image.

    x_ref    : [1, H*W + 2*pad, Cin]  bf16  row-flattened NHWC image, zero rows top/bottom
    mask_ref : [H*W, 2]               f32   col0: tap dx==0 valid, col1: tap dx==2 valid
    wc_ref   : [9, Cin, nbc]          bf16  packed conv weights (nbc = n_blocks*Cmid)
    bc_ref   : [1, nbc]               f32   packed conv bias
    wl_ref   : [nbc, LANE]            f32   block-diagonal linear heads (zero padded)
    bl_ref   : [1, LANE]              f32   packed linear bias (zero padded)
    o_ref    : [1, 8, LANE]           f32   logits broadcast over 8 sublanes
    """
    HW = H * W

    acc = jnp.zeros((HW, nbc), jnp.float32)
    # 3x3 conv as 9 shifted matmuls, grouped by horizontal tap offset dx so the
    # image-boundary mask is applied once per group on the f32 accumulator.
    for dx in range(3):
        part = jnp.zeros((HW, nbc), jnp.float32)
        for dy in range(3):
            s = pad + (dy - 1) * W + (dx - 1)         # static row shift into padded rows
            patch = x_ref[0, s:s + HW, :]             # [HW, Cin] bf16
            part = part + jnp.dot(patch, wc_ref[dy * 3 + dx],
                                  preferred_element_type=jnp.float32)
        if dx == 0:
            part = part * mask_ref[:, 0:1]
        elif dx == 2:
            part = part * mask_ref[:, 1:2]
        acc = acc + part

    acc = jnp.maximum(acc + bc_ref[...], 0.0)                     # bias + ReLU (f32)
    pooled = jnp.sum(acc, axis=0, keepdims=True) * (1.0 / HW)     # [1, nbc] global avg
    logits = jnp.dot(pooled, wl_ref[...],
                     preferred_element_type=jnp.float32) + bl_ref[...]   # [1, LANE]
    o_ref[0] = jnp.broadcast_to(logits, (8, LANE))                # full lane-dense tile


# ---------------- jitted forward over all blocks ----------------

@jax.jit
def _fused_forward(x_nchw, wc, bc, wl, bl):
    B, C, H, W = x_nchw.shape
    HW = H * W
    pad = W + 1                                   # zero rows so every tap is a row shift
    nbc = wc.shape[-1]
    rows = HW + 2 * pad

    # Row-flattened NHWC activations (bf16) with zero-row padding; this is ~1x the input
    # size instead of the 9x im2col patch matrix.
    x_flat = jnp.transpose(x_nchw, (0, 2, 3, 1)).reshape(B, HW, C).astype(jnp.bfloat16)
    x_flat = jnp.pad(x_flat, ((0, 0), (pad, pad), (0, 0)))

    # Horizontal-boundary masks for dx==0 / dx==2 taps (w==0 / w==W-1 output columns).
    w_col = np.arange(HW) % W
    mask = jnp.asarray(
        np.stack([(w_col > 0), (w_col < W - 1)], axis=1).astype(np.float32))

    kernel = functools.partial(_fused_blocks_kernel, H=H, W=W, pad=pad, nbc=nbc)

    out = pl.pallas_call(
        kernel,
        out_shape=jax.ShapeDtypeStruct((B, 8, LANE), jnp.float32),
        grid=(B,),
        in_specs=[
            pl.BlockSpec((1, rows, C), lambda b: (b, 0, 0)),   # per-image activation tile
            pl.BlockSpec((HW, 2), lambda b: (0, 0)),           # boundary masks (resident)
            pl.BlockSpec(wc.shape, lambda b: (0, 0, 0)),       # packed conv weights
            pl.BlockSpec(bc.shape, lambda b: (0, 0)),          # packed conv bias
            pl.BlockSpec(wl.shape, lambda b: (0, 0)),          # block-diag linear heads
            pl.BlockSpec(bl.shape, lambda b: (0, 0)),          # packed linear bias
        ],
        out_specs=pl.BlockSpec((1, 8, LANE), lambda b: (b, 0, 0)),
        compiler_params=pltpu.CompilerParams(
            dimension_semantics=("parallel",),        # batch axis -> both TCs on v7x
            vmem_limit_bytes=16 * 1024 * 1024,        # explicit, safe on v5e/v6e/v7x
        ),
    )(x_flat, mask, wc, bc, wl, bl)

    return out[:, 0, :]                               # [B, LANE]


# ---------------- parameter packing (hoisted, done once) ----------------

def pack_blocks(blocks, n_classes):
    """Pack all ClassifierBlock parameters for the single fused kernel."""
    names = list(blocks.keys())
    nb = len(names)
    cmid, cin = blocks[names[0]]["conv_w"].shape[:2]
    nbc = nb * cmid
    assert nbc <= LANE and nb * n_classes <= LANE

    wc = np.zeros((9, cin, nbc), np.float32)
    bc = np.zeros((1, nbc), np.float32)
    wl = np.zeros((nbc, LANE), np.float32)
    bl = np.zeros((1, LANE), np.float32)
    for i, name in enumerate(names):
        p = jax.tree_util.tree_map(np.asarray, blocks[name])
        # conv_w [Cmid, Cin, 3, 3] -> [9, Cin, Cmid], tap order = dy*3+dx.
        wc[:, :, i * cmid:(i + 1) * cmid] = np.transpose(
            p["conv_w"], (2, 3, 1, 0)).reshape(9, cin, cmid)
        bc[0, i * cmid:(i + 1) * cmid] = p["conv_b"]
        # Linear heads packed block-diagonally; lin_w is PyTorch [NC, Cmid].
        wl[i * cmid:(i + 1) * cmid, i * n_classes:(i + 1) * n_classes] = p["lin_w"].T
        bl[0, i * n_classes:(i + 1) * n_classes] = p["lin_b"]

    return {
        "names": names, "cmid": cmid, "nc": n_classes,
        "wc": jnp.asarray(wc, jnp.bfloat16),     # bf16 weights, f32 accumulation
        "bc": jnp.asarray(bc, jnp.float32),
        "wl": jnp.asarray(wl, jnp.float32),
        "bl": jnp.asarray(bl, jnp.float32),
    }


def combined_learner_forward(x_nchw, packed):
    """CombinedLearner.forward: {name: block.forward(x)} — one fused kernel launch."""
    logits_all = _fused_forward(x_nchw, packed["wc"], packed["bc"],
                                packed["wl"], packed["bl"])
    nc = packed["nc"]
    return {name: logits_all[:, i * nc:(i + 1) * nc]
            for i, name in enumerate(packed["names"])}


# ---------------- deterministic parameter construction ----------------

def build_blocks(key, c_in=4, c_mid=8, n_classes=2, n_blocks=2):
    """Deterministic synthetic ClassifierBlocks (CombinedLearner._blocks equivalent)."""
    blocks = {}
    for b in range(n_blocks):
        key, k1, k2, k3, k4 = jax.random.split(key, 5)
        params = {
            "conv_w": 0.1 * jax.random.normal(k1, (c_mid, c_in, 3, 3), jnp.float32),
            "conv_b": 0.1 * jax.random.normal(k2, (c_mid,), jnp.float32),
            "lin_w": 0.1 * jax.random.normal(k3, (n_classes, c_mid), jnp.float32),
            "lin_b": 0.1 * jax.random.normal(k4, (n_classes,), jnp.float32),
        }
        blocks[f"init-model--sub{b:02d}"] = params
    return blocks


# ---------------- pure-JAX reference (numerical sanity check) ----------------

def _reference_forward(x_nchw, blocks):
    x = x_nchw.astype(jnp.float32)
    out = {}
    for name, p in blocks.items():
        conv = jax.lax.conv_general_dilated(
            x, p["conv_w"], window_strides=(1, 1), padding=((1, 1), (1, 1)),
            dimension_numbers=("NCHW", "OIHW", "NCHW"))
        conv = jnp.maximum(conv + p["conv_b"][None, :, None, None], 0.0)
        pooled = jnp.mean(conv, axis=(2, 3))
        out[name] = pooled @ p["lin_w"].T + p["lin_b"][None, :]
    return out


if __name__ == "__main__":
    key = jax.random.PRNGKey(0)
    key, kx = jax.random.split(key)

    # Small NCHW input consistent with an image-classifier learner.
    x = jax.random.normal(kx, (2, 4, 16, 16), jnp.float32)

    blocks = build_blocks(key, c_in=4, c_mid=8, n_classes=2, n_blocks=2)
    packed = pack_blocks(blocks, n_classes=2)

    out = combined_learner_forward(x, packed)
    jax.block_until_ready(out)

    # Shape sanity: dict of per-block logits [B, num_classes]
    assert set(out.keys()) == set(blocks.keys())
    assert all(v.shape == (2, 2) for v in out.values())

    # Numerical sanity vs. pure-JAX f32 reference (bf16 activations/weights -> loose tol).
    ref = _reference_forward(x, blocks)
    for name in blocks:
        np.testing.assert_allclose(np.asarray(out[name]), np.asarray(ref[name]),
                                   rtol=1e-2, atol=1e-2)

    # TODO(synk): CombinedLearner's training machinery (fit / dataloaders / optimizers /
    # logging / restore_best) is host-side orchestration with no Pallas equivalent; only
    # the forward pass is implemented here.
    print("KERNEL_OK")
</pallas_src>

<mosaic_0001>
module attributes {stable_mosaic.version = 11 : i64} {
  func.func @_fused_blocks_kernel(%arg0: i32, %arg1: memref<1x290x4xbf16, #tpu.memory_space<vmem>>, %arg2: memref<256x2xf32, #tpu.memory_space<vmem>>, %arg3: memref<9x4x16xbf16, #tpu.memory_space<vmem>>, %arg4: memref<1x16xf32, #tpu.memory_space<vmem>>, %arg5: memref<16x128xf32, #tpu.memory_space<vmem>>, %arg6: memref<1x128xf32, #tpu.memory_space<vmem>>, %arg7: memref<1x8x128xf32, #tpu.memory_space<vmem>>) attributes {dimension_semantics = [#tpu.dimension_semantics<parallel>], iteration_bounds = array<i64: 2>, scalar_prefetch = 0 : i64, scratch_operands = 0 : i64, tpu.core_type = #tpu.core_type<tc>, window_params = [{transform_indices = @transform_0, window_bounds = array<i64: 1, 290, 4>}, {pipeline_mode = #tpu.pipeline_mode<synchronous>, transform_indices = @transform_1, window_bounds = array<i64: 256, 2>}, {pipeline_mode = #tpu.pipeline_mode<synchronous>, transform_indices = @transform_2, window_bounds = array<i64: 9, 4, 16>}, {pipeline_mode = #tpu.pipeline_mode<synchronous>, transform_indices = @transform_3, window_bounds = array<i64: 1, 16>}, {pipeline_mode = #tpu.pipeline_mode<synchronous>, transform_indices = @transform_4, window_bounds = array<i64: 16, 128>}, {pipeline_mode = #tpu.pipeline_mode<synchronous>, transform_indices = @transform_5, window_bounds = array<i64: 1, 128>}, {transform_indices = @transform_6, window_bounds = array<i64: 1, 8, 128>}]} {
    %cst = arith.constant 0.000000e+00 : f32
    %0 = vector.broadcast %cst : f32 to vector<256x16xf32>
    %cst_0 = arith.constant 0.000000e+00 : f32
    %1 = vector.broadcast %cst_0 : f32 to vector<256x16xf32>
    %c0 = arith.constant 0 : index
    %c0_1 = arith.constant 0 : index
    %c0_2 = arith.constant 0 : index
    %2 = vector.load %arg1[%c0, %c0_1, %c0_2] : memref<1x290x4xbf16, #tpu.memory_space<vmem>>, vector<1x256x4xbf16>
    %3 = vector.shape_cast %2 : vector<1x256x4xbf16> to vector<256x4xbf16>
    %c0_3 = arith.constant 0 : index
    %c0_4 = arith.constant 0 : index
    %c0_5 = arith.constant 0 : index
    %4 = vector.load %arg3[%c0_3, %c0_4, %c0_5] : memref<9x4x16xbf16, #tpu.memory_space<vmem>>, vector<1x4x16xbf16>
    %5 = vector.shape_cast %4 : vector<1x4x16xbf16> to vector<4x16xbf16>
    %cst_6 = arith.constant dense<0.000000e+00> : vector<256x16xf32>
    %6 = tpu.matmul %3, %5, %cst_6 {dimension_numbers = #tpu.dot_dimension_numbers<[1], [0], [0], [1], [0, 0, 1, 1], [], []>} : vector<256x4xbf16>, vector<4x16xbf16>, vector<256x16xf32> -> vector<256x16xf32>
    %7 = arith.addf %1, %6 : vector<256x16xf32>
    %c0_7 = arith.constant 0 : index
    %c16 = arith.constant 16 : index
    %c0_8 = arith.constant 0 : index
    %8 = vector.load %arg1[%c0_7, %c16, %c0_8] : memref<1x290x4xbf16, #tpu.memory_space<vmem>>, vector<1x256x4xbf16>
    %9 = vector.shape_cast %8 : vector<1x256x4xbf16> to vector<256x4xbf16>
    %c3 = arith.constant 3 : index
    %c0_9 = arith.constant 0 : index
    %c0_10 = arith.constant 0 : index
    %10 = vector.load %arg3[%c3, %c0_9, %c0_10] : memref<9x4x16xbf16, #tpu.memory_space<vmem>>, vector<1x4x16xbf16>
    %11 = vector.shape_cast %10 : vector<1x4x16xbf16> to vector<4x16xbf16>
    %cst_11 = arith.constant dense<0.000000e+00> : vector<256x16xf32>
    %12 = tpu.matmul %9, %11, %cst_11 {dimension_numbers = #tpu.dot_dimension_numbers<[1], [0], [0], [1], [0, 0, 1, 1], [], []>} : vector<256x4xbf16>, vector<4x16xbf16>, vector<256x16xf32> -> vector<256x16xf32>
    %13 = arith.addf %7, %12 : vector<256x16xf32>
    %c0_12 = arith.constant 0 : index
    %c32 = arith.constant 32 : index
    %c0_13 = arith.constant 0 : index
    %14 = vector.load %arg1[%c0_12, %c32, %c0_13] : memref<1x290x4xbf16, #tpu.memory_space<vmem>>, vector<1x256x4xbf16>
    %15 = vector.shape_cast %14 : vector<1x256x4xbf16> to vector<256x4xbf16>
    %c6 = arith.constant 6 : index
    %c0_14 = arith.constant 0 : index
    %c0_15 = arith.constant 0 : index
    %16 = vector.load %arg3[%c6, %c0_14, %c0_15] : memref<9x4x16xbf16, #tpu.memory_space<vmem>>, vector<1x4x16xbf16>
    %17 = vector.shape_cast %16 : vector<1x4x16xbf16> to vector<4x16xbf16>
    %cst_16 = arith.constant dense<0.000000e+00> : vector<256x16xf32>
    %18 = tpu.matmul %15, %17, %cst_16 {dimension_numbers = #tpu.dot_dimension_numbers<[1], [0], [0], [1], [0, 0, 1, 1], [], []>} : vector<256x4xbf16>, vector<4x16xbf16>, vector<256x16xf32> -> vector<256x16xf32>
    %19 = arith.addf %13, %18 : vector<256x16xf32>
    %c0_17 = arith.constant 0 : index
    %c0_18 = arith.constant 0 : index
    %20 = vector.load %arg2[%c0_17, %c0_18] : memref<256x2xf32, #tpu.memory_space<vmem>>, vector<256x1xf32>
    %21 = vector.broadcast %20 : vector<256x1xf32> to vector<256x16xf32>
    %22 = arith.mulf %19, %21 : vector<256x16xf32>
    %23 = arith.addf %0, %22 : vector<256x16xf32>
    %cst_19 = arith.constant 0.000000e+00 : f32
    %24 = vector.broadcast %cst_19 : f32 to vector<256x16xf32>
    %c0_20 = arith.constant 0 : index
    %c1 = arith.constant 1 : index
    %c0_21 = arith.constant 0 : index
    %25 = vector.load %arg1[%c0_20, %c1, %c0_21] : memref<1x290x4xbf16, #tpu.memory_space<vmem>>, vector<1x256x4xbf16>
    %26 = vector.shape_cast %25 : vector<1x256x4xbf16> to vector<256x4xbf16>
    %c1_22 = arith.constant 1 : index
    %c0_23 = arith.constant 0 : index
    %c0_24 = arith.constant 0 : index
    %27 = vector.load %arg3[%c1_22, %c0_23, %c0_24] : memref<9x4x16xbf16, #tpu.memory_space<vmem>>, vector<1x4x16xbf16>
    %28 = vector.shape_cast %27 : vector<1x4x16xbf16> to vector<4x16xbf16>
    %cst_25 = arith.constant dense<0.000000e+00> : vector<256x16xf32>
    %29 = tpu.matmul %26, %28, %cst_25 {dimension_numbers = #tpu.dot_dimension_numbers<[1], [0], [0], [1], [0, 0, 1, 1], [], []>} : vector<256x4xbf16>, vector<4x16xbf16>, vector<256x16xf32> -> vector<256x16xf32>
    %30 = arith.addf %24, %29 : vector<256x16xf32>
    %c0_26 = arith.constant 0 : index
    %c17 = arith.constant 17 : index
    %c0_27 = arith.constant 0 : index
    %31 = vector.load %arg1[%c0_26, %c17, %c0_27] : memref<1x290x4xbf16, #tpu.memory_space<vmem>>, vector<1x256x4xbf16>
    %32 = vector.shape_cast %31 : vector<1x256x4xbf16> to vector<256x4xbf16>
    %c4 = arith.constant 4 : index
    %c0_28 = arith.constant 0 : index
    %c0_29 = arith.constant 0 : index
    %33 = vector.load %arg3[%c4, %c0_28, %c0_29] : memref<9x4x16xbf16, #tpu.memory_space<vmem>>, vector<1x4x16xbf16>
    %34 = vector.shape_cast %33 : vector<1x4x16xbf16> to vector<4x16xbf16>
    %cst_30 = arith.constant dense<0.000000e+00> : vector<256x16xf32>
    %35 = tpu.matmul %32, %34, %cst_30 {dimension_numbers = #tpu.dot_dimension_numbers<[1], [0], [0], [1], [0, 0, 1, 1], [], []>} : vector<256x4xbf16>, vector<4x16xbf16>, vector<256x16xf32> -> vector<256x16xf32>
    %36 = arith.addf %30, %35 : vector<256x16xf32>
    %c0_31 = arith.constant 0 : index
    %c33 = arith.constant 33 : index
    %c0_32 = arith.constant 0 : index
    %37 = vector.load %arg1[%c0_31, %c33, %c0_32] : memref<1x290x4xbf16, #tpu.memory_space<vmem>>, vector<1x256x4xbf16>
    %38 = vector.shape_cast %37 : vector<1x256x4xbf16> to vector<256x4xbf16>
    %c7 = arith.constant 7 : index
    %c0_33 = arith.constant 0 : index
    %c0_34 = arith.constant 0 : index
    %39 = vector.load %arg3[%c7, %c0_33, %c0_34] : memref<9x4x16xbf16, #tpu.memory_space<vmem>>, vector<1x4x16xbf16>
    %40 = vector.shape_cast %39 : vector<1x4x16xbf16> to vector<4x16xbf16>
    %cst_35 = arith.constant dense<0.000000e+00> : vector<256x16xf32>
    %41 = tpu.matmul %38, %40, %cst_35 {dimension_numbers = #tpu.dot_dimension_numbers<[1], [0], [0], [1], [0, 0, 1, 1], [], []>} : vector<256x4xbf16>, vector<4x16xbf16>, vector<256x16xf32> -> vector<256x16xf32>
    %42 = arith.addf %36, %41 : vector<256x16xf32>
    %43 = arith.addf %23, %42 : vector<256x16xf32>
    %cst_36 = arith.constant 0.000000e+00 : f32
    %44 = vector.broadcast %cst_36 : f32 to vector<256x16xf32>
    %c0_37 = arith.constant 0 : index
    %c2 = arith.constant 2 : index
    %c0_38 = arith.constant 0 : index
    %45 = vector.load %arg1[%c0_37, %c2, %c0_38] : memref<1x290x4xbf16, #tpu.memory_space<vmem>>, vector<1x256x4xbf16>
    %46 = vector.shape_cast %45 : vector<1x256x4xbf16> to vector<256x4xbf16>
    %c2_39 = arith.constant 2 : index
    %c0_40 = arith.constant 0 : index
    %c0_41 = arith.constant 0 : index
    %47 = vector.load %arg3[%c2_39, %c0_40, %c0_41] : memref<9x4x16xbf16, #tpu.memory_space<vmem>>, vector<1x4x16xbf16>
    %48 = vector.shape_cast %47 : vector<1x4x16xbf16> to vector<4x16xbf16>
    %cst_42 = arith.constant dense<0.000000e+00> : vector<256x16xf32>
    %49 = tpu.matmul %46, %48, %cst_42 {dimension_numbers = #tpu.dot_dimension_numbers<[1], [0], [0], [1], [0, 0, 1, 1], [], []>} : vector<256x4xbf16>, vector<4x16xbf16>, vector<256x16xf32> -> vector<256x16xf32>
    %50 = arith.addf %44, %49 : vector<256x16xf32>
    %c0_43 = arith.constant 0 : index
    %c18 = arith.constant 18 : index
    %c0_44 = arith.constant 0 : index
    %51 = vector.load %arg1[%c0_43, %c18, %c0_44] : memref<1x290x4xbf16, #tpu.memory_space<vmem>>, vector<1x256x4xbf16>
    %52 = vector.shape_cast %51 : vector<1x256x4xbf16> to vector<256x4xbf16>
    %c5 = arith.constant 5 : index
    %c0_45 = arith.constant 0 : index
    %c0_46 = arith.constant 0 : index
    %53 = vector.load %arg3[%c5, %c0_45, %c0_46] : memref<9x4x16xbf16, #tpu.memory_space<vmem>>, vector<1x4x16xbf16>
    %54 = vector.shape_cast %53 : vector<1x4x16xbf16> to vector<4x16xbf16>
    %cst_47 = arith.constant dense<0.000000e+00> : vector<256x16xf32>
    %55 = tpu.matmul %52, %54, %cst_47 {dimension_numbers = #tpu.dot_dimension_numbers<[1], [0], [0], [1], [0, 0, 1, 1], [], []>} : vector<256x4xbf16>, vector<4x16xbf16>, vector<256x16xf32> -> vector<256x16xf32>
    %56 = arith.addf %50, %55 : vector<256x16xf32>
    %c0_48 = arith.constant 0 : index
    %c34 = arith.constant 34 : index
    %c0_49 = arith.constant 0 : index
    %57 = vector.load %arg1[%c0_48, %c34, %c0_49] : memref<1x290x4xbf16, #tpu.memory_space<vmem>>, vector<1x256x4xbf16>
    %58 = vector.shape_cast %57 : vector<1x256x4xbf16> to vector<256x4xbf16>
    %c8 = arith.constant 8 : index
    %c0_50 = arith.constant 0 : index
    %c0_51 = arith.constant 0 : index
    %59 = vector.load %arg3[%c8, %c0_50, %c0_51] : memref<9x4x16xbf16, #tpu.memory_space<vmem>>, vector<1x4x16xbf16>
    %60 = vector.shape_cast %59 : vector<1x4x16xbf16> to vector<4x16xbf16>
    %cst_52 = arith.constant dense<0.000000e+00> : vector<256x16xf32>
    %61 = tpu.matmul %58, %60, %cst_52 {dimension_numbers = #tpu.dot_dimension_numbers<[1], [0], [0], [1], [0, 0, 1, 1], [], []>} : vector<256x4xbf16>, vector<4x16xbf16>, vector<256x16xf32> -> vector<256x16xf32>
    %62 = arith.addf %56, %61 : vector<256x16xf32>
    %c0_53 = arith.constant 0 : index
    %c1_54 = arith.constant 1 : index
    %63 = vector.load %arg2[%c0_53, %c1_54] : memref<256x2xf32, #tpu.memory_space<vmem>>, vector<256x1xf32>
    %64 = vector.broadcast %63 : vector<256x1xf32> to vector<256x16xf32>
    %65 = arith.mulf %62, %64 : vector<256x16xf32>
    %66 = arith.addf %43, %65 : vector<256x16xf32>
    %c0_55 = arith.constant 0 : index
    %c0_56 = arith.constant 0 : index
    %67 = vector.load %arg4[%c0_55, %c0_56] : memref<1x16xf32, #tpu.memory_space<vmem>>, vector<1x16xf32>
    %68 = vector.broadcast %67 : vector<1x16xf32> to vector<256x16xf32>
    %69 = arith.addf %66, %68 : vector<256x16xf32>
    %cst_57 = arith.constant 0.000000e+00 : f32
    %70 = vector.broadcast %cst_57 : f32 to vector<256x16xf32>
    %71 = arith.maximumf %69, %70 : vector<256x16xf32>
    %cst_58 = arith.constant dense<0.000000e+00> : vector<16xf32>
    %72 = vector.multi_reduction <add>, %71, %cst_58 [0] : vector<256x16xf32> to vector<16xf32>
    %73 = vector.shape_cast %72 : vector<16xf32> to vector<1x16xf32>
    %cst_59 = arith.constant 3.906250e-03 : f32
    %74 = vector.broadcast %cst_59 : f32 to vector<1x16xf32>
    %75 = arith.mulf %73, %74 : vector<1x16xf32>
    %c0_60 = arith.constant 0 : index
    %c0_61 = arith.constant 0 : index
    %76 = vector.load %arg5[%c0_60, %c0_61] : memref<16x128xf32, #tpu.memory_space<vmem>>, vector<16x128xf32>
    %cst_62 = arith.constant dense<0.000000e+00> : vector<1x128xf32>
    %77 = tpu.matmul %75, %76, %cst_62 {dimension_numbers = #tpu.dot_dimension_numbers<[1], [0], [0], [1], [0, 0, 1, 1], [], []>} : vector<1x16xf32>, vector<16x128xf32>, vector<1x128xf32> -> vector<1x128xf32>
    %c0_63 = arith.constant 0 : index
    %c0_64 = arith.constant 0 : index
    %78 = vector.load %arg6[%c0_63, %c0_64] : memref<1x128xf32, #tpu.memory_space<vmem>>, vector<1x128xf32>
    %79 = arith.addf %77, %78 : vector<1x128xf32>
    %80 = vector.shape_cast %79 : vector<1x128xf32> to vector<1x128xf32>
    %81 = vector.broadcast %80 : vector<1x128xf32> to vector<8x128xf32>
    %c0_65 = arith.constant 0 : index
    %c0_66 = arith.constant 0 : index
    %c0_67 = arith.constant 0 : index
    %82 = vector.load %arg7[%c0_65, %c0_66, %c0_67] : memref<1x8x128xf32, #tpu.memory_space<vmem>>, vector<1x8x128xf32>
    %83 = vector.shape_cast %82 : vector<1x8x128xf32> to vector<8x128xf32>
    %84 = vector.shape_cast %81 : vector<8x128xf32> to vector<1x8x128xf32>
    tpu.vector_store %arg7[%c0_65, %c0_66, %c0_67], %84 {strides = array<i32>} : memref<1x8x128xf32, #tpu.memory_space<vmem>>, vector<1x8x128xf32>,
    return
  }
  func.func @transform_0(%arg0: i32) -> (i32, i32, i32) {
    %c0_i32 = arith.constant 0 : i32
    %c0_i32_0 = arith.constant 0 : i32
    %c0_i32_1 = arith.constant 0 : i32
    return %arg0, %c0_i32, %c0_i32_0 : i32, i32, i32
  }
  func.func @transform_1(%arg0: i32) -> (i32, i32) {
    %c0_i32 = arith.constant 0 : i32
    %c0_i32_0 = arith.constant 0 : i32
    %c0_i32_1 = arith.constant 0 : i32
    return %c0_i32, %c0_i32_0 : i32, i32
  }
  func.func @transform_2(%arg0: i32) -> (i32, i32, i32) {
    %c0_i32 = arith.constant 0 : i32
    %c0_i32_0 = arith.constant 0 : i32
    %c0_i32_1 = arith.constant 0 : i32
    %c0_i32_2 = arith.constant 0 : i32
    return %c0_i32, %c0_i32_0, %c0_i32_1 : i32, i32, i32
  }
  func.func @transform_3(%arg0: i32) -> (i32, i32) {
    %c0_i32 = arith.constant 0 : i32
    %c0_i32_0 = arith.constant 0 : i32
    %c0_i32_1 = arith.constant 0 : i32
    return %c0_i32, %c0_i32_0 : i32, i32
  }
  func.func @transform_4(%arg0: i32) -> (i32, i32) {
    %c0_i32 = arith.constant 0 : i32
    %c0_i32_0 = arith.constant 0 : i32
    %c0_i32_1 = arith.constant 0 : i32
    return %c0_i32, %c0_i32_0 : i32, i32
  }
  func.func @transform_5(%arg0: i32) -> (i32, i32) {
    %c0_i32 = arith.constant 0 : i32
    %c0_i32_0 = arith.constant 0 : i32
    %c0_i32_1 = arith.constant 0 : i32
    return %c0_i32, %c0_i32_0 : i32, i32
  }
  func.func @transform_6(%arg0: i32) -> (i32, i32, i32) {
    %c0_i32 = arith.constant 0 : i32
    %c0_i32_0 = arith.constant 0 : i32
    %c0_i32_1 = arith.constant 0 : i32
    return %arg0, %c0_i32, %c0_i32_0 : i32, i32, i32
  }
}

</mosaic_0001>

<llo_original>
// kernel: _fused_forward.1
$region0: #{_fused_forward.1}
  #allocation0 [shape = 'u32[]', space=smem, size = 0x4, offset = 0x4, fixed_abs, tag = 'smem constant byte address 0x4 - core index']
  #allocation1 [shape = 'u32[144,128]{1,0:T(1,128)}', space=vmem, size = 0x12000, scoped, tag = 'internal scratch']
  %s0 = inlined_call_operand.vmem [shape: bf16[2,290,4], index: 0, kind: input, shape index: {}]
  %s1 = inlined_call_operand.vmem [shape: f32[256,2], index: 1, kind: input, shape index: {}]
  %s2 = inlined_call_operand.vmem [shape: bf16[9,4,16], index: 2, kind: input, shape index: {}]
  %s3 = inlined_call_operand.vmem [shape: f32[1,16], index: 3, kind: input, shape index: {}]
  %s4 = inlined_call_operand.vmem [shape: f32[16,128], index: 4, kind: input, shape index: {}]
  %s5 = inlined_call_operand.vmem [shape: f32[1,128], index: 5, kind: input, shape index: {}]
  %s6 = inlined_call_operand.vmem [shape: f32[2,8,128], index: 6, kind: output, shape index: {}]
  %s7 = sld [smem:[#allocation0]]
  $region57: #{_fused_forward.1} parent=0
    _
  %s9 = ssub.s32 1, %s7
  %s10 = scalar_select 0, %s9, %s7
  loop: start=0, step=1, limit=4
  $region2: #{_fused_forward.1} parent=0 // loop_pre_header
    _
  $region3: #{_fused_forward.1} parent=0 // loop_header
    %s12 = sphi 0, %s16
    %p13 = scmp.ge.s32.totalorder %s12, 4
    %s22 = sphi 0, %s24
    %s25 = sphi 0, %s22
    %s26 = sphi 0, %s25
    %s42 = sphi 0, %s26
    %s46 = sphi 0, %s46
    %s48 = sphi 0, %s46
    %s49 = sphi 0, %s48
    %s63 = sphi 0, %s49
    %s67 = sphi 0, %s67
    %s69 = sphi 0, %s67
    %s70 = sphi 0, %s69
    %s84 = sphi 0, %s70
    %s88 = sphi 0, %s88
    %s90 = sphi 0, %s88
    %s91 = sphi 0, %s90
    %s105 = sphi 0, %s91
    %s109 = sphi 0, %s109
    %s111 = sphi 0, %s109
    %s112 = sphi 0, %s111
    %s126 = sphi 0, %s112
    %s130 = sphi 0, %s130
    %s132 = sphi 0, %s130
    %s133 = sphi 0, %s132
    %s147 = sphi 0, %s133
    %s153 = sphi 0, %s155
    %s156 = sphi 0, %s153
    %s157 = sphi 0, %s156
    %s173 = sphi 0, %s157
  $region4: #{_fused_forward.1} parent=0 // loop_header_branch
    %15 = sbr.rel (%p13) target = $region8
  $region5: #{_fused_forward.1} parent=0 // loop_body
    %s17 = ssub.s32 %s12, 1
    %s18 = ssub.s32 %s12, 2
    %s19 = sadd.s32 %s12, 1
    %s20 = ssub.s32 %s12, %s19
    %p21 = scmp.eq.s32.totalorder %s20, 0
    %s23 = sadd.s32 %s22, 1
    %s24 = scalar_select %p21, %s22, %s23
    %p27 = pneg %p21
    %p28 = scmp.eq.s32.totalorder %s12, 1
    %p29 = por %p27, %p28
    %p30 = scmp.ne.s32.totalorder %s22, %s25
    %p31 = scmp.eq.s32.totalorder %s12, 0
    %p32 = por %p30, %p31
    %p33 = scmp.ne.s32.totalorder %s22, %s25
    %p34 = scmp.eq.s32.totalorder %s17, 1
    %p35 = por %p33, %p34
    %p36 = scmp.ne.s32.totalorder %s25, %s26
    %p37 = scmp.eq.s32.totalorder %s17, 0
    %p38 = por %p36, %p37
    %p39 = scmp.ne.s32.totalorder %s25, %s26
    %p40 = scmp.eq.s32.totalorder %s18, 1
    %p41 = por %p39, %p40
    %p43 = scmp.ne.s32.totalorder %s26, %s42
    %p44 = scmp.eq.s32.totalorder %s18, 0
    %p45 = por %p43, %p44
    %s47 = sadd.s32 %s46, 1
    %p50 = scmp.eq.s32.totalorder %s12, 1
    %p51 = scmp.ne.s32.totalorder %s46, %s48
    %p52 = scmp.eq.s32.totalorder %s12, 0
    %p53 = por %p51, %p52
    %p54 = scmp.ne.s32.totalorder %s46, %s48
    %p55 = scmp.eq.s32.totalorder %s17, 1
    %p56 = por %p54, %p55
    %p57 = scmp.ne.s32.totalorder %s48, %s49
    %p58 = scmp.eq.s32.totalorder %s17, 0
    %p59 = por %p57, %p58
    %p60 = scmp.ne.s32.totalorder %s48, %s49
    %p61 = scmp.eq.s32.totalorder %s18, 1
    %p62 = por %p60, %p61
    %p64 = scmp.ne.s32.totalorder %s49, %s63
    %p65 = scmp.eq.s32.totalorder %s18, 0
    %p66 = por %p64, %p65
    %s68 = sadd.s32 %s67, 1
    %p71 = scmp.eq.s32.totalorder %s12, 1
    %p72 = scmp.ne.s32.totalorder %s67, %s69
    %p73 = scmp.eq.s32.totalorder %s12, 0
    %p74 = por %p72, %p73
    %p75 = scmp.ne.s32.totalorder %s67, %s69
    %p76 = scmp.eq.s32.totalorder %s17, 1
    %p77 = por %p75, %p76
    %p78 = scmp.ne.s32.totalorder %s69, %s70
    %p79 = scmp.eq.s32.totalorder %s17, 0
    %p80 = por %p78, %p79
    %p81 = scmp.ne.s32.totalorder %s69, %s70
    %p82 = scmp.eq.s32.totalorder %s18, 1
    %p83 = por %p81, %p82
    %p85 = scmp.ne.s32.totalorder %s70, %s84
    %p86 = scmp.eq.s32.totalorder %s18, 0
    %p87 = por %p85, %p86
    %s89 = sadd.s32 %s88, 1
    %p92 = scmp.eq.s32.totalorder %s12, 1
    %p93 = scmp.ne.s32.totalorder %s88, %s90
    %p94 = scmp.eq.s32.totalorder %s12, 0
    %p95 = por %p93, %p94
    %p96 = scmp.ne.s32.totalorder %s88, %s90
    %p97 = scmp.eq.s32.totalorder %s17, 1
    %p98 = por %p96, %p97
    %p99 = scmp.ne.s32.totalorder %s90, %s91
    %p100 = scmp.eq.s32.totalorder %s17, 0
    %p101 = por %p99, %p100
    %p102 = scmp.ne.s32.totalorder %s90, %s91
    %p103 = scmp.eq.s32.totalorder %s18, 1
    %p104 = por %p102, %p103
    %p106 = scmp.ne.s32.totalorder %s91, %s105
    %p107 = scmp.eq.s32.totalorder %s18, 0
    %p108 = por %p106, %p107
    %s110 = sadd.s32 %s109, 1
    %p113 = scmp.eq.s32.totalorder %s12, 1
    %p114 = scmp.ne.s32.totalorder %s109, %s111
    %p115 = scmp.eq.s32.totalorder %s12, 0
    %p116 = por %p114, %p115
    %p117 = scmp.ne.s32.totalorder %s109, %s111
    %p118 = scmp.eq.s32.totalorder %s17, 1
    %p119 = por %p117, %p118
    %p120 = scmp.ne.s32.totalorder %s111, %s112
    %p121 = scmp.eq.s32.totalorder %s17, 0
    %p122 = por %p120, %p121
    %p123 = scmp.ne.s32.totalorder %s111, %s112
    %p124 = scmp.eq.s32.totalorder %s18, 1
    %p125 = por %p123, %p124
    %p127 = scmp.ne.s32.totalorder %s112, %s126
    %p128 = scmp.eq.s32.totalorder %s18, 0
    %p129 = por %p127, %p128
    %s131 = sadd.s32 %s130, 1
    %p134 = scmp.eq.s32.totalorder %s12, 1
    %p135 = scmp.ne.s32.totalorder %s130, %s132
    %p136 = scmp.eq.s32.totalorder %s12, 0
    %p137 = por %p135, %p136
    %p138 = scmp.ne.s32.totalorder %s130, %s132
    %p139 = scmp.eq.s32.totalorder %s17, 1
    %p140 = por %p138, %p139
    %p141 = scmp.ne.s32.totalorder %s132, %s133
    %p142 = scmp.eq.s32.totalorder %s17, 0
    %p143 = por %p141, %p142
    %p144 = scmp.ne.s32.totalorder %s132, %s133
    %p145 = scmp.eq.s32.totalorder %s18, 1
    %p146 = por %p144, %p145
    %p148 = scmp.ne.s32.totalorder %s133, %s147
    %p149 = scmp.eq.s32.totalorder %s18, 0
    %p150 = por %p148, %p149
    %s151 = ssub.s32 %s12, %s19
    %p152 = scmp.eq.s32.totalorder %s151, 0
    %s154 = sadd.s32 %s153, 1
    %s155 = scalar_select %p152, %s153, %s154
    %p158 = pneg %p152
    %p159 = scmp.eq.s32.totalorder %s12, 1
    %p160 = por %p158, %p159
    %p161 = scmp.ne.s32.totalorder %s153, %s156
    %p162 = scmp.eq.s32.totalorder %s12, 0
    %p163 = por %p161, %p162
    %p164 = scmp.ne.s32.totalorder %s153, %s156
    %p165 = scmp.eq.s32.totalorder %s17, 1
    %p166 = por %p164, %p165
    %p167 = scmp.ne.s32.totalorder %s156, %s157
    %p168 = scmp.eq.s32.totalorder %s17, 0
    %p169 = por %p167, %p168
    %p170 = scmp.ne.s32.totalorder %s156, %s157
    %p171 = scmp.eq.s32.totalorder %s18, 1
    %p172 = por %p170, %p171
    %p174 = scmp.ne.s32.totalorder %s157, %s173
    %p175 = scmp.eq.s32.totalorder %s18, 0
    %p176 = por %p174, %p175
    %p177 = scmp.le.s32.totalorder 1, %s12
    %p178 = scmp.lt.s32.totalorder %s12, 3
    %p179 = pnand %p177, %p178
    %p180 = pneg %p179
    // Predicated region
    $region9: #{_fused_forward.1} parent=5 // pred_check
      _
    $region10: #{_fused_forward.1} parent=5 // pred_check_branch
      %182 = sbr.rel (%p179) target = $region12
    $region11: #{_fused_forward.1} parent=5 // pred_region
      %s183 = ssub.s32 %s12, 1
      // Predicated region
      $region13: #{_fused_forward.1} parent=11 // pred_check
        %p184 = pneg %p59
      $region14: #{_fused_forward.1} parent=11 // pred_check_branch
        %186 = sbr.rel (%p184) target = $region16
      $region15: #{_fused_forward.1} parent=11 // pred_region
        _
      $region16: #{_fused_forward.1} parent=11 // pred_fallthru
        _
      // Predicated region
      $region17: #{_fused_forward.1} parent=11 // pred_check
        %p187 = pneg %p80
      $region18: #{_fused_forward.1} parent=11 // pred_check_branch
        %189 = sbr.rel (%p187) target = $region20
      $region19: #{_fused_forward.1} parent=11 // pred_region
        _
      $region20: #{_fused_forward.1} parent=11 // pred_fallthru
        _
      // Predicated region
      $region21: #{_fused_forward.1} parent=11 // pred_check
        %p190 = pneg %p101
      $region22: #{_fused_forward.1} parent=11 // pred_check_branch
        %192 = sbr.rel (%p190) target = $region24
      $region23: #{_fused_forward.1} parent=11 // pred_region
        _
      $region24: #{_fused_forward.1} parent=11 // pred_fallthru
        _
      // Predicated region
      $region25: #{_fused_forward.1} parent=11 // pred_check
        %p193 = pneg %p122
      $region26: #{_fused_forward.1} parent=11 // pred_check_branch
        %195 = sbr.rel (%p193) target = $region28
      $region27: #{_fused_forward.1} parent=11 // pred_region
        _
      $region28: #{_fused_forward.1} parent=11 // pred_fallthru
        _
      // Predicated region
      $region29: #{_fused_forward.1} parent=11 // pred_check
        %p196 = pneg %p143
      $region30: #{_fused_forward.1} parent=11 // pred_check_branch
        %198 = sbr.rel (%p196) target = $region32
      $region31: #{_fused_forward.1} parent=11 // pred_region
        _
      $region32: #{_fused_forward.1} parent=11 // pred_fallthru
        _
    $region12: #{_fused_forward.1} parent=5 // pred_fallthru
      _
    %p199 = scmp.lt.s32.totalorder %s12, 2
    // Predicated region
    $region33: #{_fused_forward.1} parent=5 // pred_check
      %p200 = pneg %p199
    $region34: #{_fused_forward.1} parent=5 // pred_check_branch
      %202 = sbr.rel (%p200) target = $region36
    $region35: #{_fused_forward.1} parent=5 // pred_region
      // Predicated region
      $region37: #{_fused_forward.1} parent=35 // pred_check
        %p203 = pneg %p32
      $region38: #{_fused_forward.1} parent=35 // pred_check_branch
        %205 = sbr.rel (%p203) target = $region40
      $region39: #{_fused_forward.1} parent=35 // pred_region
        %p206 = scmp.lt.s32.totalorder %s12, 1
        %s207 = scalar_select %p206, %s12, 1
        %s208 = smul.addr %s207, 37
        %s209 = smul.addr %s208, 4
        %s210 = scalar_lea.vmem %s0, %s209
      $region40: #{_fused_forward.1} parent=35 // pred_fallthru
        _
    $region36: #{_fused_forward.1} parent=5 // pred_fallthru
      _
    %p211 = scmp.le.s32.totalorder 1, %s12
    %p212 = scmp.lt.s32.totalorder %s12, 3
    %p213 = pnand %p211, %p212
    %p214 = pneg %p213
    // Predicated region
    $region41: #{_fused_forward.1} parent=5 // pred_check
      _
    $region42: #{_fused_forward.1} parent=5 // pred_check_branch
      %216 = sbr.rel (%p213) target = $region44
    $region43: #{_fused_forward.1} parent=5 // pred_region
      %s217 = ssub.s32 %s12, 1
      %p218 = scmp.lt.s32.totalorder %s17, 1
      %s219 = scalar_select %p218, %s17, 1
      %s220 = smul.addr %s219, 37
      %s221 = smul.addr %s220, 4
      %s222 = scalar_lea.vmem %s0, %s221
      %p223 = pneg %p38
      %p224 = pneg %p35
      %p225 = pneg %p59
      %p226 = pneg %p56
      %p227 = pneg %p80
      %p228 = pneg %p77
      %p229 = pneg %p101
      %p230 = pneg %p98
      %p231 = pneg %p122
      %p232 = pneg %p119
      %p233 = pneg %p143
      %p234 = pneg %p140
      %p235 = pneg %p169
      %p236 = pneg %p166
      %p237 = scmp.lt.s32.totalorder %s17, 1
      %s238 = scalar_select %p237, %s17, 1
      %s239 = smul.addr %s238, 8
      %s240 = scalar_lea.vmem %s6, %s239
      %p241 = scmp.lt.s32.totalorder %s17, 1
      %s242 = scalar_select %p241, %s17, 1
      %s243 = smul.addr %s242, 37
      %s244 = smul.addr %s243, 4
      %s245 = scalar_lea.vmem %s0, %s244
      %p246 = scmp.lt.s32.totalorder %s17, 1
      %s247 = scalar_select %p246, %s17, 1
      %s248 = smul.addr %s247, 8
      %s249 = scalar_lea.vmem %s6, %s248
      %v251 = vld [vmem:[%s245] sm:$0xf]
      %v252 = vld [vmem:[%s245 + $0x4] sm:$0xf]
      %v253 = vld [vmem:[%s245 + $0x8] sm:$0xf]
      %v254 = vld [vmem:[%s245 + $0xc] sm:$0xf]
      %v255 = vld [vmem:[%s245 + $0x10] sm:$0xf]
      %v256 = vld [vmem:[%s245 + $0x14] sm:$0xf]
      %v257 = vld [vmem:[%s245 + $0x18] sm:$0xf]
      %v258 = vld [vmem:[%s245 + $0x1c] sm:$0xf]
      %v259 = vld [vmem:[%s245 + $0x20] sm:$0xf]
      %v260 = vld [vmem:[%s245 + $0x24] sm:$0xf]
      %v261 = vld [vmem:[%s245 + $0x28] sm:$0xf]
      %v262 = vld [vmem:[%s245 + $0x2c] sm:$0xf]
      %v263 = vld [vmem:[%s245 + $0x30] sm:$0xf]
      %v264 = vld [vmem:[%s245 + $0x34] sm:$0xf]
      %v265 = vld [vmem:[%s245 + $0x38] sm:$0xf]
      %v266 = vld [vmem:[%s245 + $0x3c] sm:$0xf]
      %v267 = vld [vmem:[%s245 + $0x40] sm:$0xf]
      %v268 = vld [vmem:[%s245 + $0x44] sm:$0xf]
      %v269 = vld [vmem:[%s245 + $0x48] sm:$0xf]
      %v270 = vld [vmem:[%s245 + $0x4c] sm:$0xf]
      %v271 = vld [vmem:[%s245 + $0x50] sm:$0xf]
      %v272 = vld [vmem:[%s245 + $0x54] sm:$0xf]
      %v273 = vld [vmem:[%s245 + $0x58] sm:$0xf]
      %v274 = vld [vmem:[%s245 + $0x5c] sm:$0xf]
      %v275 = vld [vmem:[%s245 + $0x60] sm:$0xf]
      %v276 = vld [vmem:[%s245 + $0x64] sm:$0xf]
      %v277 = vld [vmem:[%s245 + $0x68] sm:$0xf]
      %v278 = vld [vmem:[%s245 + $0x6c] sm:$0xf]
      %v279 = vld [vmem:[%s245 + $0x70] sm:$0xf]
      %v280 = vld [vmem:[%s245 + $0x74] sm:$0xf]
      %v281 = vld [vmem:[%s245 + $0x78] sm:$0xf]
      %v282 = vld [vmem:[%s245 + $0x7c] sm:$0xf]
      %v283 = vld [vmem:[%s2] sm:$0x3]
      %v284 = vld [vmem:[%s245 + $0x80] sm:$0xf]
      %v285 = vld [vmem:[%s245 + $0x84] sm:$0xf]
      %s286 = scalar_lea.vmem %s2, 6
      %v287 = vld [vmem:[%s286] sm:$0x3]
      %v320 = vunpack.c.l.b16 %v253
      %v321 = vunpack.c.l.b16 %v254
      %v322 = vunpack.c.l.b16 %v255
      %v323 = vunpack.c.l.b16 %v256
      %v324 = vunpack.c.l.b16 %v257
      %v325 = vunpack.c.l.b16 %v258
      %v326 = vunpack.c.l.b16 %v259
      %v327 = vunpack.c.l.b16 %v260
      %v328 = vunpack.c.l.b16 %v261
      %v329 = vunpack.c.l.b16 %v262
      %v330 = vunpack.c.l.b16 %v263
      %v331 = vunpack.c.l.b16 %v264
      %v332 = vunpack.c.l.b16 %v265
      %v333 = vunpack.c.l.b16 %v266
      %v334 = vunpack.c.l.b16 %v267
      %v335 = vunpack.c.l.b16 %v268
      %v336 = vunpack.c.l.b16 %v269
      %v337 = vunpack.c.l.b16 %v270
      %v338 = vunpack.c.l.b16 %v271
      %v339 = vunpack.c.l.b16 %v272
      %v340 = vunpack.c.l.b16 %v273
      %v341 = vunpack.c.l.b16 %v274
      %v342 = vunpack.c.l.b16 %v275
      %v343 = vunpack.c.l.b16 %v276
      %v344 = vunpack.c.l.b16 %v277
      %v345 = vunpack.c.l.b16 %v278
      %v346 = vunpack.c.l.b16 %v279
      %v347 = vunpack.c.l.b16 %v280
      %v348 = vunpack.c.l.b16 %v281
      %v349 = vunpack.c.l.b16 %v282
      %v350 = vunpack.c.l.b16 %v284
      %v351 = vunpack.c.l.b16 %v285
      %v352 = vpack.c.b16 %v321, %v320
      %v353 = vpack.c.b16 %v323, %v322
      %v354 = vpack.c.b16 %v325, %v324
      %v355 = vpack.c.b16 %v327, %v326
      %v356 = vpack.c.b16 %v329, %v328
      %v357 = vpack.c.b16 %v331, %v330
      %v358 = vpack.c.b16 %v333, %v332
      %v359 = vpack.c.b16 %v335, %v334
      %v360 = vpack.c.b16 %v337, %v336
      %v361 = vpack.c.b16 %v339, %v338
      %v362 = vpack.c.b16 %v341, %v340
      %v363 = vpack.c.b16 %v343, %v342
      %v364 = vpack.c.b16 %v345, %v344
      %v365 = vpack.c.b16 %v347, %v346
      %v366 = vpack.c.b16 %v349, %v348
      %v367 = vpack.c.b16 %v351, %v350
      %vm368 = vcmask 31744
      %v370 = vsel %vm368, %v352, 0
      %v373 = vsel %vm368, %v353, 0
      %v376 = vsel %vm368, %v354, 0
      %v379 = vsel %vm368, %v355, 0
      %v382 = vsel %vm368, %v356, 0
      %v385 = vsel %vm368, %v357, 0
      %v388 = vsel %vm368, %v358, 0
      %v391 = vsel %vm368, %v359, 0
      %v394 = vsel %vm368, %v360, 0
      %v397 = vsel %vm368, %v361, 0
      %v400 = vsel %vm368, %v362, 0
      %v403 = vsel %vm368, %v363, 0
      %v406 = vsel %vm368, %v364, 0
      %v409 = vsel %vm368, %v365, 0
      %v412 = vsel %vm368, %v366, 0
      %v415 = vsel %vm368, %v367, 0
      %vm417 = vcmask 1041408
      %v419 = vsel %vm417, %v287, 0
      %421 = vmatprep.subr.bf16.mxu0 0
      %422 = vmatpush1.bf16.msra.mxu0 %v419
      %423 = vmatprep.subr.bf16.mxu0 0
      %424 = vmatpush1.bf16.msra.mxu0 0
      %425 = vmatprep.subr.bf16.mxu0 0
      %426 = vmatpush1.bf16.msra.mxu0 0
      %427 = vmatprep.subr.bf16.mxu0 0
      %428 = vmatpush1.bf16.msra.mxu0 0
      %429 = vmatprep.subr.bf16.mxu0 0
      %430 = vmatpush1.bf16.msra.mxu0 0
      %431 = vmatprep.subr.bf16.mxu0 0
      %432 = vmatpush1.bf16.msra.mxu0 0
      %433 = vmatprep.subr.bf16.mxu0 0
      %434 = vmatpush1.bf16.msra.mxu0 0
      %435 = vmatprep.subr.bf16.mxu0 0
      %436 = vmatpush1.bf16.msra.mxu0 0
      %437 = vmatprep.subr.bf16.mxu0 0
      %438 = vmatpush1.bf16.msra.mxu0 0
      %439 = vmatprep.subr.bf16.mxu0 0
      %440 = vmatpush1.bf16.msra.mxu0 0
      %441 = vmatprep.subr.bf16.mxu0 0
      %442 = vmatpush1.bf16.msra.mxu0 0
      %443 = vmatprep.subr.bf16.mxu0 0
      %444 = vmatpush1.bf16.msra.mxu0 0
      %445 = vmatprep.subr.bf16.mxu0 0
      %446 = vmatpush1.bf16.msra.mxu0 0
      %447 = vmatprep.subr.bf16.mxu0 0
      %448 = vmatpush1.bf16.msra.mxu0 0
      %449 = vmatprep.subr.bf16.mxu0 0
      %450 = vmatpush1.bf16.msra.mxu0 0
      %451 = vmatprep.subr.bf16.mxu0 0
      %452 = vmatpush1.bf16.msra.mxu0 0
      %453 = vmatprep.mubr.bf16.mxu0 0
      %454 = vmatmul.mubr.bf16.gmra.mrb[0].mxu0 %v370
      %v455 = vpop.f32.mrb[0].mxu0
      %v456 = vadd.f32 0.0, %v455
      %v457 = vpop.f32.mrb[0].mxu0
      %v458 = vpop.f32.mrb[0].mxu0
      %v459 = vadd.f32 0.0, %v458
      %v460 = vpop.f32.mrb[0].mxu0
      %461 = vmatprep.mubr.bf16.mxu0 0
      %462 = vmatmul.mubr.bf16.gmra.mrb[0].mxu0 %v373
      %v463 = vpop.f32.mrb[0].mxu0
      %v464 = vadd.f32 0.0, %v463
      %v465 = vpop.f32.mrb[0].mxu0
      %v466 = vpop.f32.mrb[0].mxu0
      %v467 = vadd.f32 0.0, %v466
      %v468 = vpop.f32.mrb[0].mxu0
      %469 = vmatprep.mubr.bf16.mxu0 0
      %470 = vmatmul.mubr.bf16.gmra.mrb[0].mxu0 %v376
      %v471 = vpop.f32.mrb[0].mxu0
      %v472 = vadd.f32 0.0, %v471
      %v473 = vpop.f32.mrb[0].mxu0
      %v474 = vpop.f32.mrb[0].mxu0
      %v475 = vadd.f32 0.0, %v474
      %v476 = vpop.f32.mrb[0].mxu0
      %477 = vmatprep.mubr.bf16.mxu0 0
      %478 = vmatmul.mubr.bf16.gmra.mrb[0].mxu0 %v379
      %v479 = vpop.f32.mrb[0].mxu0
      %v480 = vadd.f32 0.0, %v479
      %v481 = vpop.f32.mrb[0].mxu0
      %v482 = vpop.f32.mrb[0].mxu0
      %v483 = vadd.f32 0.0, %v482
      %v484 = vpop.f32.mrb[0].mxu0
      %485 = vmatprep.mubr.bf16.mxu0 0
      %486 = vmatmul.mubr.bf16.gmra.mrb[0].mxu0 %v382
      %v487 = vpop.f32.mrb[0].mxu0
      %v488 = vadd.f32 0.0, %v487
      %v489 = vpop.f32.mrb[0].mxu0
      %v490 = vpop.f32.mrb[0].mxu0
      %v491 = vadd.f32 0.0, %v490
      %v492 = vpop.f32.mrb[0].mxu0
      %493 = vmatprep.mubr.bf16.mxu0 0
      %494 = vmatmul.mubr.bf16.gmra.mrb[0].mxu0 %v385
      %v495 = vpop.f32.mrb[0].mxu0
      %v496 = vadd.f32 0.0, %v495
      %v497 = vpop.f32.mrb[0].mxu0
      %v498 = vpop.f32.mrb[0].mxu0
      %v499 = vadd.f32 0.0, %v498
      %v500 = vpop.f32.mrb[0].mxu0
      %501 = vmatprep.mubr.bf16.mxu0 0
      %502 = vmatmul.mubr.bf16.gmra.mrb[0].mxu0 %v388
      %v503 = vpop.f32.mrb[0].mxu0
      %v504 = vadd.f32 0.0, %v503
      %v505 = vpop.f32.mrb[0].mxu0
      %v506 = vpop.f32.mrb[0].mxu0
      %v507 = vadd.f32 0.0, %v506
      %v508 = vpop.f32.mrb[0].mxu0
      %509 = vmatprep.mubr.bf16.mxu0 0
      %510 = vmatmul.mubr.bf16.gmra.mrb[0].mxu0 %v391
      %v511 = vpop.f32.mrb[0].mxu0
      %v512 = vadd.f32 0.0, %v511
      %v513 = vpop.f32.mrb[0].mxu0
      %v514 = vpop.f32.mrb[0].mxu0
      %v515 = vadd.f32 0.0, %v514
      %v516 = vpop.f32.mrb[0].mxu0
      %517 = vmatprep.mubr.bf16.mxu0 0
      %518 = vmatmul.mubr.bf16.gmra.mrb[0].mxu0 %v394
      %v519 = vpop.f32.mrb[0].mxu0
      %v520 = vadd.f32 0.0, %v519
      %v521 = vpop.f32.mrb[0].mxu0
      %v522 = vpop.f32.mrb[0].mxu0
      %v523 = vadd.f32 0.0, %v522
      %v524 = vpop.f32.mrb[0].mxu0
      %525 = vmatprep.mubr.bf16.mxu0 0
      %526 = vmatmul.mubr.bf16.gmra.mrb[0].mxu0 %v397
      %v527 = vpop.f32.mrb[0].mxu0
      %v528 = vadd.f32 0.0, %v527
      %v529 = vpop.f32.mrb[0].mxu0
      %v530 = vpop.f32.mrb[0].mxu0
      %v531 = vadd.f32 0.0, %v530
      %v532 = vpop.f32.mrb[0].mxu0
      %533 = vmatprep.mubr.bf16.mxu0 0
      %534 = vmatmul.mubr.bf16.gmra.mrb[0].mxu0 %v400
      %v535 = vpop.f32.mrb[0].mxu0
      %v536 = vadd.f32 0.0, %v535
      %v537 = vpop.f32.mrb[0].mxu0
      %v538 = vpop.f32.mrb[0].mxu0
      %v539 = vadd.f32 0.0, %v538
      %v540 = vpop.f32.mrb[0].mxu0
      %541 = vmatprep.mubr.bf16.mxu0 0
      %542 = vmatmul.mubr.bf16.gmra.mrb[0].mxu0 %v403
      %v543 = vpop.f32.mrb[0].mxu0
      %v544 = vadd.f32 0.0, %v543
      %v545 = vpop.f32.mrb[0].mxu0
      %v546 = vpop.f32.mrb[0].mxu0
      %v547 = vadd.f32 0.0, %v546
      %v548 = vpop.f32.mrb[0].mxu0
      %549 = vmatprep.mubr.bf16.mxu0 0
      %550 = vmatmul.mubr.bf16.gmra.mrb[0].mxu0 %v406
      %v551 = vpop.f32.mrb[0].mxu0
      %v552 = vadd.f32 0.0, %v551
      %v553 = vpop.f32.mrb[0].mxu0
      %v554 = vpop.f32.mrb[0].mxu0
      %v555 = vadd.f32 0.0, %v554
      %v556 = vpop.f32.mrb[0].mxu0
      %557 = vmatprep.mubr.bf16.mxu0 0
      %558 = vmatmul.mubr.bf16.gmra.mrb[0].mxu0 %v409
      %v559 = vpop.f32.mrb[0].mxu0
      %v560 = vadd.f32 0.0, %v559
      %v561 = vpop.f32.mrb[0].mxu0
      %v562 = vpop.f32.mrb[0].mxu0
      %v563 = vadd.f32 0.0, %v562
      %v564 = vpop.f32.mrb[0].mxu0
      %565 = vmatprep.mubr.bf16.mxu0 0
      %566 = vmatmul.mubr.bf16.gmra.mrb[0].mxu0 %v412
      %v567 = vpop.f32.mrb[0].mxu0
      %v568 = vadd.f32 0.0, %v567
      %v569 = vpop.f32.mrb[0].mxu0
      %v570 = vpop.f32.mrb[0].mxu0
      %v571 = vadd.f32 0.0, %v570
      %v572 = vpop.f32.mrb[0].mxu0
      %573 = vmatprep.mubr.bf16.mxu0 0
      %574 = vmatmul.mubr.bf16.gmra.mrb[0].mxu0 %v415
      %v575 = vpop.f32.mrb[0].mxu0
      %v576 = vadd.f32 0.0, %v575
      %v577 = vpop.f32.mrb[0].mxu0
      %v578 = vpop.f32.mrb[0].mxu0
      %v579 = vadd.f32 0.0, %v578
      %v580 = vpop.f32.mrb[0].mxu0
      %581 = vdwg.mxu0
      %v584 = vunpack.c.l.b16 %v251
      %v585 = vunpack.c.l.b16 %v252
      %v586 = vpack.c.b16 %v585, %v584
      %v588 = vsel %vm368, %v586, 0
      %v591 = vsel %vm417, %v283, 0
      %593 = vmatprep.subr.bf16.mxu0 0
      %594 = vmatpush1.bf16.msra.mxu0 %v591
      %595 = vmatprep.subr.bf16.mxu0 0
      %596 = vmatpush1.bf16.msra.mxu0 0
      %597 = vmatprep.subr.bf16.mxu0 0
      %598 = vmatpush1.bf16.msra.mxu0 0
      %599 = vmatprep.subr.bf16.mxu0 0
      %600 = vmatpush1.bf16.msra.mxu0 0
      %601 = vmatprep.subr.bf16.mxu0 0
      %602 = vmatpush1.bf16.msra.mxu0 0
      %603 = vmatprep.subr.bf16.mxu0 0
      %604 = vmatpush1.bf16.msra.mxu0 0
      %605 = vmatprep.subr.bf16.mxu0 0
      %606 = vmatpush1.bf16.msra.mxu0 0
      %607 = vmatprep.subr.bf16.mxu0 0
      %608 = vmatpush1.bf16.msra.mxu0 0
      %609 = vmatprep.subr.bf16.mxu0 0
      %610 = vmatpush1.bf16.msra.mxu0 0
      %611 = vmatprep.subr.bf16.mxu0 0
      %612 = vmatpush1.bf16.msra.mxu0 0
      %613 = vmatprep.subr.bf16.mxu0 0
      %614 = vmatpush1.bf16.msra.mxu0 0
      %615 = vmatprep.subr.bf16.mxu0 0
      %616 = vmatpush1.bf16.msra.mxu0 0
      %617 = vmatprep.subr.bf16.mxu0 0
      %618 = vmatpush1.bf16.msra.mxu0 0
      %619 = vmatprep.subr.bf16.mxu0 0
      %620 = vmatpush1.bf16.msra.mxu0 0
      %621 = vmatprep.subr.bf16.mxu0 0
      %622 = vmatpush1.bf16.msra.mxu0 0
      %623 = vmatprep.subr.bf16.mxu0 0
      %624 = vmatpush1.bf16.msra.mxu0 0
      %625 = vmatprep.mubr.bf16.mxu0 0
      %626 = vmatmul.mubr.bf16.gmra.mrb[0].mxu0 %v588
      %v627 = vpop.f32.mrb[0].mxu0
      %v628 = vadd.f32 %v456, %v627
      %v629 = vpop.f32.mrb[0].mxu0
      %v630 = vpop.f32.mrb[0].mxu0
      %v631 = vadd.f32 %v459, %v630
      %v632 = vpop.f32.mrb[0].mxu0
      %633 = vmatprep.mubr.bf16.mxu0 0
      %634 = vmatmul.mubr.bf16.gmra.mrb[0].mxu0 %v370
      %v635 = vpop.f32.mrb[0].mxu0
      %v636 = vadd.f32 %v464, %v635
      %v637 = vpop.f32.mrb[0].mxu0
      %v638 = vpop.f32.mrb[0].mxu0
      %v639 = vadd.f32 %v467, %v638
      %v640 = vpop.f32.mrb[0].mxu0
      %641 = vmatprep.mubr.bf16.mxu0 0
      %642 = vmatmul.mubr.bf16.gmra.mrb[0].mxu0 %v373
      %v643 = vpop.f32.mrb[0].mxu0
      %v644 = vadd.f32 %v472, %v643
      %v645 = vpop.f32.mrb[0].mxu0
      %v646 = vpop.f32.mrb[0].mxu0
      %v647 = vadd.f32 %v475, %v646
      %v648 = vpop.f32.mrb[0].mxu0
      %649 = vmatprep.mubr.bf16.mxu0 0
      %650 = vmatmul.mubr.bf16.gmra.mrb[0].mxu0 %v376
      %v651 = vpop.f32.mrb[0].mxu0
      %v652 = vadd.f32 %v480, %v651
      %v653 = vpop.f32.mrb[0].mxu0
      %v654 = vpop.f32.mrb[0].mxu0
      %v655 = vadd.f32 %v483, %v654
      %v656 = vpop.f32.mrb[0].mxu0
      %657 = vmatprep.mubr.bf16.mxu0 0
      %658 = vmatmul.mubr.bf16.gmra.mrb[0].mxu0 %v379
      %v659 = vpop.f32.mrb[0].mxu0
      %v660 = vadd.f32 %v488, %v659
      %v661 = vpop.f32.mrb[0].mxu0
      %v662 = vpop.f32.mrb[0].mxu0
      %v663 = vadd.f32 %v491, %v662
      %v664 = vpop.f32.mrb[0].mxu0
      %665 = vmatprep.mubr.bf16.mxu0 0
      %666 = vmatmul.mubr.bf16.gmra.mrb[0].mxu0 %v382
      %v667 = vpop.f32.mrb[0].mxu0
      %v668 = vadd.f32 %v496, %v667
      %v669 = vpop.f32.mrb[0].mxu0
      %v670 = vpop.f32.mrb[0].mxu0
      %v671 = vadd.f32 %v499, %v670
      %v672 = vpop.f32.mrb[0].mxu0
      %673 = vmatprep.mubr.bf16.mxu0 0
      %674 = vmatmul.mubr.bf16.gmra.mrb[0].mxu0 %v385
      %v675 = vpop.f32.mrb[0].mxu0
      %v676 = vadd.f32 %v504, %v675
      %v677 = vpop.f32.mrb[0].mxu0
      %v678 = vpop.f32.mrb[0].mxu0
      %v679 = vadd.f32 %v507, %v678
      %v680 = vpop.f32.mrb[0].mxu0
      %681 = vmatprep.mubr.bf16.mxu0 0
      %682 = vmatmul.mubr.bf16.gmra.mrb[0].mxu0 %v388
      %v683 = vpop.f32.mrb[0].mxu0
      %v684 = vadd.f32 %v512, %v683
      %v685 = vpop.f32.mrb[0].mxu0
      %v686 = vpop.f32.mrb[0].mxu0
      %v687 = vadd.f32 %v515, %v686
      %v688 = vpop.f32.mrb[0].mxu0
      %689 = vmatprep.mubr.bf16.mxu0 0
      %690 = vmatmul.mubr.bf16.gmra.mrb[0].mxu0 %v391
      %v691 = vpop.f32.mrb[0].mxu0
      %v692 = vadd.f32 %v520, %v691
      %v693 = vpop.f32.mrb[0].mxu0
      %v694 = vpop.f32.mrb[0].mxu0
      %v695 = vadd.f32 %v523, %v694
      %v696 = vpop.f32.mrb[0].mxu0
      %697 = vmatprep.mubr.bf16.mxu0 0
      %698 = vmatmul.mubr.bf16.gmra.mrb[0].mxu0 %v394
      %v699 = vpop.f32.mrb[0].mxu0
      %v700 = vadd.f32 %v528, %v699
      %v701 = vpop.f32.mrb[0].mxu0
      %v702 = vpop.f32.mrb[0].mxu0
      %v703 = vadd.f32 %v531, %v702
      %v704 = vpop.f32.mrb[0].mxu0
      %705 = vmatprep.mubr.bf16.mxu0 0
      %706 = vmatmul.mubr.bf16.gmra.mrb[0].mxu0 %v397
      %v707 = vpop.f32.mrb[0].mxu0
      %v708 = vadd.f32 %v536, %v707
      %v709 = vpop.f32.mrb[0].mxu0
      %v710 = vpop.f32.mrb[0].mxu0
      %v711 = vadd.f32 %v539, %v710
      %v712 = vpop.f32.mrb[0].mxu0
      %713 = vmatprep.mubr.bf16.mxu0 0
      %714 = vmatmul.mubr.bf16.gmra.mrb[0].mxu0 %v400
      %v715 = vpop.f32.mrb[0].mxu0
      %v716 = vadd.f32 %v544, %v715
      %v717 = vpop.f32.mrb[0].mxu0
      %v718 = vpop.f32.mrb[0].mxu0
      %v719 = vadd.f32 %v547, %v718
      %v720 = vpop.f32.mrb[0].mxu0
      %721 = vmatprep.mubr.bf16.mxu0 0
      %722 = vmatmul.mubr.bf16.gmra.mrb[0].mxu0 %v403
      %v723 = vpop.f32.mrb[0].mxu0
      %v724 = vadd.f32 %v552, %v723
      %v725 = vpop.f32.mrb[0].mxu0
      %v726 = vpop.f32.mrb[0].mxu0
      %v727 = vadd.f32 %v555, %v726
      %v728 = vpop.f32.mrb[0].mxu0
      %729 = vmatprep.mubr.bf16.mxu0 0
      %730 = vmatmul.mubr.bf16.gmra.mrb[0].mxu0 %v406
      %v731 = vpop.f32.mrb[0].mxu0
      %v732 = vadd.f32 %v560, %v731
      %v733 = vpop.f32.mrb[0].mxu0
      %v734 = vpop.f32.mrb[0].mxu0
      %v735 = vadd.f32 %v563, %v734
      %v736 = vpop.f32.mrb[0].mxu0
      %737 = vmatprep.mubr.bf16.mxu0 0
      %738 = vmatmul.mubr.bf16.gmra.mrb[0].mxu0 %v409
      %v739 = vpop.f32.mrb[0].mxu0
      %v740 = vadd.f32 %v568, %v739
      %v741 = vpop.f32.mrb[0].mxu0
      %v742 = vpop.f32.mrb[0].mxu0
      %v743 = vadd.f32 %v571, %v742
      %v744 = vpop.f32.mrb[0].mxu0
      %745 = vmatprep.mubr.bf16.mxu0 0
      %746 = vmatmul.mubr.bf16.gmra.mrb[0].mxu0 %v412
      %v747 = vpop.f32.mrb[0].mxu0
      %v748 = vadd.f32 %v576, %v747
      %v749 = vpop.f32.mrb[0].mxu0
      %v750 = vpop.f32.mrb[0].mxu0
      %v751 = vadd.f32 %v579, %v750
      %v752 = vpop.f32.mrb[0].mxu0
      %753 = vdwg.mxu0
      %v754 = vld [vmem:[%s245 + $0x10] sm:$0xf]
      %v755 = vld [vmem:[%s245 + $0x14] sm:$0xf]
      %v756 = vld [vmem:[%s245 + $0x18] sm:$0xf]
      %v757 = vld [vmem:[%s245 + $0x1c] sm:$0xf]
      %v758 = vld [vmem:[%s245 + $0x20] sm:$0xf]
      %v759 = vld [vmem:[%s245 + $0x24] sm:$0xf]
      %v760 = vld [vmem:[%s245 + $0x28] sm:$0xf]
      %v761 = vld [vmem:[%s245 + $0x2c] sm:$0xf]
      %v762 = vld [vmem:[%s245 + $0x30] sm:$0xf]
      %v763 = vld [vmem:[%s245 + $0x34] sm:$0xf]
      %v764 = vld [vmem:[%s245 + $0x38] sm:$0xf]
      %v765 = vld [vmem:[%s245 + $0x3c] sm:$0xf]
      %v766 = vld [vmem:[%s245 + $0x40] sm:$0xf]
      %v767 = vld [vmem:[%s245 + $0x44] sm:$0xf]
      %v768 = vld [vmem:[%s245 + $0x48] sm:$0xf]
      %v769 = vld [vmem:[%s245 + $0x4c] sm:$0xf]
      %v770 = vld [vmem:[%s245 + $0x50] sm:$0xf]
      %v771 = vld [vmem:[%s245 + $0x54] sm:$0xf]
      %v772 = vld [vmem:[%s245 + $0x58] sm:$0xf]
      %v773 = vld [vmem:[%s245 + $0x5c] sm:$0xf]
      %v774 = vld [vmem:[%s245 + $0x60] sm:$0xf]
      %v775 = vld [vmem:[%s245 + $0x64] sm:$0xf]
      %v776 = vld [vmem:[%s245 + $0x68] sm:$0xf]
      %v777 = vld [vmem:[%s245 + $0x6c] sm:$0xf]
      %v778 = vld [vmem:[%s245 + $0x70] sm:$0xf]
      %v779 = vld [vmem:[%s245 + $0x74] sm:$0xf]
      %v780 = vld [vmem:[%s245 + $0x78] sm:$0xf]
      %v781 = vld [vmem:[%s245 + $0x7c] sm:$0xf]
      %v782 = vld [vmem:[%s245 + $0x80] sm:$0xf]
      %v783 = vld [vmem:[%s245 + $0x84] sm:$0xf]
      %v784 = vld [vmem:[%s245 + $0x88] sm:$0xf]
      %v785 = vld [vmem:[%s245 + $0x8c] sm:$0xf]
      %s786 = scalar_lea.vmem %s2, 12
      %v787 = vld [vmem:[%s786] sm:$0x3]
      %v820 = vunpack.c.l.b16 %v754
      %v821 = vunpack.c.l.b16 %v755
      %v822 = vunpack.c.l.b16 %v756
      %v823 = vunpack.c.l.b16 %v757
      %v824 = vunpack.c.l.b16 %v758
      %v825 = vunpack.c.l.b16 %v759
      %v826 = vunpack.c.l.b16 %v760
      %v827 = vunpack.c.l.b16 %v761
      %v828 = vunpack.c.l.b16 %v762
      %v829 = vunpack.c.l.b16 %v763
      %v830 = vunpack.c.l.b16 %v764
      %v831 = vunpack.c.l.b16 %v765
      %v832 = vunpack.c.l.b16 %v766
      %v833 = vunpack.c.l.b16 %v767
      %v834 = vunpack.c.l.b16 %v768
      %v835 = vunpack.c.l.b16 %v769
      %v836 = vunpack.c.l.b16 %v770
      %v837 = vunpack.c.l.b16 %v771
      %v838 = vunpack.c.l.b16 %v772
      %v839 = vunpack.c.l.b16 %v773
      %v840 = vunpack.c.l.b16 %v774
      %v841 = vunpack.c.l.b16 %v775
      %v842 = vunpack.c.l.b16 %v776
      %v843 = vunpack.c.l.b16 %v777
      %v844 = vunpack.c.l.b16 %v778
      %v845 = vunpack.c.l.b16 %v779
      %v846 = vunpack.c.l.b16 %v780
      %v847 = vunpack.c.l.b16 %v781
      %v848 = vunpack.c.l.b16 %v782
      %v849 = vunpack.c.l.b16 %v783
      %v850 = vunpack.c.l.b16 %v784
      %v851 = vunpack.c.l.b16 %v785
      %v852 = vpack.c.b16 %v821, %v820
      %v853 = vpack.c.b16 %v823, %v822
      %v854 = vpack.c.b16 %v825, %v824
      %v855 = vpack.c.b16 %v827, %v826
      %v856 = vpack.c.b16 %v829, %v828
      %v857 = vpack.c.b16 %v831, %v830
      %v858 = vpack.c.b16 %v833, %v832
      %v859 = vpack.c.b16 %v835, %v834
      %v860 = vpack.c.b16 %v837, %v836
      %v861 = vpack.c.b16 %v839, %v838
      %v862 = vpack.c.b16 %v841, %v840
      %v863 = vpack.c.b16 %v843, %v842
      %v864 = vpack.c.b16 %v845, %v844
      %v865 = vpack.c.b16 %v847, %v846
      %v866 = vpack.c.b16 %v849, %v848
      %v867 = vpack.c.b16 %v851, %v850
      %v869 = vsel %vm368, %v852, 0
      %v872 = vsel %vm368, %v853, 0
      %v875 = vsel %vm368, %v854, 0
      %v878 = vsel %vm368, %v855, 0
      %v881 = vsel %vm368, %v856, 0
      %v884 = vsel %vm368, %v857, 0
      %v887 = vsel %vm368, %v858, 0
      %v890 = vsel %vm368, %v859, 0
      %v893 = vsel %vm368, %v860, 0
      %v896 = vsel %vm368, %v861, 0
      %v899 = vsel %vm368, %v862, 0
      %v902 = vsel %vm368, %v863, 0
      %v905 = vsel %vm368, %v864, 0
      %v908 = vsel %vm368, %v865, 0
      %v911 = vsel %vm368, %v866, 0
      %v914 = vsel %vm368, %v867, 0
      %v917 = vsel %vm417, %v787, 0
      %919 = vmatprep.subr.bf16.mxu0 0
      %920 = vmatpush1.bf16.msra.mxu0 %v917
      %921 = vmatprep.subr.bf16.mxu0 0
      %922 = vmatpush1.bf16.msra.mxu0 0
      %923 = vmatprep.subr.bf16.mxu0 0
      %924 = vmatpush1.bf16.msra.mxu0 0
      %925 = vmatprep.subr.bf16.mxu0 0
      %926 = vmatpush1.bf16.msra.mxu0 0
      %927 = vmatprep.subr.bf16.mxu0 0
      %928 = vmatpush1.bf16.msra.mxu0 0
      %929 = vmatprep.subr.bf16.mxu0 0
      %930 = vmatpush1.bf16.msra.mxu0 0
      %931 = vmatprep.subr.bf16.mxu0 0
      %932 = vmatpush1.bf16.msra.mxu0 0
      %933 = vmatprep.subr.bf16.mxu0 0
      %934 = vmatpush1.bf16.msra.mxu0 0
      %935 = vmatprep.subr.bf16.mxu0 0
      %936 = vmatpush1.bf16.msra.mxu0 0
      %937 = vmatprep.subr.bf16.mxu0 0
      %938 = vmatpush1.bf16.msra.mxu0 0
      %939 = vmatprep.subr.bf16.mxu0 0
      %940 = vmatpush1.bf16.msra.mxu0 0
      %941 = vmatprep.subr.bf16.mxu0 0
      %942 = vmatpush1.bf16.msra.mxu0 0
      %943 = vmatprep.subr.bf16.mxu0 0
      %944 = vmatpush1.bf16.msra.mxu0 0
      %945 = vmatprep.subr.bf16.mxu0 0
      %946 = vmatpush1.bf16.msra.mxu0 0
      %947 = vmatprep.subr.bf16.mxu0 0
      %948 = vmatpush1.bf16.msra.mxu0 0
      %949 = vmatprep.subr.bf16.mxu0 0
      %950 = vmatpush1.bf16.msra.mxu0 0
      %951 = vmatprep.mubr.bf16.mxu0 0
      %952 = vmatmul.mubr.bf16.gmra.mrb[0].mxu0 %v869
      %v953 = vpop.f32.mrb[0].mxu0
      %v954 = vadd.f32 0.0, %v953
      %v955 = vpop.f32.mrb[0].mxu0
      %v956 = vpop.f32.mrb[0].mxu0
      %v957 = vadd.f32 0.0, %v956
      %v958 = vpop.f32.mrb[0].mxu0
      %959 = vmatprep.mubr.bf16.mxu0 0
      %960 = vmatmul.mubr.bf16.gmra.mrb[0].mxu0 %v872
      %v961 = vpop.f32.mrb[0].mxu0
      %v962 = vadd.f32 0.0, %v961
      %v963 = vpop.f32.mrb[0].mxu0
      %v964 = vpop.f32.mrb[0].mxu0
      %v965 = vadd.f32 0.0, %v964
      %v966 = vpop.f32.mrb[0].mxu0
      %967 = vmatprep.mubr.bf16.mxu0 0
      %968 = vmatmul.mubr.bf16.gmra.mrb[0].mxu0 %v875
      %v969 = vpop.f32.mrb[0].mxu0
      %v970 = vadd.f32 0.0, %v969
      %v971 = vpop.f32.mrb[0].mxu0
      %v972 = vpop.f32.mrb[0].mxu0
      %v973 = vadd.f32 0.0, %v972
      %v974 = vpop.f32.mrb[0].mxu0
      %975 = vmatprep.mubr.bf16.mxu0 0
      %976 = vmatmul.mubr.bf16.gmra.mrb[0].mxu0 %v878
      %v977 = vpop.f32.mrb[0].mxu0
      %v978 = vadd.f32 0.0, %v977
      %v979 = vpop.f32.mrb[0].mxu0
      %v980 = vpop.f32.mrb[0].mxu0
      %v981 = vadd.f32 0.0, %v980
      %v982 = vpop.f32.mrb[0].mxu0
      %983 = vmatprep.mubr.bf16.mxu0 0
      %984 = vmatmul.mubr.bf16.gmra.mrb[0].mxu0 %v881
      %v985 = vpop.f32.mrb[0].mxu0
      %v986 = vadd.f32 0.0, %v985
      %v987 = vpop.f32.mrb[0].mxu0
      %v988 = vpop.f32.mrb[0].mxu0
      %v989 = vadd.f32 0.0, %v988
      %v990 = vpop.f32.mrb[0].mxu0
      %991 = vmatprep.mubr.bf16.mxu0 0
      %992 = vmatmul.mubr.bf16.gmra.mrb[0].mxu0 %v884
      %v993 = vpop.f32.mrb[0].mxu0
      %v994 = vadd.f32 0.0, %v993
      %v995 = vpop.f32.mrb[0].mxu0
      %v996 = vpop.f32.mrb[0].mxu0
      %v997 = vadd.f32 0.0, %v996
      %v998 = vpop.f32.mrb[0].mxu0
      %999 = vmatprep.mubr.bf16.mxu0 0
      %1000 = vmatmul.mubr.bf16.gmra.mrb[0].mxu0 %v887
      %v1001 = vpop.f32.mrb[0].mxu0
      %v1002 = vadd.f32 0.0, %v1001
      %v1003 = vpop.f32.mrb[0].mxu0
      %v1004 = vpop.f32.mrb[0].mxu0
      %v1005 = vadd.f32 0.0, %v1004
      %v1006 = vpop.f32.mrb[0].mxu0
      %1007 = vmatprep.mubr.bf16.mxu0 0
      %1008 = vmatmul.mubr.bf16.gmra.mrb[0].mxu0 %v890
      %v1009 = vpop.f32.mrb[0].mxu0
      %v1010 = vadd.f32 0.0, %v1009
      %v1011 = vpop.f32.mrb[0].mxu0
      %v1012 = vpop.f32.mrb[0].mxu0
      %v1013 = vadd.f32 0.0, %v1012
      %v1014 = vpop.f32.mrb[0].mxu0
      %1015 = vmatprep.mubr.bf16.mxu0 0
      %1016 = vmatmul.mubr.bf16.gmra.mrb[0].mxu0 %v893
      %v1017 = vpop.f32.mrb[0].mxu0
      %v1018 = vadd.f32 0.0, %v1017
      %v1019 = vpop.f32.mrb[0].mxu0
      %v1020 = vpop.f32.mrb[0].mxu0
      %v1021 = vadd.f32 0.0, %v1020
      %v1022 = vpop.f32.mrb[0].mxu0
      %1023 = vmatprep.mubr.bf16.mxu0 0
      %1024 = vmatmul.mubr.bf16.gmra.mrb[0].mxu0 %v896
      %v1025 = vpop.f32.mrb[0].mxu0
      %v1026 = vadd.f32 0.0, %v1025
      %v1027 = vpop.f32.mrb[0].mxu0
      %v1028 = vpop.f32.mrb[0].mxu0
      %v1029 = vadd.f32 0.0, %v1028
      %v1030 = vpop.f32.mrb[0].mxu0
      %1031 = vmatprep.mubr.bf16.mxu0 0
      %1032 = vmatmul.mubr.bf16.gmra.mrb[0].mxu0 %v899
      %v1033 = vpop.f32.mrb[0].mxu0
      %v1034 = vadd.f32 0.0, %v1033
      %v1035 = vpop.f32.mrb[0].mxu0
      %v1036 = vpop.f32.mrb[0].mxu0
      %v1037 = vadd.f32 0.0, %v1036
      %v1038 = vpop.f32.mrb[0].mxu0
      %1039 = vmatprep.mubr.bf16.mxu0 0
      %1040 = vmatmul.mubr.bf16.gmra.mrb[0].mxu0 %v902
      %v1041 = vpop.f32.mrb[0].mxu0
      %v1042 = vadd.f32 0.0, %v1041
      %v1043 = vpop.f32.mrb[0].mxu0
      %v1044 = vpop.f32.mrb[0].mxu0
      %v1045 = vadd.f32 0.0, %v1044
      %v1046 = vpop.f32.mrb[0].mxu0
      %1047 = vmatprep.mubr.bf16.mxu0 0
      %1048 = vmatmul.mubr.bf16.gmra.mrb[0].mxu0 %v905
      %v1049 = vpop.f32.mrb[0].mxu0
      %v1050 = vadd.f32 0.0, %v1049
      %v1051 = vpop.f32.mrb[0].mxu0
      %v1052 = vpop.f32.mrb[0].mxu0
      %v1053 = vadd.f32 0.0, %v1052
      %v1054 = vpop.f32.mrb[0].mxu0
      %1055 = vmatprep.mubr.bf16.mxu0 0
      %1056 = vmatmul.mubr.bf16.gmra.mrb[0].mxu0 %v908
      %v1057 = vpop.f32.mrb[0].mxu0
      %v1058 = vadd.f32 0.0, %v1057
      %v1059 = vpop.f32.mrb[0].mxu0
      %v1060 = vpop.f32.mrb[0].mxu0
      %v1061 = vadd.f32 0.0, %v1060
      %v1062 = vpop.f32.mrb[0].mxu0
      %1063 = vmatprep.mubr.bf16.mxu0 0
      %1064 = vmatmul.mubr.bf16.gmra.mrb[0].mxu0 %v911
      %v1065 = vpop.f32.mrb[0].mxu0
      %v1066 = vadd.f32 0.0, %v1065
      %v1067 = vpop.f32.mrb[0].mxu0
      %v1068 = vpop.f32.mrb[0].mxu0
      %v1069 = vadd.f32 0.0, %v1068
      %v1070 = vpop.f32.mrb[0].mxu0
      %1071 = vmatprep.mubr.bf16.mxu0 0
      %1072 = vmatmul.mubr.bf16.gmra.mrb[0].mxu0 %v914
      %v1073 = vpop.f32.mrb[0].mxu0
      %v1074 = vadd.f32 0.0, %v1073
      %v1075 = vpop.f32.mrb[0].mxu0
      %v1076 = vpop.f32.mrb[0].mxu0
      %v1077 = vadd.f32 0.0, %v1076
      %v1078 = vpop.f32.mrb[0].mxu0
      %1079 = vdwg.mxu0
      %v1080 = vadd.f32 %v628, %v954
      %v1081 = vadd.f32 %v631, %v957
      %v1082 = vadd.f32 %v636, %v962
      %v1083 = vadd.f32 %v639, %v965
      %v1084 = vadd.f32 %v644, %v970
      %v1085 = vadd.f32 %v647, %v973
      %v1086 = vadd.f32 %v652, %v978
      %v1087 = vadd.f32 %v655, %v981
      %v1088 = vadd.f32 %v660, %v986
      %v1089 = vadd.f32 %v663, %v989
      %v1090 = vadd.f32 %v668, %v994
      %v1091 = vadd.f32 %v671, %v997
      %v1092 = vadd.f32 %v676, %v1002
      %v1093 = vadd.f32 %v679, %v1005
      %v1094 = vadd.f32 %v684, %v1010
      %v1095 = vadd.f32 %v687, %v1013
      %v1096 = vadd.f32 %v692, %v1018
      %v1097 = vadd.f32 %v695, %v1021
      %v1098 = vadd.f32 %v700, %v1026
      %v1099 = vadd.f32 %v703, %v1029
      %v1100 = vadd.f32 %v708, %v1034
      %v1101 = vadd.f32 %v711, %v1037
      %v1102 = vadd.f32 %v716, %v1042
      %v1103 = vadd.f32 %v719, %v1045
      %v1104 = vadd.f32 %v724, %v1050
      %v1105 = vadd.f32 %v727, %v1053
      %v1106 = vadd.f32 %v732, %v1058
      %v1107 = vadd.f32 %v735, %v1061
      %v1108 = vadd.f32 %v740, %v1066
      %v1109 = vadd.f32 %v743, %v1069
      %v1110 = vadd.f32 %v748, %v1074
      %v1111 = vadd.f32 %v751, %v1077
      %v1112 = vld [vmem:[%s1] sm:$0xff]
      %v1113 = vld [vmem:[%s1 + $0x8] sm:$0xff]
      %v1114 = vld [vmem:[%s1 + $0x10] sm:$0xff]
      %v1115 = vld [vmem:[%s1 + $0x18] sm:$0xff]
      %v1116 = vld [vmem:[%s1 + $0x20] sm:$0xff]
      %v1117 = vld [vmem:[%s1 + $0x28] sm:$0xff]
      %v1118 = vld [vmem:[%s1 + $0x30] sm:$0xff]
      %v1119 = vld [vmem:[%s1 + $0x38] sm:$0xff]
      %v1120 = vld [vmem:[%s1 + $0x40] sm:$0xff]
      %v1121 = vld [vmem:[%s1 + $0x48] sm:$0xff]
      %v1122 = vld [vmem:[%s1 + $0x50] sm:$0xff]
      %v1123 = vld [vmem:[%s1 + $0x58] sm:$0xff]
      %v1124 = vld [vmem:[%s1 + $0x60] sm:$0xff]
      %v1125 = vld [vmem:[%s1 + $0x68] sm:$0xff]
      %v1126 = vld [vmem:[%s1 + $0x70] sm:$0xff]
      %v1127 = vld [vmem:[%s1 + $0x78] sm:$0xff]
      %v1128 = vld [vmem:[%s1 + $0x80] sm:$0xff]
      %v1129 = vld [vmem:[%s1 + $0x88] sm:$0xff]
      %v1130 = vld [vmem:[%s1 + $0x90] sm:$0xff]
      %v1131 = vld [vmem:[%s1 + $0x98] sm:$0xff]
      %v1132 = vld [vmem:[%s1 + $0xa0] sm:$0xff]
      %v1133 = vld [vmem:[%s1 + $0xa8] sm:$0xff]
      %v1134 = vld [vmem:[%s1 + $0xb0] sm:$0xff]
      %v1135 = vld [vmem:[%s1 + $0xb8] sm:$0xff]
      %v1136 = vld [vmem:[%s1 + $0xc0] sm:$0xff]
      %v1137 = vld [vmem:[%s1 + $0xc8] sm:$0xff]
      %v1138 = vld [vmem:[%s1 + $0xd0] sm:$0xff]
      %v1139 = vld [vmem:[%s1 + $0xd8] sm:$0xff]
      %v1140 = vld [vmem:[%s1 + $0xe0] sm:$0xff]
      %v1141 = vld [vmem:[%s1 + $0xe8] sm:$0xff]
      %v1142 = vld [vmem:[%s1 + $0xf0] sm:$0xff]
      %v1143 = vld [vmem:[%s1 + $0xf8] sm:$0xff]
      %1145 = vset.pattern.permute.xlu0 0
      %1146 = vperm.xlu0 %1145, %v1112
      %v1147 = vpop.permute.xlu0 %1146
      %1150 = vset.pattern.permute.xlu0 0
      %1151 = vperm.xlu0 %1150, %v1113
      %v1152 = vpop.permute.xlu0 %1151
      %1155 = vset.pattern.permute.xlu0 0
      %1156 = vperm.xlu0 %1155, %v1114
      %v1157 = vpop.permute.xlu0 %1156
      %1160 = vset.pattern.permute.xlu0 0
      %1161 = vperm.xlu0 %1160, %v1115
      %v1162 = vpop.permute.xlu0 %1161
      %1165 = vset.pattern.permute.xlu0 0
      %1166 = vperm.xlu0 %1165, %v1116
      %v1167 = vpop.permute.xlu0 %1166
      %1170 = vset.pattern.permute.xlu0 0
      %1171 = vperm.xlu0 %1170, %v1117
      %v1172 = vpop.permute.xlu0 %1171
      %1175 = vset.pattern.permute.xlu0 0
      %1176 = vperm.xlu0 %1175, %v1118
      %v1177 = vpop.permute.xlu0 %1176
      %1180 = vset.pattern.permute.xlu0 0
      %1181 = vperm.xlu0 %1180, %v1119
      %v1182 = vpop.permute.xlu0 %1181
      %1185 = vset.pattern.permute.xlu0 0
      %1186 = vperm.xlu0 %1185, %v1120
      %v1187 = vpop.permute.xlu0 %1186
      %1190 = vset.pattern.permute.xlu0 0
      %1191 = vperm.xlu0 %1190, %v1121
      %v1192 = vpop.permute.xlu0 %1191
      %1195 = vset.pattern.permute.xlu0 0
      %1196 = vperm.xlu0 %1195, %v1122
      %v1197 = vpop.permute.xlu0 %1196
      %1200 = vset.pattern.permute.xlu0 0
      %1201 = vperm.xlu0 %1200, %v1123
      %v1202 = vpop.permute.xlu0 %1201
      %1205 = vset.pattern.permute.xlu0 0
      %1206 = vperm.xlu0 %1205, %v1124
      %v1207 = vpop.permute.xlu0 %1206
      %1210 = vset.pattern.permute.xlu0 0
      %1211 = vperm.xlu0 %1210, %v1125
      %v1212 = vpop.permute.xlu0 %1211
      %1215 = vset.pattern.permute.xlu0 0
      %1216 = vperm.xlu0 %1215, %v1126
      %v1217 = vpop.permute.xlu0 %1216
      %1220 = vset.pattern.permute.xlu0 0
      %1221 = vperm.xlu0 %1220, %v1127
      %v1222 = vpop.permute.xlu0 %1221
      %1225 = vset.pattern.permute.xlu0 0
      %1226 = vperm.xlu0 %1225, %v1128
      %v1227 = vpop.permute.xlu0 %1226
      %1230 = vset.pattern.permute.xlu0 0
      %1231 = vperm.xlu0 %1230, %v1129
      %v1232 = vpop.permute.xlu0 %1231
      %1235 = vset.pattern.permute.xlu0 0
      %1236 = vperm.xlu0 %1235, %v1130
      %v1237 = vpop.permute.xlu0 %1236
      %1240 = vset.pattern.permute.xlu0 0
      %1241 = vperm.xlu0 %1240, %v1131
      %v1242 = vpop.permute.xlu0 %1241
      %1245 = vset.pattern.permute.xlu0 0
      %1246 = vperm.xlu0 %1245, %v1132
      %v1247 = vpop.permute.xlu0 %1246
      %1250 = vset.pattern.permute.xlu0 0
      %1251 = vperm.xlu0 %1250, %v1133
      %v1252 = vpop.permute.xlu0 %1251
      %1255 = vset.pattern.permute.xlu0 0
      %1256 = vperm.xlu0 %1255, %v1134
      %v1257 = vpop.permute.xlu0 %1256
      %1260 = vset.pattern.permute.xlu0 0
      %1261 = vperm.xlu0 %1260, %v1135
      %v1262 = vpop.permute.xlu0 %1261
      %1265 = vset.pattern.permute.xlu0 0
      %1266 = vperm.xlu0 %1265, %v1136
      %v1267 = vpop.permute.xlu0 %1266
      %1270 = vset.pattern.permute.xlu0 0
      %1271 = vperm.xlu0 %1270, %v1137
      %v1272 = vpop.permute.xlu0 %1271
      %1275 = vset.pattern.permute.xlu0 0
      %1276 = vperm.xlu0 %1275, %v1138
      %v1277 = vpop.permute.xlu0 %1276
      %1280 = vset.pattern.permute.xlu0 0
      %1281 = vperm.xlu0 %1280, %v1139
      %v1282 = vpop.permute.xlu0 %1281
      %1285 = vset.pattern.permute.xlu0 0
      %1286 = vperm.xlu0 %1285, %v1140
      %v1287 = vpop.permute.xlu0 %1286
      %1290 = vset.pattern.permute.xlu0 0
      %1291 = vperm.xlu0 %1290, %v1141
      %v1292 = vpop.permute.xlu0 %1291
      %1295 = vset.pattern.permute.xlu0 0
      %1296 = vperm.xlu0 %1295, %v1142
      %v1297 = vpop.permute.xlu0 %1296
      %1300 = vset.pattern.permute.xlu0 0
      %1301 = vperm.xlu0 %1300, %v1143
      %v1302 = vpop.permute.xlu0 %1301
      %v1304 = vmul.f32 %v1080, %v1147
      %v1305 = vmul.f32 %v1081, %v1152
      %v1306 = vmul.f32 %v1082, %v1157
      %v1307 = vmul.f32 %v1083, %v1162
      %v1308 = vmul.f32 %v1084, %v1167
      %v1309 = vmul.f32 %v1085, %v1172
      %v1310 = vmul.f32 %v1086, %v1177
      %v1311 = vmul.f32 %v1087, %v1182
      %v1312 = vmul.f32 %v1088, %v1187
      %v1313 = vmul.f32 %v1089, %v1192
      %v1314 = vmul.f32 %v1090, %v1197
      %v1315 = vmul.f32 %v1091, %v1202
      %v1316 = vmul.f32 %v1092, %v1207
      %v1317 = vmul.f32 %v1093, %v1212
      %v1318 = vmul.f32 %v1094, %v1217
      %v1319 = vmul.f32 %v1095, %v1222
      %v1320 = vmul.f32 %v1096, %v1227
      %v1321 = vmul.f32 %v1097, %v1232
      %v1322 = vmul.f32 %v1098, %v1237
      %v1323 = vmul.f32 %v1099, %v1242
      %v1324 = vmul.f32 %v1100, %v1247
      %v1325 = vmul.f32 %v1101, %v1252
      %v1326 = vmul.f32 %v1102, %v1257
      %v1327 = vmul.f32 %v1103, %v1262
      %v1328 = vmul.f32 %v1104, %v1267
      %v1329 = vmul.f32 %v1105, %v1272
      %v1330 = vmul.f32 %v1106, %v1277
      %v1331 = vmul.f32 %v1107, %v1282
      %v1332 = vmul.f32 %v1108, %v1287
      %v1333 = vmul.f32 %v1109, %v1292
      %v1334 = vmul.f32 %v1110, %v1297
      %v1335 = vmul.f32 %v1111, %v1302
      %v1336 = vadd.f32 %v1304, 0.0
      %v1337 = vadd.f32 %v1305, 0.0
      %v1338 = vadd.f32 %v1306, 0.0
      %v1339 = vadd.f32 %v1307, 0.0
      %v1340 = vadd.f32 %v1308, 0.0
      %v1341 = vadd.f32 %v1309, 0.0
      %v1342 = vadd.f32 %v1310, 0.0
      %v1343 = vadd.f32 %v1311, 0.0
      %v1344 = vadd.f32 %v1312, 0.0
      %v1345 = vadd.f32 %v1313, 0.0
      %v1346 = vadd.f32 %v1314, 0.0
      %v1347 = vadd.f32 %v1315, 0.0
      %v1348 = vadd.f32 %v1316, 0.0
      %v1349 = vadd.f32 %v1317, 0.0
      %v1350 = vadd.f32 %v1318, 0.0
      %v1351 = vadd.f32 %v1319, 0.0
      %v1352 = vadd.f32 %v1320, 0.0
      %v1353 = vadd.f32 %v1321, 0.0
      %v1354 = vadd.f32 %v1322, 0.0
      %v1355 = vadd.f32 %v1323, 0.0
      %v1356 = vadd.f32 %v1324, 0.0
      %v1357 = vadd.f32 %v1325, 0.0
      %v1358 = vadd.f32 %v1326, 0.0
      %v1359 = vadd.f32 %v1327, 0.0
      %v1360 = vadd.f32 %v1328, 0.0
      %v1361 = vadd.f32 %v1329, 0.0
      %v1362 = vadd.f32 %v1330, 0.0
      %v1363 = vadd.f32 %v1331, 0.0
      %v1364 = vadd.f32 %v1332, 0.0
      %v1365 = vadd.f32 %v1333, 0.0
      %v1366 = vadd.f32 %v1334, 0.0
      %v1367 = vadd.f32 %v1335, 0.0
      %v1368 = vld [vmem:[%s245] sm:$0xf]
      %v1369 = vld [vmem:[%s245 + $0x4] sm:$0xf]
      %v1370 = vld [vmem:[%s245 + $0x8] sm:$0xf]
      %v1371 = vld [vmem:[%s245 + $0xc] sm:$0xf]
      %v1372 = vld [vmem:[%s245 + $0x10] sm:$0xf]
      %v1373 = vld [vmem:[%s245 + $0x14] sm:$0xf]
      %v1374 = vld [vmem:[%s245 + $0x18] sm:$0xf]
      %v1375 = vld [vmem:[%s245 + $0x1c] sm:$0xf]
      %v1376 = vld [vmem:[%s245 + $0x20] sm:$0xf]
      %v1377 = vld [vmem:[%s245 + $0x24] sm:$0xf]
      %v1378 = vld [vmem:[%s245 + $0x28] sm:$0xf]
      %v1379 = vld [vmem:[%s245 + $0x2c] sm:$0xf]
      %v1380 = vld [vmem:[%s245 + $0x30] sm:$0xf]
      %v1381 = vld [vmem:[%s245 + $0x34] sm:$0xf]
      %v1382 = vld [vmem:[%s245 + $0x38] sm:$0xf]
      %v1383 = vld [vmem:[%s245 + $0x3c] sm:$0xf]
      %v1384 = vld [vmem:[%s245 + $0x40] sm:$0xf]
      %v1385 = vld [vmem:[%s245 + $0x44] sm:$0xf]
      %v1386 = vld [vmem:[%s245 + $0x48] sm:$0xf]
      %v1387 = vld [vmem:[%s245 + $0x4c] sm:$0xf]
      %v1388 = vld [vmem:[%s245 + $0x50] sm:$0xf]
      %v1389 = vld [vmem:[%s245 + $0x54] sm:$0xf]
      %v1390 = vld [vmem:[%s245 + $0x58] sm:$0xf]
      %v1391 = vld [vmem:[%s245 + $0x5c] sm:$0xf]
      %v1392 = vld [vmem:[%s245 + $0x60] sm:$0xf]
      %v1393 = vld [vmem:[%s245 + $0x64] sm:$0xf]
      %v1394 = vld [vmem:[%s245 + $0x68] sm:$0xf]
      %v1395 = vld [vmem:[%s245 + $0x6c] sm:$0xf]
      %v1396 = vld [vmem:[%s245 + $0x70] sm:$0xf]
      %v1397 = vld [vmem:[%s245 + $0x74] sm:$0xf]
      %v1398 = vld [vmem:[%s245 + $0x78] sm:$0xf]
      %v1399 = vld [vmem:[%s245 + $0x7c] sm:$0xf]
      %v1400 = vld [vmem:[%s245 + $0x80] sm:$0x1]
      %s1401 = scalar_lea.vmem %s2, 2
      %v1402 = vld [vmem:[%s1401] sm:$0x3]
      %v1403 = vld [vmem:[%s245 + $0x80] sm:$0xf]
      %v1404 = vld [vmem:[%s245 + $0x84] sm:$0xf]
      %v1405 = vld [vmem:[%s245 + $0x88] sm:$0x1]
      %s1406 = scalar_lea.vmem %s2, 8
      %v1407 = vld [vmem:[%s1406] sm:$0x3]
      %v1441 = vunpack.c.l.b16 %v1370
      %v1442 = vunpack.c.l.b16 %v1371
      %v1443 = vunpack.c.l.b16 %v1372
      %v1444 = vunpack.c.l.b16 %v1373
      %v1445 = vunpack.c.l.b16 %v1374
      %v1446 = vunpack.c.l.b16 %v1375
      %v1447 = vunpack.c.l.b16 %v1376
      %v1448 = vunpack.c.l.b16 %v1377
      %v1449 = vunpack.c.l.b16 %v1378
      %v1450 = vunpack.c.l.b16 %v1379
      %v1451 = vunpack.c.l.b16 %v1380
      %v1452 = vunpack.c.l.b16 %v1381
      %v1453 = vunpack.c.l.b16 %v1382
      %v1454 = vunpack.c.l.b16 %v1383
      %v1455 = vunpack.c.l.b16 %v1384
      %v1456 = vunpack.c.l.b16 %v1385
      %v1457 = vunpack.c.l.b16 %v1386
      %v1458 = vunpack.c.l.b16 %v1387
      %v1459 = vunpack.c.l.b16 %v1388
      %v1460 = vunpack.c.l.b16 %v1389
      %v1461 = vunpack.c.l.b16 %v1390
      %v1462 = vunpack.c.l.b16 %v1391
      %v1463 = vunpack.c.l.b16 %v1392
      %v1464 = vunpack.c.l.b16 %v1393
      %v1465 = vunpack.c.l.b16 %v1394
      %v1466 = vunpack.c.l.b16 %v1395
      %v1467 = vunpack.c.l.b16 %v1396
      %v1468 = vunpack.c.l.b16 %v1397
      %v1469 = vunpack.c.l.b16 %v1398
      %v1470 = vunpack.c.l.b16 %v1399
      %v1471 = vunpack.c.l.b16 %v1403
      %v1472 = vunpack.c.l.b16 %v1404
      %v1473 = vunpack.c.l.b16 %v1405
      %v1474 = vpack.c.b16 %v1442, %v1441
      %v1475 = vpack.c.b16 %v1444, %v1443
      %v1476 = vpack.c.b16 %v1446, %v1445
      %v1477 = vpack.c.b16 %v1448, %v1447
      %v1478 = vpack.c.b16 %v1450, %v1449
      %v1479 = vpack.c.b16 %v1452, %v1451
      %v1480 = vpack.c.b16 %v1454, %v1453
      %v1481 = vpack.c.b16 %v1456, %v1455
      %v1482 = vpack.c.b16 %v1458, %v1457
      %v1483 = vpack.c.b16 %v1460, %v1459
      %v1484 = vpack.c.b16 %v1462, %v1461
      %v1485 = vpack.c.b16 %v1464, %v1463
      %v1486 = vpack.c.b16 %v1466, %v1465
      %v1487 = vpack.c.b16 %v1468, %v1467
      %v1488 = vpack.c.b16 %v1470, %v1469
      %v1489 = vpack.c.b16 %v1472, %v1471
      %v1490 = vpack.c.b16 %v1473, %v1473
      %vm1491 = vsmask.f32 7424
      %v1493 = vshrl.u32 %v1474, 16
      %v1495 = vshll.u32 %v1474, 16
      %v1497 = vrot.slane %v1495, 1
      %v1498 = vor.u32 %v1493, %v1497
      %v1500 = vshll.u32 %v1475, 16
      %v1502 = vrot.slane %v1500, 1
      %v1503 = vsel %vm1491, %v1498, %v1502
      %v1504 = vshrl.u32 %v1475, 16
      %v1506 = vor.u32 %v1504, %v1502
      %v1508 = vshll.u32 %v1476, 16
      %v1510 = vrot.slane %v1508, 1
      %v1511 = vsel %vm1491, %v1506, %v1510
      %v1512 = vshrl.u32 %v1476, 16
      %v1514 = vor.u32 %v1512, %v1510
      %v1516 = vshll.u32 %v1477, 16
      %v1518 = vrot.slane %v1516, 1
      %v1519 = vsel %vm1491, %v1514, %v1518
      %v1520 = vshrl.u32 %v1477, 16
      %v1522 = vor.u32 %v1520, %v1518
      %v1524 = vshll.u32 %v1478, 16
      %v1526 = vrot.slane %v1524, 1
      %v1527 = vsel %vm1491, %v1522, %v1526
      %v1528 = vshrl.u32 %v1478, 16
      %v1530 = vor.u32 %v1528, %v1526
      %v1532 = vshll.u32 %v1479, 16
      %v1534 = vrot.slane %v1532, 1
      %v1535 = vsel %vm1491, %v1530, %v1534
      %v1536 = vshrl.u32 %v1479, 16
      %v1538 = vor.u32 %v1536, %v1534
      %v1540 = vshll.u32 %v1480, 16
      %v1542 = vrot.slane %v1540, 1
      %v1543 = vsel %vm1491, %v1538, %v1542
      %v1544 = vshrl.u32 %v1480, 16
      %v1546 = vor.u32 %v1544, %v1542
      %v1548 = vshll.u32 %v1481, 16
      %v1550 = vrot.slane %v1548, 1
      %v1551 = vsel %vm1491, %v1546, %v1550
      %v1552 = vshrl.u32 %v1481, 16
      %v1554 = vor.u32 %v1552, %v1550
      %v1556 = vshll.u32 %v1482, 16
      %v1558 = vrot.slane %v1556, 1
      %v1559 = vsel %vm1491, %v1554, %v1558
      %v1560 = vshrl.u32 %v1482, 16
      %v1562 = vor.u32 %v1560, %v1558
      %v1564 = vshll.u32 %v1483, 16
      %v1566 = vrot.slane %v1564, 1
      %v1567 = vsel %vm1491, %v1562, %v1566
      %v1568 = vshrl.u32 %v1483, 16
      %v1570 = vor.u32 %v1568, %v1566
      %v1572 = vshll.u32 %v1484, 16
      %v1574 = vrot.slane %v1572, 1
      %v1575 = vsel %vm1491, %v1570, %v1574
      %v1576 = vshrl.u32 %v1484, 16
      %v1578 = vor.u32 %v1576, %v1574
      %v1580 = vshll.u32 %v1485, 16
      %v1582 = vrot.slane %v1580, 1
      %v1583 = vsel %vm1491, %v1578, %v1582
      %v1584 = vshrl.u32 %v1485, 16
      %v1586 = vor.u32 %v1584, %v1582
      %v1588 = vshll.u32 %v1486, 16
      %v1590 = vrot.slane %v1588, 1
      %v1591 = vsel %vm1491, %v1586, %v1590
      %v1592 = vshrl.u32 %v1486, 16
      %v1594 = vor.u32 %v1592, %v1590
      %v1596 = vshll.u32 %v1487, 16
      %v1598 = vrot.slane %v1596, 1
      %v1599 = vsel %vm1491, %v1594, %v1598
      %v1600 = vshrl.u32 %v1487, 16
      %v1602 = vor.u32 %v1600, %v1598
      %v1604 = vshll.u32 %v1488, 16
      %v1606 = vrot.slane %v1604, 1
      %v1607 = vsel %vm1491, %v1602, %v1606
      %v1608 = vshrl.u32 %v1488, 16
      %v1610 = vor.u32 %v1608, %v1606
      %v1612 = vshll.u32 %v1489, 16
      %v1614 = vrot.slane %v1612, 1
      %v1615 = vsel %vm1491, %v1610, %v1614
      %v1616 = vshrl.u32 %v1489, 16
      %v1618 = vor.u32 %v1616, %v1614
      %v1620 = vshll.u32 %v1490, 16
      %v1622 = vrot.slane %v1620, 1
      %v1623 = vsel %vm1491, %v1618, %v1622
      %v1625 = vsel %vm368, %v1503, 0
      %v1628 = vsel %vm368, %v1511, 0
      %v1631 = vsel %vm368, %v1519, 0
      %v1634 = vsel %vm368, %v1527, 0
      %v1637 = vsel %vm368, %v1535, 0
      %v1640 = vsel %vm368, %v1543, 0
      %v1643 = vsel %vm368, %v1551, 0
      %v1646 = vsel %vm368, %v1559, 0
      %v1649 = vsel %vm368, %v1567, 0
      %v1652 = vsel %vm368, %v1575, 0
      %v1655 = vsel %vm368, %v1583, 0
      %v1658 = vsel %vm368, %v1591, 0
      %v1661 = vsel %vm368, %v1599, 0
      %v1664 = vsel %vm368, %v1607, 0
      %v1667 = vsel %vm368, %v1615, 0
      %v1670 = vsel %vm368, %v1623, 0
      %v1673 = vsel %vm417, %v1407, 0
      %1675 = vmatprep.subr.bf16.mxu0 0
      %1676 = vmatpush1.bf16.msra.mxu0 %v1673
      %1677 = vmatprep.subr.bf16.mxu0 0
      %1678 = vmatpush1.bf16.msra.mxu0 0
      %1679 = vmatprep.subr.bf16.mxu0 0
      %1680 = vmatpush1.bf16.msra.mxu0 0
      %1681 = vmatprep.subr.bf16.mxu0 0
      %1682 = vmatpush1.bf16.msra.mxu0 0
      %1683 = vmatprep.subr.bf16.mxu0 0
      %1684 = vmatpush1.bf16.msra.mxu0 0
      %1685 = vmatprep.subr.bf16.mxu0 0
      %1686 = vmatpush1.bf16.msra.mxu0 0
      %1687 = vmatprep.subr.bf16.mxu0 0
      %1688 = vmatpush1.bf16.msra.mxu0 0
      %1689 = vmatprep.subr.bf16.mxu0 0
      %1690 = vmatpush1.bf16.msra.mxu0 0
      %1691 = vmatprep.subr.bf16.mxu0 0
      %1692 = vmatpush1.bf16.msra.mxu0 0
      %1693 = vmatprep.subr.bf16.mxu0 0
      %1694 = vmatpush1.bf16.msra.mxu0 0
      %1695 = vmatprep.subr.bf16.mxu0 0
      %1696 = vmatpush1.bf16.msra.mxu0 0
      %1697 = vmatprep.subr.bf16.mxu0 0
      %1698 = vmatpush1.bf16.msra.mxu0 0
      %1699 = vmatprep.subr.bf16.mxu0 0
      %1700 = vmatpush1.bf16.msra.mxu0 0
      %1701 = vmatprep.subr.bf16.mxu0 0
      %1702 = vmatpush1.bf16.msra.mxu0 0
      %1703 = vmatprep.subr.bf16.mxu0 0
      %1704 = vmatpush1.bf16.msra.mxu0 0
      %1705 = vmatprep.subr.bf16.mxu0 0
      %1706 = vmatpush1.bf16.msra.mxu0 0
      %1707 = vmatprep.mubr.bf16.mxu0 0
      %1708 = vmatmul.mubr.bf16.gmra.mrb[0].mxu0 %v1625
      %v1709 = vpop.f32.mrb[0].mxu0
      %v1710 = vadd.f32 0.0, %v1709
      %v1711 = vpop.f32.mrb[0].mxu0
      %v1712 = vpop.f32.mrb[0].mxu0
      %v1713 = vadd.f32 0.0, %v1712
      %v1714 = vpop.f32.mrb[0].mxu0
      %1715 = vmatprep.mubr.bf16.mxu0 0
      %1716 = vmatmul.mubr.bf16.gmra.mrb[0].mxu0 %v1628
      %v1717 = vpop.f32.mrb[0].mxu0
      %v1718 = vadd.f32 0.0, %v1717
      %v1719 = vpop.f32.mrb[0].mxu0
      %v1720 = vpop.f32.mrb[0].mxu0
      %v1721 = vadd.f32 0.0, %v1720
      %v1722 = vpop.f32.mrb[0].mxu0
      %1723 = vmatprep.mubr.bf16.mxu0 0
      %1724 = vmatmul.mubr.bf16.gmra.mrb[0].mxu0 %v1631
      %v1725 = vpop.f32.mrb[0].mxu0
      %v1726 = vadd.f32 0.0, %v1725
      %v1727 = vpop.f32.mrb[0].mxu0
      %v1728 = vpop.f32.mrb[0].mxu0
      %v1729 = vadd.f32 0.0, %v1728
      %v1730 = vpop.f32.mrb[0].mxu0
      %1731 = vmatprep.mubr.bf16.mxu0 0
      %1732 = vmatmul.mubr.bf16.gmra.mrb[0].mxu0 %v1634
      %v1733 = vpop.f32.mrb[0].mxu0
      %v1734 = vadd.f32 0.0, %v1733
      %v1735 = vpop.f32.mrb[0].mxu0
      %v1736 = vpop.f32.mrb[0].mxu0
      %v1737 = vadd.f32 0.0, %v1736
      %v1738 = vpop.f32.mrb[0].mxu0
      %1739 = vmatprep.mubr.bf16.mxu0 0
      %1740 = vmatmul.mubr.bf16.gmra.mrb[0].mxu0 %v1637
      %v1741 = vpop.f32.mrb[0].mxu0
      %v1742 = vadd.f32 0.0, %v1741
      %v1743 = vpop.f32.mrb[0].mxu0
      %v1744 = vpop.f32.mrb[0].mxu0
      %v1745 = vadd.f32 0.0, %v1744
      %v1746 = vpop.f32.mrb[0].mxu0
      %1747 = vmatprep.mubr.bf16.mxu0 0
      %1748 = vmatmul.mubr.bf16.gmra.mrb[0].mxu0 %v1640
      %v1749 = vpop.f32.mrb[0].mxu0
      %v1750 = vadd.f32 0.0, %v1749
      %v1751 = vpop.f32.mrb[0].mxu0
      %v1752 = vpop.f32.mrb[0].mxu0
      %v1753 = vadd.f32 0.0, %v1752
      %v1754 = vpop.f32.mrb[0].mxu0
      %1755 = vmatprep.mubr.bf16.mxu0 0
      %1756 = vmatmul.mubr.bf16.gmra.mrb[0].mxu0 %v1643
      %v1757 = vpop.f32.mrb[0].mxu0
      %v1758 = vadd.f32 0.0, %v1757
      %v1759 = vpop.f32.mrb[0].mxu0
      %v1760 = vpop.f32.mrb[0].mxu0
      %v1761 = vadd.f32 0.0, %v1760
      %v1762 = vpop.f32.mrb[0].mxu0
      %1763 = vmatprep.mubr.bf16.mxu0 0
      %1764 = vmatmul.mubr.bf16.gmra.mrb[0].mxu0 %v1646
      %v1765 = vpop.f32.mrb[0].mxu0
      %v1766 = vadd.f32 0.0, %v1765
      %v1767 = vpop.f32.mrb[0].mxu0
      %v1768 = vpop.f32.mrb[0].mxu0
      %v1769 = vadd.f32 0.0, %v1768
      %v1770 = vpop.f32.mrb[0].mxu0
      %1771 = vmatprep.mubr.bf16.mxu0 0
      %1772 = vmatmul.mubr.bf16.gmra.mrb[0].mxu0 %v1649
      %v1773 = vpop.f32.mrb[0].mxu0
      %v1774 = vadd.f32 0.0, %v1773
      %v1775 = vpop.f32.mrb[0].mxu0
      %v1776 = vpop.f32.mrb[0].mxu0
      %v1777 = vadd.f32 0.0, %v1776
      %v1778 = vpop.f32.mrb[0].mxu0
      %1779 = vmatprep.mubr.bf16.mxu0 0
      %1780 = vmatmul.mubr.bf16.gmra.mrb[0].mxu0 %v1652
      %v1781 = vpop.f32.mrb[0].mxu0
      %v1782 = vadd.f32 0.0, %v1781
      %v1783 = vpop.f32.mrb[0].mxu0
      %v1784 = vpop.f32.mrb[0].mxu0
      %v1785 = vadd.f32 0.0, %v1784
      %v1786 = vpop.f32.mrb[0].mxu0
      %1787 = vmatprep.mubr.bf16.mxu0 0
      %1788 = vmatmul.mubr.bf16.gmra.mrb[0].mxu0 %v1655
      %v1789 = vpop.f32.mrb[0].mxu0
      %v1790 = vadd.f32 0.0, %v1789
      %v1791 = vpop.f32.mrb[0].mxu0
      %v1792 = vpop.f32.mrb[0].mxu0
      %v1793 = vadd.f32 0.0, %v1792
      %v1794 = vpop.f32.mrb[0].mxu0
      %1795 = vmatprep.mubr.bf16.mxu0 0
      %1796 = vmatmul.mubr.bf16.gmra.mrb[0].mxu0 %v1658
      %v1797 = vpop.f32.mrb[0].mxu0
      %v1798 = vadd.f32 0.0, %v1797
      %v1799 = vpop.f32.mrb[0].mxu0
      %v1800 = vpop.f32.mrb[0].mxu0
      %v1801 = vadd.f32 0.0, %v1800
      %v1802 = vpop.f32.mrb[0].mxu0
      %1803 = vmatprep.mubr.bf16.mxu0 0
      %1804 = vmatmul.mubr.bf16.gmra.mrb[0].mxu0 %v1661
      %v1805 = vpop.f32.mrb[0].mxu0
      %v1806 = vadd.f32 0.0, %v1805
      %v1807 = vpop.f32.mrb[0].mxu0
      %v1808 = vpop.f32.mrb[0].mxu0
      %v1809 = vadd.f32 0.0, %v1808
      %v1810 = vpop.f32.mrb[0].mxu0
      %1811 = vmatprep.mubr.bf16.mxu0 0
      %1812 = vmatmul.mubr.bf16.gmra.mrb[0].mxu0 %v1664
      %v1813 = vpop.f32.mrb[0].mxu0
      %v1814 = vadd.f32 0.0, %v1813
      %v1815 = vpop.f32.mrb[0].mxu0
      %v1816 = vpop.f32.mrb[0].mxu0
      %v1817 = vadd.f32 0.0, %v1816
      %v1818 = vpop.f32.mrb[0].mxu0
      %1819 = vmatprep.mubr.bf16.mxu0 0
      %1820 = vmatmul.mubr.bf16.gmra.mrb[0].mxu0 %v1667
      %v1821 = vpop.f32.mrb[0].mxu0
      %v1822 = vadd.f32 0.0, %v1821
      %v1823 = vpop.f32.mrb[0].mxu0
      %v1824 = vpop.f32.mrb[0].mxu0
      %v1825 = vadd.f32 0.0, %v1824
      %v1826 = vpop.f32.mrb[0].mxu0
      %1827 = vmatprep.mubr.bf16.mxu0 0
      %1828 = vmatmul.mubr.bf16.gmra.mrb[0].mxu0 %v1670
      %v1829 = vpop.f32.mrb[0].mxu0
      %v1830 = vadd.f32 0.0, %v1829
      %v1831 = vpop.f32.mrb[0].mxu0
      %v1832 = vpop.f32.mrb[0].mxu0
      %v1833 = vadd.f32 0.0, %v1832
      %v1834 = vpop.f32.mrb[0].mxu0
      %1835 = vdwg.mxu0
      %v1839 = vunpack.c.l.b16 %v1368
      %v1840 = vunpack.c.l.b16 %v1369
      %v1841 = vunpack.c.l.b16 %v1400
      %v1842 = vpack.c.b16 %v1840, %v1839
      %v1843 = vpack.c.b16 %v1841, %v1841
      %v1845 = vshrl.u32 %v1842, 16
      %v1847 = vshll.u32 %v1842, 16
      %v1849 = vrot.slane %v1847, 1
      %v1850 = vor.u32 %v1845, %v1849
      %v1851 = vsel %vm1491, %v1850, %v1497
      %v1853 = vshll.u32 %v1843, 16
      %v1855 = vrot.slane %v1853, 1
      %v1856 = vsel %vm1491, %v1610, %v1855
      %v1858 = vsel %vm368, %v1851, 0
      %v1861 = vsel %vm368, %v1856, 0
      %v1864 = vsel %vm417, %v1402, 0
      %1866 = vmatprep.subr.bf16.mxu0 0
      %1867 = vmatpush1.bf16.msra.mxu0 %v1864
      %1868 = vmatprep.subr.bf16.mxu0 0
      %1869 = vmatpush1.bf16.msra.mxu0 0
      %1870 = vmatprep.subr.bf16.mxu0 0
      %1871 = vmatpush1.bf16.msra.mxu0 0
      %1872 = vmatprep.subr.bf16.mxu0 0
      %1873 = vmatpush1.bf16.msra.mxu0 0
      %1874 = vmatprep.subr.bf16.mxu0 0
      %1875 = vmatpush1.bf16.msra.mxu0 0
      %1876 = vmatprep.subr.bf16.mxu0 0
      %1877 = vmatpush1.bf16.msra.mxu0 0
      %1878 = vmatprep.subr.bf16.mxu0 0
      %1879 = vmatpush1.bf16.msra.mxu0 0
      %1880 = vmatprep.subr.bf16.mxu0 0
      %1881 = vmatpush1.bf16.msra.mxu0 0
      %1882 = vmatprep.subr.bf16.mxu0 0
      %1883 = vmatpush1.bf16.msra.mxu0 0
      %1884 = vmatprep.subr.bf16.mxu0 0
      %1885 = vmatpush1.bf16.msra.mxu0 0
      %1886 = vmatprep.subr.bf16.mxu0 0
      %1887 = vmatpush1.bf16.msra.mxu0 0
      %1888 = vmatprep.subr.bf16.mxu0 0
      %1889 = vmatpush1.bf16.msra.mxu0 0
      %1890 = vmatprep.subr.bf16.mxu0 0
      %1891 = vmatpush1.bf16.msra.mxu0 0
      %1892 = vmatprep.subr.bf16.mxu0 0
      %1893 = vmatpush1.bf16.msra.mxu0 0
      %1894 = vmatprep.subr.bf16.mxu0 0
      %1895 = vmatpush1.bf16.msra.mxu0 0
      %1896 = vmatprep.subr.bf16.mxu0 0
      %1897 = vmatpush1.bf16.msra.mxu0 0
      %1898 = vmatprep.mubr.bf16.mxu0 0
      %1899 = vmatmul.mubr.bf16.gmra.mrb[0].mxu0 %v1858
      %v1900 = vpop.f32.mrb[0].mxu0
      %v1901 = vadd.f32 %v1710, %v1900
      %v1902 = vpop.f32.mrb[0].mxu0
      %v1903 = vpop.f32.mrb[0].mxu0
      %v1904 = vadd.f32 %v1713, %v1903
      %v1905 = vpop.f32.mrb[0].mxu0
      %1906 = vmatprep.mubr.bf16.mxu0 0
      %1907 = vmatmul.mubr.bf16.gmra.mrb[0].mxu0 %v1625
      %v1908 = vpop.f32.mrb[0].mxu0
      %v1909 = vadd.f32 %v1718, %v1908
      %v1910 = vpop.f32.mrb[0].mxu0
      %v1911 = vpop.f32.mrb[0].mxu0
      %v1912 = vadd.f32 %v1721, %v1911
      %v1913 = vpop.f32.mrb[0].mxu0
      %1914 = vmatprep.mubr.bf16.mxu0 0
      %1915 = vmatmul.mubr.bf16.gmra.mrb[0].mxu0 %v1628
      %v1916 = vpop.f32.mrb[0].mxu0
      %v1917 = vadd.f32 %v1726, %v1916
      %v1918 = vpop.f32.mrb[0].mxu0
      %v1919 = vpop.f32.mrb[0].mxu0
      %v1920 = vadd.f32 %v1729, %v1919
      %v1921 = vpop.f32.mrb[0].mxu0
      %1922 = vmatprep.mubr.bf16.mxu0 0
      %1923 = vmatmul.mubr.bf16.gmra.mrb[0].mxu0 %v1631
      %v1924 = vpop.f32.mrb[0].mxu0
      %v1925 = vadd.f32 %v1734, %v1924
      %v1926 = vpop.f32.mrb[0].mxu0
      %v1927 = vpop.f32.mrb[0].mxu0
      %v1928 = vadd.f32 %v1737, %v1927
      %v1929 = vpop.f32.mrb[0].mxu0
      %1930 = vmatprep.mubr.bf16.mxu0 0
      %1931 = vmatmul.mubr.bf16.gmra.mrb[0].mxu0 %v1634
      %v1932 = vpop.f32.mrb[0].mxu0
      %v1933 = vadd.f32 %v1742, %v1932
      %v1934 = vpop.f32.mrb[0].mxu0
      %v1935 = vpop.f32.mrb[0].mxu0
      %v1936 = vadd.f32 %v1745, %v1935
      %v1937 = vpop.f32.mrb[0].mxu0
      %1938 = vmatprep.mubr.bf16.mxu0 0
      %1939 = vmatmul.mubr.bf16.gmra.mrb[0].mxu0 %v1637
      %v1940 = vpop.f32.mrb[0].mxu0
      %v1941 = vadd.f32 %v1750, %v1940
      %v1942 = vpop.f32.mrb[0].mxu0
      %v1943 = vpop.f32.mrb[0].mxu0
      %v1944 = vadd.f32 %v1753, %v1943
      %v1945 = vpop.f32.mrb[0].mxu0
      %1946 = vmatprep.mubr.bf16.mxu0 0
      %1947 = vmatmul.mubr.bf16.gmra.mrb[0].mxu0 %v1640
      %v1948 = vpop.f32.mrb[0].mxu0
      %v1949 = vadd.f32 %v1758, %v1948
      %v1950 = vpop.f32.mrb[0].mxu0
      %v1951 = vpop.f32.mrb[0].mxu0
      %v1952 = vadd.f32 %v1761, %v1951
      %v1953 = vpop.f32.mrb[0].mxu0
      %1954 = vmatprep.mubr.bf16.mxu0 0
      %1955 = vmatmul.mubr.bf16.gmra.mrb[0].mxu0 %v1643
      %v1956 = vpop.f32.mrb[0].mxu0
      %v1957 = vadd.f32 %v1766, %v1956
      %v1958 = vpop.f32.mrb[0].mxu0
      %v1959 = vpop.f32.mrb[0].mxu0
      %v1960 = vadd.f32 %v1769, %v1959
      %v1961 = vpop.f32.mrb[0].mxu0
      %1962 = vmatprep.mubr.bf16.mxu0 0
      %1963 = vmatmul.mubr.bf16.gmra.mrb[0].mxu0 %v1646
      %v1964 = vpop.f32.mrb[0].mxu0
      %v1965 = vadd.f32 %v1774, %v1964
      %v1966 = vpop.f32.mrb[0].mxu0
      %v1967 = vpop.f32.mrb[0].mxu0
      %v1968 = vadd.f32 %v1777, %v1967
      %v1969 = vpop.f32.mrb[0].mxu0
      %1970 = vmatprep.mubr.bf16.mxu0 0
      %1971 = vmatmul.mubr.bf16.gmra.mrb[0].mxu0 %v1649
      %v1972 = vpop.f32.mrb[0].mxu0
      %v1973 = vadd.f32 %v1782, %v1972
      %v1974 = vpop.f32.mrb[0].mxu0
      %v1975 = vpop.f32.mrb[0].mxu0
      %v1976 = vadd.f32 %v1785, %v1975
      %v1977 = vpop.f32.mrb[0].mxu0
      %1978 = vmatprep.mubr.bf16.mxu0 0
      %1979 = vmatmul.mubr.bf16.gmra.mrb[0].mxu0 %v1652
      %v1980 = vpop.f32.mrb[0].mxu0
      %v1981 = vadd.f32 %v1790, %v1980
      %v1982 = vpop.f32.mrb[0].mxu0
      %v1983 = vpop.f32.mrb[0].mxu0
      %v1984 = vadd.f32 %v1793, %v1983
      %v1985 = vpop.f32.mrb[0].mxu0
      %1986 = vmatprep.mubr.bf16.mxu0 0
      %1987 = vmatmul.mubr.bf16.gmra.mrb[0].mxu0 %v1655
      %v1988 = vpop.f32.mrb[0].mxu0
      %v1989 = vadd.f32 %v1798, %v1988
      %v1990 = vpop.f32.mrb[0].mxu0
      %v1991 = vpop.f32.mrb[0].mxu0
      %v1992 = vadd.f32 %v1801, %v1991
      %v1993 = vpop.f32.mrb[0].mxu0
      %1994 = vmatprep.mubr.bf16.mxu0 0
      %1995 = vmatmul.mubr.bf16.gmra.mrb[0].mxu0 %v1658
      %v1996 = vpop.f32.mrb[0].mxu0
      %v1997 = vadd.f32 %v1806, %v1996
      %v1998 = vpop.f32.mrb[0].mxu0
      %v1999 = vpop.f32.mrb[0].mxu0
      %v2000 = vadd.f32 %v1809, %v1999
      %v2001 = vpop.f32.mrb[0].mxu0
      %2002 = vmatprep.mubr.bf16.mxu0 0
      %2003 = vmatmul.mubr.bf16.gmra.mrb[0].mxu0 %v1661
      %v2004 = vpop.f32.mrb[0].mxu0
      %v2005 = vadd.f32 %v1814, %v2004
      %v2006 = vpop.f32.mrb[0].mxu0
      %v2007 = vpop.f32.mrb[0].mxu0
      %v2008 = vadd.f32 %v1817, %v2007
      %v2009 = vpop.f32.mrb[0].mxu0
      %2010 = vmatprep.mubr.bf16.mxu0 0
      %2011 = vmatmul.mubr.bf16.gmra.mrb[0].mxu0 %v1664
      %v2012 = vpop.f32.mrb[0].mxu0
      %v2013 = vadd.f32 %v1822, %v2012
      %v2014 = vpop.f32.mrb[0].mxu0
      %v2015 = vpop.f32.mrb[0].mxu0
      %v2016 = vadd.f32 %v1825, %v2015
      %v2017 = vpop.f32.mrb[0].mxu0
      %2018 = vmatprep.mubr.bf16.mxu0 0
      %2019 = vmatmul.mubr.bf16.gmra.mrb[0].mxu0 %v1861
      %v2020 = vpop.f32.mrb[0].mxu0
      %v2021 = vadd.f32 %v1830, %v2020
      %v2022 = vpop.f32.mrb[0].mxu0
      %v2023 = vpop.f32.mrb[0].mxu0
      %v2024 = vadd.f32 %v1833, %v2023
      %v2025 = vpop.f32.mrb[0].mxu0
      %2026 = vdwg.mxu0
      %v2027 = vld [vmem:[%s245 + $0x10] sm:$0xf]
      %v2028 = vld [vmem:[%s245 + $0x14] sm:$0xf]
      %v2029 = vld [vmem:[%s245 + $0x18] sm:$0xf]
      %v2030 = vld [vmem:[%s245 + $0x1c] sm:$0xf]
      %v2031 = vld [vmem:[%s245 + $0x20] sm:$0xf]
      %v2032 = vld [vmem:[%s245 + $0x24] sm:$0xf]
      %v2033 = vld [vmem:[%s245 + $0x28] sm:$0xf]
      %v2034 = vld [vmem:[%s245 + $0x2c] sm:$0xf]
      %v2035 = vld [vmem:[%s245 + $0x30] sm:$0xf]
      %v2036 = vld [vmem:[%s245 + $0x34] sm:$0xf]
      %v2037 = vld [vmem:[%s245 + $0x38] sm:$0xf]
      %v2038 = vld [vmem:[%s245 + $0x3c] sm:$0xf]
      %v2039 = vld [vmem:[%s245 + $0x40] sm:$0xf]
      %v2040 = vld [vmem:[%s245 + $0x44] sm:$0xf]
      %v2041 = vld [vmem:[%s245 + $0x48] sm:$0xf]
      %v2042 = vld [vmem:[%s245 + $0x4c] sm:$0xf]
      %v2043 = vld [vmem:[%s245 + $0x50] sm:$0xf]
      %v2044 = vld [vmem:[%s245 + $0x54] sm:$0xf]
      %v2045 = vld [vmem:[%s245 + $0x58] sm:$0xf]
      %v2046 = vld [vmem:[%s245 + $0x5c] sm:$0xf]
      %v2047 = vld [vmem:[%s245 + $0x60] sm:$0xf]
      %v2048 = vld [vmem:[%s245 + $0x64] sm:$0xf]
      %v2049 = vld [vmem:[%s245 + $0x68] sm:$0xf]
      %v2050 = vld [vmem:[%s245 + $0x6c] sm:$0xf]
      %v2051 = vld [vmem:[%s245 + $0x70] sm:$0xf]
      %v2052 = vld [vmem:[%s245 + $0x74] sm:$0xf]
      %v2053 = vld [vmem:[%s245 + $0x78] sm:$0xf]
      %v2054 = vld [vmem:[%s245 + $0x7c] sm:$0xf]
      %v2055 = vld [vmem:[%s245 + $0x80] sm:$0xf]
      %v2056 = vld [vmem:[%s245 + $0x84] sm:$0xf]
      %v2057 = vld [vmem:[%s245 + $0x88] sm:$0xf]
      %v2058 = vld [vmem:[%s245 + $0x8c] sm:$0xf]
      %v2059 = vld [vmem:[%s245 + $0x90] sm:$0x1]
      %s2060 = scalar_lea.vmem %s2, 14
      %v2061 = vld [vmem:[%s2060] sm:$0x3]
      %v2095 = vunpack.c.l.b16 %v2027
      %v2096 = vunpack.c.l.b16 %v2028
      %v2097 = vunpack.c.l.b16 %v2029
      %v2098 = vunpack.c.l.b16 %v2030
      %v2099 = vunpack.c.l.b16 %v2031
      %v2100 = vunpack.c.l.b16 %v2032
      %v2101 = vunpack.c.l.b16 %v2033
      %v2102 = vunpack.c.l.b16 %v2034
      %v2103 = vunpack.c.l.b16 %v2035
      %v2104 = vunpack.c.l.b16 %v2036
      %v2105 = vunpack.c.l.b16 %v2037
      %v2106 = vunpack.c.l.b16 %v2038
      %v2107 = vunpack.c.l.b16 %v2039
      %v2108 = vunpack.c.l.b16 %v2040
      %v2109 = vunpack.c.l.b16 %v2041
      %v2110 = vunpack.c.l.b16 %v2042
      %v2111 = vunpack.c.l.b16 %v2043
      %v2112 = vunpack.c.l.b16 %v2044
      %v2113 = vunpack.c.l.b16 %v2045
      %v2114 = vunpack.c.l.b16 %v2046
      %v2115 = vunpack.c.l.b16 %v2047
      %v2116 = vunpack.c.l.b16 %v2048
      %v2117 = vunpack.c.l.b16 %v2049
      %v2118 = vunpack.c.l.b16 %v2050
      %v2119 = vunpack.c.l.b16 %v2051
      %v2120 = vunpack.c.l.b16 %v2052
      %v2121 = vunpack.c.l.b16 %v2053
      %v2122 = vunpack.c.l.b16 %v2054
      %v2123 = vunpack.c.l.b16 %v2055
      %v2124 = vunpack.c.l.b16 %v2056
      %v2125 = vunpack.c.l.b16 %v2057
      %v2126 = vunpack.c.l.b16 %v2058
      %v2127 = vunpack.c.l.b16 %v2059
      %v2128 = vpack.c.b16 %v2096, %v2095
      %v2129 = vpack.c.b16 %v2098, %v2097
      %v2130 = vpack.c.b16 %v2100, %v2099
      %v2131 = vpack.c.b16 %v2102, %v2101
      %v2132 = vpack.c.b16 %v2104, %v2103
      %v2133 = vpack.c.b16 %v2106, %v2105
      %v2134 = vpack.c.b16 %v2108, %v2107
      %v2135 = vpack.c.b16 %v2110, %v2109
      %v2136 = vpack.c.b16 %v2112, %v2111
      %v2137 = vpack.c.b16 %v2114, %v2113
      %v2138 = vpack.c.b16 %v2116, %v2115
      %v2139 = vpack.c.b16 %v2118, %v2117
      %v2140 = vpack.c.b16 %v2120, %v2119
      %v2141 = vpack.c.b16 %v2122, %v2121
      %v2142 = vpack.c.b16 %v2124, %v2123
      %v2143 = vpack.c.b16 %v2126, %v2125
      %v2144 = vpack.c.b16 %v2127, %v2127
      %v2146 = vshrl.u32 %v2128, 16
      %v2148 = vshll.u32 %v2128, 16
      %v2150 = vrot.slane %v2148, 1
      %v2151 = vor.u32 %v2146, %v2150
      %v2153 = vshll.u32 %v2129, 16
      %v2155 = vrot.slane %v2153, 1
      %v2156 = vsel %vm1491, %v2151, %v2155
      %v2157 = vshrl.u32 %v2129, 16
      %v2159 = vor.u32 %v2157, %v2155
      %v2161 = vshll.u32 %v2130, 16
      %v2163 = vrot.slane %v2161, 1
      %v2164 = vsel %vm1491, %v2159, %v2163
      %v2165 = vshrl.u32 %v2130, 16
      %v2167 = vor.u32 %v2165, %v2163
      %v2169 = vshll.u32 %v2131, 16
      %v2171 = vrot.slane %v2169, 1
      %v2172 = vsel %vm1491, %v2167, %v2171
      %v2173 = vshrl.u32 %v2131, 16
      %v2175 = vor.u32 %v2173, %v2171
      %v2177 = vshll.u32 %v2132, 16
      %v2179 = vrot.slane %v2177, 1
      %v2180 = vsel %vm1491, %v2175, %v2179
      %v2181 = vshrl.u32 %v2132, 16
      %v2183 = vor.u32 %v2181, %v2179
      %v2185 = vshll.u32 %v2133, 16
      %v2187 = vrot.slane %v2185, 1
      %v2188 = vsel %vm1491, %v2183, %v2187
      %v2189 = vshrl.u32 %v2133, 16
      %v2191 = vor.u32 %v2189, %v2187
      %v2193 = vshll.u32 %v2134, 16
      %v2195 = vrot.slane %v2193, 1
      %v2196 = vsel %vm1491, %v2191, %v2195
      %v2197 = vshrl.u32 %v2134, 16
      %v2199 = vor.u32 %v2197, %v2195
      %v2201 = vshll.u32 %v2135, 16
      %v2203 = vrot.slane %v2201, 1
      %v2204 = vsel %vm1491, %v2199, %v2203
      %v2205 = vshrl.u32 %v2135, 16
      %v2207 = vor.u32 %v2205, %v2203
      %v2209 = vshll.u32 %v2136, 16
      %v2211 = vrot.slane %v2209, 1
      %v2212 = vsel %vm1491, %v2207, %v2211
      %v2213 = vshrl.u32 %v2136, 16
      %v2215 = vor.u32 %v2213, %v2211
      %v2217 = vshll.u32 %v2137, 16
      %v2219 = vrot.slane %v2217, 1
      %v2220 = vsel %vm1491, %v2215, %v2219
      %v2221 = vshrl.u32 %v2137, 16
      %v2223 = vor.u32 %v2221, %v2219
      %v2225 = vshll.u32 %v2138, 16
      %v2227 = vrot.slane %v2225, 1
      %v2228 = vsel %vm1491, %v2223, %v2227
      %v2229 = vshrl.u32 %v2138, 16
      %v2231 = vor.u32 %v2229, %v2227
      %v2233 = vshll.u32 %v2139, 16
      %v2235 = vrot.slane %v2233, 1
      %v2236 = vsel %vm1491, %v2231, %v2235
      %v2237 = vshrl.u32 %v2139, 16
      %v2239 = vor.u32 %v2237, %v2235
      %v2241 = vshll.u32 %v2140, 16
      %v2243 = vrot.slane %v2241, 1
      %v2244 = vsel %vm1491, %v2239, %v2243
      %v2245 = vshrl.u32 %v2140, 16
      %v2247 = vor.u32 %v2245, %v2243
      %v2249 = vshll.u32 %v2141, 16
      %v2251 = vrot.slane %v2249, 1
      %v2252 = vsel %vm1491, %v2247, %v2251
      %v2253 = vshrl.u32 %v2141, 16
      %v2255 = vor.u32 %v2253, %v2251
      %v2257 = vshll.u32 %v2142, 16
      %v2259 = vrot.slane %v2257, 1
      %v2260 = vsel %vm1491, %v2255, %v2259
      %v2261 = vshrl.u32 %v2142, 16
      %v2263 = vor.u32 %v2261, %v2259
      %v2265 = vshll.u32 %v2143, 16
      %v2267 = vrot.slane %v2265, 1
      %v2268 = vsel %vm1491, %v2263, %v2267
      %v2269 = vshrl.u32 %v2143, 16
      %v2271 = vor.u32 %v2269, %v2267
      %v2273 = vshll.u32 %v2144, 16
      %v2275 = vrot.slane %v2273, 1
      %v2276 = vsel %vm1491, %v2271, %v2275
      %v2278 = vsel %vm368, %v2156, 0
      %v2281 = vsel %vm368, %v2164, 0
      %v2284 = vsel %vm368, %v2172, 0
      %v2287 = vsel %vm368, %v2180, 0
      %v2290 = vsel %vm368, %v2188, 0
      %v2293 = vsel %vm368, %v2196, 0
      %v2296 = vsel %vm368, %v2204, 0
      %v2299 = vsel %vm368, %v2212, 0
      %v2302 = vsel %vm368, %v2220, 0
      %v2305 = vsel %vm368, %v2228, 0
      %v2308 = vsel %vm368, %v2236, 0
      %v2311 = vsel %vm368, %v2244, 0
      %v2314 = vsel %vm368, %v2252, 0
      %v2317 = vsel %vm368, %v2260, 0
      %v2320 = vsel %vm368, %v2268, 0
      %v2323 = vsel %vm368, %v2276, 0
      %v2326 = vsel %vm417, %v2061, 0
      %2328 = vmatprep.subr.bf16.mxu0 0
      %2329 = vmatpush1.bf16.msra.mxu0 %v2326
      %2330 = vmatprep.subr.bf16.mxu0 0
      %2331 = vmatpush1.bf16.msra.mxu0 0
      %2332 = vmatprep.subr.bf16.mxu0 0
      %2333 = vmatpush1.bf16.msra.mxu0 0
      %2334 = vmatprep.subr.bf16.mxu0 0
      %2335 = vmatpush1.bf16.msra.mxu0 0
      %2336 = vmatprep.subr.bf16.mxu0 0
      %2337 = vmatpush1.bf16.msra.mxu0 0
      %2338 = vmatprep.subr.bf16.mxu0 0
      %2339 = vmatpush1.bf16.msra.mxu0 0
      %2340 = vmatprep.subr.bf16.mxu0 0
      %2341 = vmatpush1.bf16.msra.mxu0 0
      %2342 = vmatprep.subr.bf16.mxu0 0
      %2343 = vmatpush1.bf16.msra.mxu0 0
      %2344 = vmatprep.subr.bf16.mxu0 0
      %2345 = vmatpush1.bf16.msra.mxu0 0
      %2346 = vmatprep.subr.bf16.mxu0 0
      %2347 = vmatpush1.bf16.msra.mxu0 0
      %2348 = vmatprep.subr.bf16.mxu0 0
      %2349 = vmatpush1.bf16.msra.mxu0 0
      %2350 = vmatprep.subr.bf16.mxu0 0
      %2351 = vmatpush1.bf16.msra.mxu0 0
      %2352 = vmatprep.subr.bf16.mxu0 0
      %2353 = vmatpush1.bf16.msra.mxu0 0
      %2354 = vmatprep.subr.bf16.mxu0 0
      %2355 = vmatpush1.bf16.msra.mxu0 0
      %2356 = vmatprep.subr.bf16.mxu0 0
      %2357 = vmatpush1.bf16.msra.mxu0 0
      %2358 = vmatprep.subr.bf16.mxu0 0
      %2359 = vmatpush1.bf16.msra.mxu0 0
      %2360 = vmatprep.mubr.bf16.mxu0 0
      %2361 = vmatmul.mubr.bf16.gmra.mrb[0].mxu0 %v2278
      %v2362 = vpop.f32.mrb[0].mxu0
      %v2363 = vadd.f32 0.0, %v2362
      %v2364 = vpop.f32.mrb[0].mxu0
      %v2365 = vpop.f32.mrb[0].mxu0
      %v2366 = vadd.f32 0.0, %v2365
      %v2367 = vpop.f32.mrb[0].mxu0
      %2368 = vmatprep.mubr.bf16.mxu0 0
      %2369 = vmatmul.mubr.bf16.gmra.mrb[0].mxu0 %v2281
      %v2370 = vpop.f32.mrb[0].mxu0
      %v2371 = vadd.f32 0.0, %v2370
      %v2372 = vpop.f32.mrb[0].mxu0
      %v2373 = vpop.f32.mrb[0].mxu0
      %v2374 = vadd.f32 0.0, %v2373
      %v2375 = vpop.f32.mrb[0].mxu0
      %2376 = vmatprep.mubr.bf16.mxu0 0
      %2377 = vmatmul.mubr.bf16.gmra.mrb[0].mxu0 %v2284
      %v2378 = vpop.f32.mrb[0].mxu0
      %v2379 = vadd.f32 0.0, %v2378
      %v2380 = vpop.f32.mrb[0].mxu0
      %v2381 = vpop.f32.mrb[0].mxu0
      %v2382 = vadd.f32 0.0, %v2381
      %v2383 = vpop.f32.mrb[0].mxu0
      %2384 = vmatprep.mubr.bf16.mxu0 0
      %2385 = vmatmul.mubr.bf16.gmra.mrb[0].mxu0 %v2287
      %v2386 = vpop.f32.mrb[0].mxu0
      %v2387 = vadd.f32 0.0, %v2386
      %v2388 = vpop.f32.mrb[0].mxu0
      %v2389 = vpop.f32.mrb[0].mxu0
      %v2390 = vadd.f32 0.0, %v2389
      %v2391 = vpop.f32.mrb[0].mxu0
      %2392 = vmatprep.mubr.bf16.mxu0 0
      %2393 = vmatmul.mubr.bf16.gmra.mrb[0].mxu0 %v2290
      %v2394 = vpop.f32.mrb[0].mxu0
      %v2395 = vadd.f32 0.0, %v2394
      %v2396 = vpop.f32.mrb[0].mxu0
      %v2397 = vpop.f32.mrb[0].mxu0
      %v2398 = vadd.f32 0.0, %v2397
      %v2399 = vpop.f32.mrb[0].mxu0
      %2400 = vmatprep.mubr.bf16.mxu0 0
      %2401 = vmatmul.mubr.bf16.gmra.mrb[0].mxu0 %v2293
      %v2402 = vpop.f32.mrb[0].mxu0
      %v2403 = vadd.f32 0.0, %v2402
      %v2404 = vpop.f32.mrb[0].mxu0
      %v2405 = vpop.f32.mrb[0].mxu0
      %v2406 = vadd.f32 0.0, %v2405
      %v2407 = vpop.f32.mrb[0].mxu0
      %2408 = vmatprep.mubr.bf16.mxu0 0
      %2409 = vmatmul.mubr.bf16.gmra.mrb[0].mxu0 %v2296
      %v2410 = vpop.f32.mrb[0].mxu0
      %v2411 = vadd.f32 0.0, %v2410
      %v2412 = vpop.f32.mrb[0].mxu0
      %v2413 = vpop.f32.mrb[0].mxu0
      %v2414 = vadd.f32 0.0, %v2413
      %v2415 = vpop.f32.mrb[0].mxu0
      %2416 = vmatprep.mubr.bf16.mxu0 0
      %2417 = vmatmul.mubr.bf16.gmra.mrb[0].mxu0 %v2299
      %v2418 = vpop.f32.mrb[0].mxu0
      %v2419 = vadd.f32 0.0, %v2418
      %v2420 = vpop.f32.mrb[0].mxu0
      %v2421 = vpop.f32.mrb[0].mxu0
      %v2422 = vadd.f32 0.0, %v2421
      %v2423 = vpop.f32.mrb[0].mxu0
      %2424 = vmatprep.mubr.bf16.mxu0 0
      %2425 = vmatmul.mubr.bf16.gmra.mrb[0].mxu0 %v2302
      %v2426 = vpop.f32.mrb[0].mxu0
      %v2427 = vadd.f32 0.0, %v2426
      %v2428 = vpop.f32.mrb[0].mxu0
      %v2429 = vpop.f32.mrb[0].mxu0
      %v2430 = vadd.f32 0.0, %v2429
      %v2431 = vpop.f32.mrb[0].mxu0
      %2432 = vmatprep.mubr.bf16.mxu0 0
      %2433 = vmatmul.mubr.bf16.gmra.mrb[0].mxu0 %v2305
      %v2434 = vpop.f32.mrb[0].mxu0
      %v2435 = vadd.f32 0.0, %v2434
      %v2436 = vpop.f32.mrb[0].mxu0
      %v2437 = vpop.f32.mrb[0].mxu0
      %v2438 = vadd.f32 0.0, %v2437
      %v2439 = vpop.f32.mrb[0].mxu0
      %2440 = vmatprep.mubr.bf16.mxu0 0
      %2441 = vmatmul.mubr.bf16.gmra.mrb[0].mxu0 %v2308
      %v2442 = vpop.f32.mrb[0].mxu0
      %v2443 = vadd.f32 0.0, %v2442
      %v2444 = vpop.f32.mrb[0].mxu0
      %v2445 = vpop.f32.mrb[0].mxu0
      %v2446 = vadd.f32 0.0, %v2445
      %v2447 = vpop.f32.mrb[0].mxu0
      %2448 = vmatprep.mubr.bf16.mxu0 0
      %2449 = vmatmul.mubr.bf16.gmra.mrb[0].mxu0 %v2311
      %v2450 = vpop.f32.mrb[0].mxu0
      %v2451 = vadd.f32 0.0, %v2450
      %v2452 = vpop.f32.mrb[0].mxu0
      %v2453 = vpop.f32.mrb[0].mxu0
      %v2454 = vadd.f32 0.0, %v2453
      %v2455 = vpop.f32.mrb[0].mxu0
      %2456 = vmatprep.mubr.bf16.mxu0 0
      %2457 = vmatmul.mubr.bf16.gmra.mrb[0].mxu0 %v2314
      %v2458 = vpop.f32.mrb[0].mxu0
      %v2459 = vadd.f32 0.0, %v2458
      %v2460 = vpop.f32.mrb[0].mxu0
      %v2461 = vpop.f32.mrb[0].mxu0
      %v2462 = vadd.f32 0.0, %v2461
      %v2463 = vpop.f32.mrb[0].mxu0
      %2464 = vmatprep.mubr.bf16.mxu0 0
      %2465 = vmatmul.mubr.bf16.gmra.mrb[0].mxu0 %v2317
      %v2466 = vpop.f32.mrb[0].mxu0
      %v2467 = vadd.f32 0.0, %v2466
      %v2468 = vpop.f32.mrb[0].mxu0
      %v2469 = vpop.f32.mrb[0].mxu0
      %v2470 = vadd.f32 0.0, %v2469
      %v2471 = vpop.f32.mrb[0].mxu0
      %2472 = vmatprep.mubr.bf16.mxu0 0
      %2473 = vmatmul.mubr.bf16.gmra.mrb[0].mxu0 %v2320
      %v2474 = vpop.f32.mrb[0].mxu0
      %v2475 = vadd.f32 0.0, %v2474
      %v2476 = vpop.f32.mrb[0].mxu0
      %v2477 = vpop.f32.mrb[0].mxu0
      %v2478 = vadd.f32 0.0, %v2477
      %v2479 = vpop.f32.mrb[0].mxu0
      %2480 = vmatprep.mubr.bf16.mxu0 0
      %2481 = vmatmul.mubr.bf16.gmra.mrb[0].mxu0 %v2323
      %v2482 = vpop.f32.mrb[0].mxu0
      %v2483 = vadd.f32 0.0, %v2482
      %v2484 = vpop.f32.mrb[0].mxu0
      %v2485 = vpop.f32.mrb[0].mxu0
      %v2486 = vadd.f32 0.0, %v2485
      %v2487 = vpop.f32.mrb[0].mxu0
      %2488 = vdwg.mxu0
      %v2489 = vadd.f32 %v1901, %v2363
      %v2490 = vadd.f32 %v1904, %v2366
      %v2491 = vadd.f32 %v1909, %v2371
      %v2492 = vadd.f32 %v1912, %v2374
      %v2493 = vadd.f32 %v1917, %v2379
      %v2494 = vadd.f32 %v1920, %v2382
      %v2495 = vadd.f32 %v1925, %v2387
      %v2496 = vadd.f32 %v1928, %v2390
      %v2497 = vadd.f32 %v1933, %v2395
      %v2498 = vadd.f32 %v1936, %v2398
      %v2499 = vadd.f32 %v1941, %v2403
      %v2500 = vadd.f32 %v1944, %v2406
      %v2501 = vadd.f32 %v1949, %v2411
      %v2502 = vadd.f32 %v1952, %v2414
      %v2503 = vadd.f32 %v1957, %v2419
      %v2504 = vadd.f32 %v1960, %v2422
      %v2505 = vadd.f32 %v1965, %v2427
      %v2506 = vadd.f32 %v1968, %v2430
      %v2507 = vadd.f32 %v1973, %v2435
      %v2508 = vadd.f32 %v1976, %v2438
      %v2509 = vadd.f32 %v1981, %v2443
      %v2510 = vadd.f32 %v1984, %v2446
      %v2511 = vadd.f32 %v1989, %v2451
      %v2512 = vadd.f32 %v1992, %v2454
      %v2513 = vadd.f32 %v1997, %v2459
      %v2514 = vadd.f32 %v2000, %v2462
      %v2515 = vadd.f32 %v2005, %v2467
      %v2516 = vadd.f32 %v2008, %v2470
      %v2517 = vadd.f32 %v2013, %v2475
      %v2518 = vadd.f32 %v2016, %v2478
      %v2519 = vadd.f32 %v2021, %v2483
      %v2520 = vadd.f32 %v2024, %v2486
      %v2521 = vadd.f32 %v1336, %v2489
      %v2522 = vadd.f32 %v1337, %v2490
      %v2523 = vadd.f32 %v1338, %v2491
      %v2524 = vadd.f32 %v1339, %v2492
      %v2525 = vadd.f32 %v1340, %v2493
      %v2526 = vadd.f32 %v1341, %v2494
      %v2527 = vadd.f32 %v1342, %v2495
      %v2528 = vadd.f32 %v1343, %v2496
      %v2529 = vadd.f32 %v1344, %v2497
      %v2530 = vadd.f32 %v1345, %v2498
      %v2531 = vadd.f32 %v1346, %v2499
      %v2532 = vadd.f32 %v1347, %v2500
      %v2533 = vadd.f32 %v1348, %v2501
      %v2534 = vadd.f32 %v1349, %v2502
      %v2535 = vadd.f32 %v1350, %v2503
      %v2536 = vadd.f32 %v1351, %v2504
      %v2537 = vadd.f32 %v1352, %v2505
      %v2538 = vadd.f32 %v1353, %v2506
      %v2539 = vadd.f32 %v1354, %v2507
      %v2540 = vadd.f32 %v1355, %v2508
      %v2541 = vadd.f32 %v1356, %v2509
      %v2542 = vadd.f32 %v1357, %v2510
      %v2543 = vadd.f32 %v1358, %v2511
      %v2544 = vadd.f32 %v1359, %v2512
      %v2545 = vadd.f32 %v1360, %v2513
      %v2546 = vadd.f32 %v1361, %v2514
      %v2547 = vadd.f32 %v1362, %v2515
      %v2548 = vadd.f32 %v1363, %v2516
      %v2549 = vadd.f32 %v1364, %v2517
      %v2550 = vadd.f32 %v1365, %v2518
      %v2551 = vadd.f32 %v1366, %v2519
      %v2552 = vadd.f32 %v1367, %v2520
      %v2553 = vld [vmem:[%s245] sm:$0xe]
      %s2554 = scalar_lea.vmem %s2, 4
      %v2555 = vld [vmem:[%s2554] sm:$0x3]
      %v2556 = vld [vmem:[%s245 + $0x8] sm:$0xe]
      %s2557 = scalar_lea.vmem %s2, 10
      %v2558 = vld [vmem:[%s2557] sm:$0x3]
      %v2560 = vunpack.c.l.b16 %v2556
      %v2561 = vpack.c.b16 %v1442, %v2560
      %vm2562 = vcmask 1046528
      %v2563 = vrot.slane %v2561, 1
      %v2564 = vrot.slane %v1475, 1
      %v2565 = vsel %vm2562, %v2563, %v2564
      %v2566 = vrot.slane %v1476, 1
      %v2567 = vsel %vm2562, %v2564, %v2566
      %v2568 = vrot.slane %v1477, 1
      %v2569 = vsel %vm2562, %v2566, %v2568
      %v2570 = vrot.slane %v1478, 1
      %v2571 = vsel %vm2562, %v2568, %v2570
      %v2572 = vrot.slane %v1479, 1
      %v2573 = vsel %vm2562, %v2570, %v2572
      %v2574 = vrot.slane %v1480, 1
      %v2575 = vsel %vm2562, %v2572, %v2574
      %v2576 = vrot.slane %v1481, 1
      %v2577 = vsel %vm2562, %v2574, %v2576
      %v2578 = vrot.slane %v1482, 1
      %v2579 = vsel %vm2562, %v2576, %v2578
      %v2580 = vrot.slane %v1483, 1
      %v2581 = vsel %vm2562, %v2578, %v2580
      %v2582 = vrot.slane %v1484, 1
      %v2583 = vsel %vm2562, %v2580, %v2582
      %v2584 = vrot.slane %v1485, 1
      %v2585 = vsel %vm2562, %v2582, %v2584
      %v2586 = vrot.slane %v1486, 1
      %v2587 = vsel %vm2562, %v2584, %v2586
      %v2588 = vrot.slane %v1487, 1
      %v2589 = vsel %vm2562, %v2586, %v2588
      %v2590 = vrot.slane %v1488, 1
      %v2591 = vsel %vm2562, %v2588, %v2590
      %v2592 = vrot.slane %v1489, 1
      %v2593 = vsel %vm2562, %v2590, %v2592
      %v2594 = vrot.slane %v1490, 1
      %v2595 = vsel %vm2562, %v2592, %v2594
      %v2597 = vsel %vm368, %v2565, 0
      %v2600 = vsel %vm368, %v2567, 0
      %v2603 = vsel %vm368, %v2569, 0
      %v2606 = vsel %vm368, %v2571, 0
      %v2609 = vsel %vm368, %v2573, 0
      %v2612 = vsel %vm368, %v2575, 0
      %v2615 = vsel %vm368, %v2577, 0
      %v2618 = vsel %vm368, %v2579, 0
      %v2621 = vsel %vm368, %v2581, 0
      %v2624 = vsel %vm368, %v2583, 0
      %v2627 = vsel %vm368, %v2585, 0
      %v2630 = vsel %vm368, %v2587, 0
      %v2633 = vsel %vm368, %v2589, 0
      %v2636 = vsel %vm368, %v2591, 0
      %v2639 = vsel %vm368, %v2593, 0
      %v2642 = vsel %vm368, %v2595, 0
      %v2645 = vsel %vm417, %v2558, 0
      %2647 = vmatprep.subr.bf16.mxu0 0
      %2648 = vmatpush1.bf16.msra.mxu0 %v2645
      %2649 = vmatprep.subr.bf16.mxu0 0
      %2650 = vmatpush1.bf16.msra.mxu0 0
      %2651 = vmatprep.subr.bf16.mxu0 0
      %2652 = vmatpush1.bf16.msra.mxu0 0
      %2653 = vmatprep.subr.bf16.mxu0 0
      %2654 = vmatpush1.bf16.msra.mxu0 0
      %2655 = vmatprep.subr.bf16.mxu0 0
      %2656 = vmatpush1.bf16.msra.mxu0 0
      %2657 = vmatprep.subr.bf16.mxu0 0
      %2658 = vmatpush1.bf16.msra.mxu0 0
      %2659 = vmatprep.subr.bf16.mxu0 0
      %2660 = vmatpush1.bf16.msra.mxu0 0
      %2661 = vmatprep.subr.bf16.mxu0 0
      %2662 = vmatpush1.bf16.msra.mxu0 0
      %2663 = vmatprep.subr.bf16.mxu0 0
      %2664 = vmatpush1.bf16.msra.mxu0 0
      %2665 = vmatprep.subr.bf16.mxu0 0
      %2666 = vmatpush1.bf16.msra.mxu0 0
      %2667 = vmatprep.subr.bf16.mxu0 0
      %2668 = vmatpush1.bf16.msra.mxu0 0
      %2669 = vmatprep.subr.bf16.mxu0 0
      %2670 = vmatpush1.bf16.msra.mxu0 0
      %2671 = vmatprep.subr.bf16.mxu0 0
      %2672 = vmatpush1.bf16.msra.mxu0 0
      %2673 = vmatprep.subr.bf16.mxu0 0
      %2674 = vmatpush1.bf16.msra.mxu0 0
      %2675 = vmatprep.subr.bf16.mxu0 0
      %2676 = vmatpush1.bf16.msra.mxu0 0
      %2677 = vmatprep.subr.bf16.mxu0 0
      %2678 = vmatpush1.bf16.msra.mxu0 0
      %2679 = vmatprep.mubr.bf16.mxu0 0
      %2680 = vmatmul.mubr.bf16.gmra.mrb[0].mxu0 %v2597
      %v2681 = vpop.f32.mrb[0].mxu0
      %v2682 = vadd.f32 0.0, %v2681
      %v2683 = vpop.f32.mrb[0].mxu0
      %v2684 = vpop.f32.mrb[0].mxu0
      %v2685 = vadd.f32 0.0, %v2684
      %v2686 = vpop.f32.mrb[0].mxu0
      %2687 = vmatprep.mubr.bf16.mxu0 0
      %2688 = vmatmul.mubr.bf16.gmra.mrb[0].mxu0 %v2600
      %v2689 = vpop.f32.mrb[0].mxu0
      %v2690 = vadd.f32 0.0, %v2689
      %v2691 = vpop.f32.mrb[0].mxu0
      %v2692 = vpop.f32.mrb[0].mxu0
      %v2693 = vadd.f32 0.0, %v2692
      %v2694 = vpop.f32.mrb[0].mxu0
      %2695 = vmatprep.mubr.bf16.mxu0 0
      %2696 = vmatmul.mubr.bf16.gmra.mrb[0].mxu0 %v2603
      %v2697 = vpop.f32.mrb[0].mxu0
      %v2698 = vadd.f32 0.0, %v2697
      %v2699 = vpop.f32.mrb[0].mxu0
      %v2700 = vpop.f32.mrb[0].mxu0
      %v2701 = vadd.f32 0.0, %v2700
      %v2702 = vpop.f32.mrb[0].mxu0
      %2703 = vmatprep.mubr.bf16.mxu0 0
      %2704 = vmatmul.mubr.bf16.gmra.mrb[0].mxu0 %v2606
      %v2705 = vpop.f32.mrb[0].mxu0
      %v2706 = vadd.f32 0.0, %v2705
      %v2707 = vpop.f32.mrb[0].mxu0
      %v2708 = vpop.f32.mrb[0].mxu0
      %v2709 = vadd.f32 0.0, %v2708
      %v2710 = vpop.f32.mrb[0].mxu0
      %2711 = vmatprep.mubr.bf16.mxu0 0
      %2712 = vmatmul.mubr.bf16.gmra.mrb[0].mxu0 %v2609
      %v2713 = vpop.f32.mrb[0].mxu0
      %v2714 = vadd.f32 0.0, %v2713
      %v2715 = vpop.f32.mrb[0].mxu0
      %v2716 = vpop.f32.mrb[0].mxu0
      %v2717 = vadd.f32 0.0, %v2716
      %v2718 = vpop.f32.mrb[0].mxu0
      %2719 = vmatprep.mubr.bf16.mxu0 0
      %2720 = vmatmul.mubr.bf16.gmra.mrb[0].mxu0 %v2612
      %v2721 = vpop.f32.mrb[0].mxu0
      %v2722 = vadd.f32 0.0, %v2721
      %v2723 = vpop.f32.mrb[0].mxu0
      %v2724 = vpop.f32.mrb[0].mxu0
      %v2725 = vadd.f32 0.0, %v2724
      %v2726 = vpop.f32.mrb[0].mxu0
      %2727 = vmatprep.mubr.bf16.mxu0 0
      %2728 = vmatmul.mubr.bf16.gmra.mrb[0].mxu0 %v2615
      %v2729 = vpop.f32.mrb[0].mxu0
      %v2730 = vadd.f32 0.0, %v2729
      %v2731 = vpop.f32.mrb[0].mxu0
      %v2732 = vpop.f32.mrb[0].mxu0
      %v2733 = vadd.f32 0.0, %v2732
      %v2734 = vpop.f32.mrb[0].mxu0
      %2735 = vmatprep.mubr.bf16.mxu0 0
      %2736 = vmatmul.mubr.bf16.gmra.mrb[0].mxu0 %v2618
      %v2737 = vpop.f32.mrb[0].mxu0
      %v2738 = vadd.f32 0.0, %v2737
      %v2739 = vpop.f32.mrb[0].mxu0
      %v2740 = vpop.f32.mrb[0].mxu0
      %v2741 = vadd.f32 0.0, %v2740
      %v2742 = vpop.f32.mrb[0].mxu0
      %2743 = vmatprep.mubr.bf16.mxu0 0
      %2744 = vmatmul.mubr.bf16.gmra.mrb[0].mxu0 %v2621
      %v2745 = vpop.f32.mrb[0].mxu0
      %v2746 = vadd.f32 0.0, %v2745
      %v2747 = vpop.f32.mrb[0].mxu0
      %v2748 = vpop.f32.mrb[0].mxu0
      %v2749 = vadd.f32 0.0, %v2748
      %v2750 = vpop.f32.mrb[0].mxu0
      %2751 = vmatprep.mubr.bf16.mxu0 0
      %2752 = vmatmul.mubr.bf16.gmra.mrb[0].mxu0 %v2624
      %v2753 = vpop.f32.mrb[0].mxu0
      %v2754 = vadd.f32 0.0, %v2753
      %v2755 = vpop.f32.mrb[0].mxu0
      %v2756 = vpop.f32.mrb[0].mxu0
      %v2757 = vadd.f32 0.0, %v2756
      %v2758 = vpop.f32.mrb[0].mxu0
      %2759 = vmatprep.mubr.bf16.mxu0 0
      %2760 = vmatmul.mubr.bf16.gmra.mrb[0].mxu0 %v2627
      %v2761 = vpop.f32.mrb[0].mxu0
      %v2762 = vadd.f32 0.0, %v2761
      %v2763 = vpop.f32.mrb[0].mxu0
      %v2764 = vpop.f32.mrb[0].mxu0
      %v2765 = vadd.f32 0.0, %v2764
      %v2766 = vpop.f32.mrb[0].mxu0
      %2767 = vmatprep.mubr.bf16.mxu0 0
      %2768 = vmatmul.mubr.bf16.gmra.mrb[0].mxu0 %v2630
      %v2769 = vpop.f32.mrb[0].mxu0
      %v2770 = vadd.f32 0.0, %v2769
      %v2771 = vpop.f32.mrb[0].mxu0
      %v2772 = vpop.f32.mrb[0].mxu0
      %v2773 = vadd.f32 0.0, %v2772
      %v2774 = vpop.f32.mrb[0].mxu0
      %2775 = vmatprep.mubr.bf16.mxu0 0
      %2776 = vmatmul.mubr.bf16.gmra.mrb[0].mxu0 %v2633
      %v2777 = vpop.f32.mrb[0].mxu0
      %v2778 = vadd.f32 0.0, %v2777
      %v2779 = vpop.f32.mrb[0].mxu0
      %v2780 = vpop.f32.mrb[0].mxu0
      %v2781 = vadd.f32 0.0, %v2780
      %v2782 = vpop.f32.mrb[0].mxu0
      %2783 = vmatprep.mubr.bf16.mxu0 0
      %2784 = vmatmul.mubr.bf16.gmra.mrb[0].mxu0 %v2636
      %v2785 = vpop.f32.mrb[0].mxu0
      %v2786 = vadd.f32 0.0, %v2785
      %v2787 = vpop.f32.mrb[0].mxu0
      %v2788 = vpop.f32.mrb[0].mxu0
      %v2789 = vadd.f32 0.0, %v2788
      %v2790 = vpop.f32.mrb[0].mxu0
      %2791 = vmatprep.mubr.bf16.mxu0 0
      %2792 = vmatmul.mubr.bf16.gmra.mrb[0].mxu0 %v2639
      %v2793 = vpop.f32.mrb[0].mxu0
      %v2794 = vadd.f32 0.0, %v2793
      %v2795 = vpop.f32.mrb[0].mxu0
      %v2796 = vpop.f32.mrb[0].mxu0
      %v2797 = vadd.f32 0.0, %v2796
      %v2798 = vpop.f32.mrb[0].mxu0
      %2799 = vmatprep.mubr.bf16.mxu0 0
      %2800 = vmatmul.mubr.bf16.gmra.mrb[0].mxu0 %v2642
      %v2801 = vpop.f32.mrb[0].mxu0
      %v2802 = vadd.f32 0.0, %v2801
      %v2803 = vpop.f32.mrb[0].mxu0
      %v2804 = vpop.f32.mrb[0].mxu0
      %v2805 = vadd.f32 0.0, %v2804
      %v2806 = vpop.f32.mrb[0].mxu0
      %2807 = vdwg.mxu0
      %v2809 = vunpack.c.l.b16 %v2553
      %v2810 = vpack.c.b16 %v1840, %v2809
      %v2811 = vrot.slane %v2810, 1
      %v2812 = vrot.slane %v1474, 1
      %v2813 = vsel %vm2562, %v2811, %v2812
      %v2814 = vsel %vm2562, %v2812, %v2564
      %v2815 = vrot.slane %v1843, 1
      %v2816 = vsel %vm2562, %v2590, %v2815
      %v2818 = vsel %vm368, %v2813, 0
      %v2821 = vsel %vm368, %v2814, 0
      %v2824 = vsel %vm368, %v2816, 0
      %v2827 = vsel %vm417, %v2555, 0
      %2829 = vmatprep.subr.bf16.mxu0 0
      %2830 = vmatpush1.bf16.msra.mxu0 %v2827
      %2831 = vmatprep.subr.bf16.mxu0 0
      %2832 = vmatpush1.bf16.msra.mxu0 0
      %2833 = vmatprep.subr.bf16.mxu0 0
      %2834 = vmatpush1.bf16.msra.mxu0 0
      %2835 = vmatprep.subr.bf16.mxu0 0
      %2836 = vmatpush1.bf16.msra.mxu0 0
      %2837 = vmatprep.subr.bf16.mxu0 0
      %2838 = vmatpush1.bf16.msra.mxu0 0
      %2839 = vmatprep.subr.bf16.mxu0 0
      %2840 = vmatpush1.bf16.msra.mxu0 0
      %2841 = vmatprep.subr.bf16.mxu0 0
      %2842 = vmatpush1.bf16.msra.mxu0 0
      %2843 = vmatprep.subr.bf16.mxu0 0
      %2844 = vmatpush1.bf16.msra.mxu0 0
      %2845 = vmatprep.subr.bf16.mxu0 0
      %2846 = vmatpush1.bf16.msra.mxu0 0
      %2847 = vmatprep.subr.bf16.mxu0 0
      %2848 = vmatpush1.bf16.msra.mxu0 0
      %2849 = vmatprep.subr.bf16.mxu0 0
      %2850 = vmatpush1.bf16.msra.mxu0 0
      %2851 = vmatprep.subr.bf16.mxu0 0
      %2852 = vmatpush1.bf16.msra.mxu0 0
      %2853 = vmatprep.subr.bf16.mxu0 0
      %2854 = vmatpush1.bf16.msra.mxu0 0
      %2855 = vmatprep.subr.bf16.mxu0 0
      %2856 = vmatpush1.bf16.msra.mxu0 0
      %2857 = vmatprep.subr.bf16.mxu0 0
      %2858 = vmatpush1.bf16.msra.mxu0 0
      %2859 = vmatprep.subr.bf16.mxu0 0
      %2860 = vmatpush1.bf16.msra.mxu0 0
      %2861 = vmatprep.mubr.bf16.mxu0 0
      %2862 = vmatmul.mubr.bf16.gmra.mrb[0].mxu0 %v2818
      %v2863 = vpop.f32.mrb[0].mxu0
      %v2864 = vadd.f32 %v2682, %v2863
      %v2865 = vpop.f32.mrb[0].mxu0
      %v2866 = vpop.f32.mrb[0].mxu0
      %v2867 = vadd.f32 %v2685, %v2866
      %v2868 = vpop.f32.mrb[0].mxu0
      %2869 = vmatprep.mubr.bf16.mxu0 0
      %2870 = vmatmul.mubr.bf16.gmra.mrb[0].mxu0 %v2821
      %v2871 = vpop.f32.mrb[0].mxu0
      %v2872 = vadd.f32 %v2690, %v2871
      %v2873 = vpop.f32.mrb[0].mxu0
      %v2874 = vpop.f32.mrb[0].mxu0
      %v2875 = vadd.f32 %v2693, %v2874
      %v2876 = vpop.f32.mrb[0].mxu0
      %2877 = vmatprep.mubr.bf16.mxu0 0
      %2878 = vmatmul.mubr.bf16.gmra.mrb[0].mxu0 %v2600
      %v2879 = vpop.f32.mrb[0].mxu0
      %v2880 = vadd.f32 %v2698, %v2879
      %v2881 = vpop.f32.mrb[0].mxu0
      %v2882 = vpop.f32.mrb[0].mxu0
      %v2883 = vadd.f32 %v2701, %v2882
      %v2884 = vpop.f32.mrb[0].mxu0
      %2885 = vmatprep.mubr.bf16.mxu0 0
      %2886 = vmatmul.mubr.bf16.gmra.mrb[0].mxu0 %v2603
      %v2887 = vpop.f32.mrb[0].mxu0
      %v2888 = vadd.f32 %v2706, %v2887
      %v2889 = vpop.f32.mrb[0].mxu0
      %v2890 = vpop.f32.mrb[0].mxu0
      %v2891 = vadd.f32 %v2709, %v2890
      %v2892 = vpop.f32.mrb[0].mxu0
      %2893 = vmatprep.mubr.bf16.mxu0 0
      %2894 = vmatmul.mubr.bf16.gmra.mrb[0].mxu0 %v2606
      %v2895 = vpop.f32.mrb[0].mxu0
      %v2896 = vadd.f32 %v2714, %v2895
      %v2897 = vpop.f32.mrb[0].mxu0
      %v2898 = vpop.f32.mrb[0].mxu0
      %v2899 = vadd.f32 %v2717, %v2898
      %v2900 = vpop.f32.mrb[0].mxu0
      %2901 = vmatprep.mubr.bf16.mxu0 0
      %2902 = vmatmul.mubr.bf16.gmra.mrb[0].mxu0 %v2609
      %v2903 = vpop.f32.mrb[0].mxu0
      %v2904 = vadd.f32 %v2722, %v2903
      %v2905 = vpop.f32.mrb[0].mxu0
      %v2906 = vpop.f32.mrb[0].mxu0
      %v2907 = vadd.f32 %v2725, %v2906
      %v2908 = vpop.f32.mrb[0].mxu0
      %2909 = vmatprep.mubr.bf16.mxu0 0
      %2910 = vmatmul.mubr.bf16.gmra.mrb[0].mxu0 %v2612
      %v2911 = vpop.f32.mrb[0].mxu0
      %v2912 = vadd.f32 %v2730, %v2911
      %v2913 = vpop.f32.mrb[0].mxu0
      %v2914 = vpop.f32.mrb[0].mxu0
      %v2915 = vadd.f32 %v2733, %v2914
      %v2916 = vpop.f32.mrb[0].mxu0
      %2917 = vmatprep.mubr.bf16.mxu0 0
      %2918 = vmatmul.mubr.bf16.gmra.mrb[0].mxu0 %v2615
      %v2919 = vpop.f32.mrb[0].mxu0
      %v2920 = vadd.f32 %v2738, %v2919
      %v2921 = vpop.f32.mrb[0].mxu0
      %v2922 = vpop.f32.mrb[0].mxu0
      %v2923 = vadd.f32 %v2741, %v2922
      %v2924 = vpop.f32.mrb[0].mxu0
      %2925 = vmatprep.mubr.bf16.mxu0 0
      %2926 = vmatmul.mubr.bf16.gmra.mrb[0].mxu0 %v2618
      %v2927 = vpop.f32.mrb[0].mxu0
      %v2928 = vadd.f32 %v2746, %v2927
      %v2929 = vpop.f32.mrb[0].mxu0
      %v2930 = vpop.f32.mrb[0].mxu0
      %v2931 = vadd.f32 %v2749, %v2930
      %v2932 = vpop.f32.mrb[0].mxu0
      %2933 = vmatprep.mubr.bf16.mxu0 0
      %2934 = vmatmul.mubr.bf16.gmra.mrb[0].mxu0 %v2621
      %v2935 = vpop.f32.mrb[0].mxu0
      %v2936 = vadd.f32 %v2754, %v2935
      %v2937 = vpop.f32.mrb[0].mxu0
      %v2938 = vpop.f32.mrb[0].mxu0
      %v2939 = vadd.f32 %v2757, %v2938
      %v2940 = vpop.f32.mrb[0].mxu0
      %2941 = vmatprep.mubr.bf16.mxu0 0
      %2942 = vmatmul.mubr.bf16.gmra.mrb[0].mxu0 %v2624
      %v2943 = vpop.f32.mrb[0].mxu0
      %v2944 = vadd.f32 %v2762, %v2943
      %v2945 = vpop.f32.mrb[0].mxu0
      %v2946 = vpop.f32.mrb[0].mxu0
      %v2947 = vadd.f32 %v2765, %v2946
      %v2948 = vpop.f32.mrb[0].mxu0
      %2949 = vmatprep.mubr.bf16.mxu0 0
      %2950 = vmatmul.mubr.bf16.gmra.mrb[0].mxu0 %v2627
      %v2951 = vpop.f32.mrb[0].mxu0
      %v2952 = vadd.f32 %v2770, %v2951
      %v2953 = vpop.f32.mrb[0].mxu0
      %v2954 = vpop.f32.mrb[0].mxu0
      %v2955 = vadd.f32 %v2773, %v2954
      %v2956 = vpop.f32.mrb[0].mxu0
      %2957 = vmatprep.mubr.bf16.mxu0 0
      %2958 = vmatmul.mubr.bf16.gmra.mrb[0].mxu0 %v2630
      %v2959 = vpop.f32.mrb[0].mxu0
      %v2960 = vadd.f32 %v2778, %v2959
      %v2961 = vpop.f32.mrb[0].mxu0
      %v2962 = vpop.f32.mrb[0].mxu0
      %v2963 = vadd.f32 %v2781, %v2962
      %v2964 = vpop.f32.mrb[0].mxu0
      %2965 = vmatprep.mubr.bf16.mxu0 0
      %2966 = vmatmul.mubr.bf16.gmra.mrb[0].mxu0 %v2633
      %v2967 = vpop.f32.mrb[0].mxu0
      %v2968 = vadd.f32 %v2786, %v2967
      %v2969 = vpop.f32.mrb[0].mxu0
      %v2970 = vpop.f32.mrb[0].mxu0
      %v2971 = vadd.f32 %v2789, %v2970
      %v2972 = vpop.f32.mrb[0].mxu0
      %2973 = vmatprep.mubr.bf16.mxu0 0
      %2974 = vmatmul.mubr.bf16.gmra.mrb[0].mxu0 %v2636
      %v2975 = vpop.f32.mrb[0].mxu0
      %v2976 = vadd.f32 %v2794, %v2975
      %v2977 = vpop.f32.mrb[0].mxu0
      %v2978 = vpop.f32.mrb[0].mxu0
      %v2979 = vadd.f32 %v2797, %v2978
      %v2980 = vpop.f32.mrb[0].mxu0
      %2981 = vmatprep.mubr.bf16.mxu0 0
      %2982 = vmatmul.mubr.bf16.gmra.mrb[0].mxu0 %v2824
      %v2983 = vpop.f32.mrb[0].mxu0
      %v2984 = vadd.f32 %v2802, %v2983
      %v2985 = vpop.f32.mrb[0].mxu0
      %v2986 = vpop.f32.mrb[0].mxu0
      %v2987 = vadd.f32 %v2805, %v2986
      %v2988 = vpop.f32.mrb[0].mxu0
      %2989 = vdwg.mxu0
      %v2990 = vld [vmem:[%s245 + $0x10] sm:$0xe]
      %s2991 = scalar_lea.vmem %s2, 16
      %v2992 = vld [vmem:[%s2991] sm:$0x3]
      %v2994 = vunpack.c.l.b16 %v2990
      %v2995 = vpack.c.b16 %v2096, %v2994
      %v2996 = vrot.slane %v2995, 1
      %v2997 = vrot.slane %v2129, 1
      %v2998 = vsel %vm2562, %v2996, %v2997
      %v2999 = vrot.slane %v2130, 1
      %v3000 = vsel %vm2562, %v2997, %v2999
      %v3001 = vrot.slane %v2131, 1
      %v3002 = vsel %vm2562, %v2999, %v3001
      %v3003 = vrot.slane %v2132, 1
      %v3004 = vsel %vm2562, %v3001, %v3003
      %v3005 = vrot.slane %v2133, 1
      %v3006 = vsel %vm2562, %v3003, %v3005
      %v3007 = vrot.slane %v2134, 1
      %v3008 = vsel %vm2562, %v3005, %v3007
      %v3009 = vrot.slane %v2135, 1
      %v3010 = vsel %vm2562, %v3007, %v3009
      %v3011 = vrot.slane %v2136, 1
      %v3012 = vsel %vm2562, %v3009, %v3011
      %v3013 = vrot.slane %v2137, 1
      %v3014 = vsel %vm2562, %v3011, %v3013
      %v3015 = vrot.slane %v2138, 1
      %v3016 = vsel %vm2562, %v3013, %v3015
      %v3017 = vrot.slane %v2139, 1
      %v3018 = vsel %vm2562, %v3015, %v3017
      %v3019 = vrot.slane %v2140, 1
      %v3020 = vsel %vm2562, %v3017, %v3019
      %v3021 = vrot.slane %v2141, 1
      %v3022 = vsel %vm2562, %v3019, %v3021
      %v3023 = vrot.slane %v2142, 1
      %v3024 = vsel %vm2562, %v3021, %v3023
      %v3025 = vrot.slane %v2143, 1
      %v3026 = vsel %vm2562, %v3023, %v3025
      %v3027 = vrot.slane %v2144, 1
      %v3028 = vsel %vm2562, %v3025, %v3027
      %v3030 = vsel %vm368, %v2998, 0
      %v3033 = vsel %vm368, %v3000, 0
      %v3036 = vsel %vm368, %v3002, 0
      %v3039 = vsel %vm368, %v3004, 0
      %v3042 = vsel %vm368, %v3006, 0
      %v3045 = vsel %vm368, %v3008, 0
      %v3048 = vsel %vm368, %v3010, 0
      %v3051 = vsel %vm368, %v3012, 0
      %v3054 = vsel %vm368, %v3014, 0
      %v3057 = vsel %vm368, %v3016, 0
      %v3060 = vsel %vm368, %v3018, 0
      %v3063 = vsel %vm368, %v3020, 0
      %v3066 = vsel %vm368, %v3022, 0
      %v3069 = vsel %vm368, %v3024, 0
      %v3072 = vsel %vm368, %v3026, 0
      %v3075 = vsel %vm368, %v3028, 0
      %v3078 = vsel %vm417, %v2992, 0
      %3080 = vmatprep.subr.bf16.mxu0 0
      %3081 = vmatpush1.bf16.msra.mxu0 %v3078
      %3082 = vmatprep.subr.bf16.mxu0 0
      %3083 = vmatpush1.bf16.msra.mxu0 0
      %3084 = vmatprep.subr.bf16.mxu0 0
      %3085 = vmatpush1.bf16.msra.mxu0 0
      %3086 = vmatprep.subr.bf16.mxu0 0
      %3087 = vmatpush1.bf16.msra.mxu0 0
      %3088 = vmatprep.subr.bf16.mxu0 0
      %3089 = vmatpush1.bf16.msra.mxu0 0
      %3090 = vmatprep.subr.bf16.mxu0 0
      %3091 = vmatpush1.bf16.msra.mxu0 0
      %3092 = vmatprep.subr.bf16.mxu0 0
      %3093 = vmatpush1.bf16.msra.mxu0 0
      %3094 = vmatprep.subr.bf16.mxu0 0
      %3095 = vmatpush1.bf16.msra.mxu0 0
      %3096 = vmatprep.subr.bf16.mxu0 0
      %3097 = vmatpush1.bf16.msra.mxu0 0
      %3098 = vmatprep.subr.bf16.mxu0 0
      %3099 = vmatpush1.bf16.msra.mxu0 0
      %3100 = vmatprep.subr.bf16.mxu0 0
      %3101 = vmatpush1.bf16.msra.mxu0 0
      %3102 = vmatprep.subr.bf16.mxu0 0
      %3103 = vmatpush1.bf16.msra.mxu0 0
      %3104 = vmatprep.subr.bf16.mxu0 0
      %3105 = vmatpush1.bf16.msra.mxu0 0
      %3106 = vmatprep.subr.bf16.mxu0 0
      %3107 = vmatpush1.bf16.msra.mxu0 0
      %3108 = vmatprep.subr.bf16.mxu0 0
      %3109 = vmatpush1.bf16.msra.mxu0 0
      %3110 = vmatprep.subr.bf16.mxu0 0
      %3111 = vmatpush1.bf16.msra.mxu0 0
      %3112 = vmatprep.mubr.bf16.mxu0 0
      %3113 = vmatmul.mubr.bf16.gmra.mrb[0].mxu0 %v3030
      %v3114 = vpop.f32.mrb[0].mxu0
      %v3115 = vadd.f32 0.0, %v3114
      %v3116 = vpop.f32.mrb[0].mxu0
      %v3117 = vpop.f32.mrb[0].mxu0
      %v3118 = vadd.f32 0.0, %v3117
      %v3119 = vpop.f32.mrb[0].mxu0
      %3120 = vmatprep.mubr.bf16.mxu0 0
      %3121 = vmatmul.mubr.bf16.gmra.mrb[0].mxu0 %v3033
      %v3122 = vpop.f32.mrb[0].mxu0
      %v3123 = vadd.f32 0.0, %v3122
      %v3124 = vpop.f32.mrb[0].mxu0
      %v3125 = vpop.f32.mrb[0].mxu0
      %v3126 = vadd.f32 0.0, %v3125
      %v3127 = vpop.f32.mrb[0].mxu0
      %3128 = vmatprep.mubr.bf16.mxu0 0
      %3129 = vmatmul.mubr.bf16.gmra.mrb[0].mxu0 %v3036
      %v3130 = vpop.f32.mrb[0].mxu0
      %v3131 = vadd.f32 0.0, %v3130
      %v3132 = vpop.f32.mrb[0].mxu0
      %v3133 = vpop.f32.mrb[0].mxu0
      %v3134 = vadd.f32 0.0, %v3133
      %v3135 = vpop.f32.mrb[0].mxu0
      %3136 = vmatprep.mubr.bf16.mxu0 0
      %3137 = vmatmul.mubr.bf16.gmra.mrb[0].mxu0 %v3039
      %v3138 = vpop.f32.mrb[0].mxu0
      %v3139 = vadd.f32 0.0, %v3138
      %v3140 = vpop.f32.mrb[0].mxu0
      %v3141 = vpop.f32.mrb[0].mxu0
      %v3142 = vadd.f32 0.0, %v3141
      %v3143 = vpop.f32.mrb[0].mxu0
      %3144 = vmatprep.mubr.bf16.mxu0 0
      %3145 = vmatmul.mubr.bf16.gmra.mrb[0].mxu0 %v3042
      %v3146 = vpop.f32.mrb[0].mxu0
      %v3147 = vadd.f32 0.0, %v3146
      %v3148 = vpop.f32.mrb[0].mxu0
      %v3149 = vpop.f32.mrb[0].mxu0
      %v3150 = vadd.f32 0.0, %v3149
      %v3151 = vpop.f32.mrb[0].mxu0
      %3152 = vmatprep.mubr.bf16.mxu0 0
      %3153 = vmatmul.mubr.bf16.gmra.mrb[0].mxu0 %v3045
      %v3154 = vpop.f32.mrb[0].mxu0
      %v3155 = vadd.f32 0.0, %v3154
      %v3156 = vpop.f32.mrb[0].mxu0
      %v3157 = vpop.f32.mrb[0].mxu0
      %v3158 = vadd.f32 0.0, %v3157
      %v3159 = vpop.f32.mrb[0].mxu0
      %3160 = vmatprep.mubr.bf16.mxu0 0
      %3161 = vmatmul.mubr.bf16.gmra.mrb[0].mxu0 %v3048
      %v3162 = vpop.f32.mrb[0].mxu0
      %v3163 = vadd.f32 0.0, %v3162
      %v3164 = vpop.f32.mrb[0].mxu0
      %v3165 = vpop.f32.mrb[0].mxu0
      %v3166 = vadd.f32 0.0, %v3165
      %v3167 = vpop.f32.mrb[0].mxu0
      %3168 = vmatprep.mubr.bf16.mxu0 0
      %3169 = vmatmul.mubr.bf16.gmra.mrb[0].mxu0 %v3051
      %v3170 = vpop.f32.mrb[0].mxu0
      %v3171 = vadd.f32 0.0, %v3170
      %v3172 = vpop.f32.mrb[0].mxu0
      %v3173 = vpop.f32.mrb[0].mxu0
      %v3174 = vadd.f32 0.0, %v3173
      %v3175 = vpop.f32.mrb[0].mxu0
      %3176 = vmatprep.mubr.bf16.mxu0 0
      %3177 = vmatmul.mubr.bf16.gmra.mrb[0].mxu0 %v3054
      %v3178 = vpop.f32.mrb[0].mxu0
      %v3179 = vadd.f32 0.0, %v3178
      %v3180 = vpop.f32.mrb[0].mxu0
      %v3181 = vpop.f32.mrb[0].mxu0
      %v3182 = vadd.f32 0.0, %v3181
      %v3183 = vpop.f32.mrb[0].mxu0
      %3184 = vmatprep.mubr.bf16.mxu0 0
      %3185 = vmatmul.mubr.bf16.gmra.mrb[0].mxu0 %v3057
      %v3186 = vpop.f32.mrb[0].mxu0
      %v3187 = vadd.f32 0.0, %v3186
      %v3188 = vpop.f32.mrb[0].mxu0
      %v3189 = vpop.f32.mrb[0].mxu0
      %v3190 = vadd.f32 0.0, %v3189
      %v3191 = vpop.f32.mrb[0].mxu0
      %3192 = vmatprep.mubr.bf16.mxu0 0
      %3193 = vmatmul.mubr.bf16.gmra.mrb[0].mxu0 %v3060
      %v3194 = vpop.f32.mrb[0].mxu0
      %v3195 = vadd.f32 0.0, %v3194
      %v3196 = vpop.f32.mrb[0].mxu0
      %v3197 = vpop.f32.mrb[0].mxu0
      %v3198 = vadd.f32 0.0, %v3197
      %v3199 = vpop.f32.mrb[0].mxu0
      %3200 = vmatprep.mubr.bf16.mxu0 0
      %3201 = vmatmul.mubr.bf16.gmra.mrb[0].mxu0 %v3063
      %v3202 = vpop.f32.mrb[0].mxu0
      %v3203 = vadd.f32 0.0, %v3202
      %v3204 = vpop.f32.mrb[0].mxu0
      %v3205 = vpop.f32.mrb[0].mxu0
      %v3206 = vadd.f32 0.0, %v3205
      %v3207 = vpop.f32.mrb[0].mxu0
      %3208 = vmatprep.mubr.bf16.mxu0 0
      %3209 = vmatmul.mubr.bf16.gmra.mrb[0].mxu0 %v3066
      %v3210 = vpop.f32.mrb[0].mxu0
      %v3211 = vadd.f32 0.0, %v3210
      %v3212 = vpop.f32.mrb[0].mxu0
      %v3213 = vpop.f32.mrb[0].mxu0
      %v3214 = vadd.f32 0.0, %v3213
      %v3215 = vpop.f32.mrb[0].mxu0
      %3216 = vmatprep.mubr.bf16.mxu0 0
      %3217 = vmatmul.mubr.bf16.gmra.mrb[0].mxu0 %v3069
      %v3218 = vpop.f32.mrb[0].mxu0
      %v3219 = vadd.f32 0.0, %v3218
      %v3220 = vpop.f32.mrb[0].mxu0
      %v3221 = vpop.f32.mrb[0].mxu0
      %v3222 = vadd.f32 0.0, %v3221
      %v3223 = vpop.f32.mrb[0].mxu0
      %3224 = vmatprep.mubr.bf16.mxu0 0
      %3225 = vmatmul.mubr.bf16.gmra.mrb[0].mxu0 %v3072
      %v3226 = vpop.f32.mrb[0].mxu0
      %v3227 = vadd.f32 0.0, %v3226
      %v3228 = vpop.f32.mrb[0].mxu0
      %v3229 = vpop.f32.mrb[0].mxu0
      %v3230 = vadd.f32 0.0, %v3229
      %v3231 = vpop.f32.mrb[0].mxu0
      %3232 = vmatprep.mubr.bf16.mxu0 0
      %3233 = vmatmul.mubr.bf16.gmra.mrb[0].mxu0 %v3075
      %v3234 = vpop.f32.mrb[0].mxu0
      %v3235 = vadd.f32 0.0, %v3234
      %v3236 = vpop.f32.mrb[0].mxu0
      %v3237 = vpop.f32.mrb[0].mxu0
      %v3238 = vadd.f32 0.0, %v3237
      %v3239 = vpop.f32.mrb[0].mxu0
      %3240 = vdwg.mxu0
      %v3241 = vadd.f32 %v2864, %v3115
      %v3242 = vadd.f32 %v2867, %v3118
      %v3243 = vadd.f32 %v2872, %v3123
      %v3244 = vadd.f32 %v2875, %v3126
      %v3245 = vadd.f32 %v2880, %v3131
      %v3246 = vadd.f32 %v2883, %v3134
      %v3247 = vadd.f32 %v2888, %v3139
      %v3248 = vadd.f32 %v2891, %v3142
      %v3249 = vadd.f32 %v2896, %v3147
      %v3250 = vadd.f32 %v2899, %v3150
      %v3251 = vadd.f32 %v2904, %v3155
      %v3252 = vadd.f32 %v2907, %v3158
      %v3253 = vadd.f32 %v2912, %v3163
      %v3254 = vadd.f32 %v2915, %v3166
      %v3255 = vadd.f32 %v2920, %v3171
      %v3256 = vadd.f32 %v2923, %v3174
      %v3257 = vadd.f32 %v2928, %v3179
      %v3258 = vadd.f32 %v2931, %v3182
      %v3259 = vadd.f32 %v2936, %v3187
      %v3260 = vadd.f32 %v2939, %v3190
      %v3261 = vadd.f32 %v2944, %v3195
      %v3262 = vadd.f32 %v2947, %v3198
      %v3263 = vadd.f32 %v2952, %v3203
      %v3264 = vadd.f32 %v2955, %v3206
      %v3265 = vadd.f32 %v2960, %v3211
      %v3266 = vadd.f32 %v2963, %v3214
      %v3267 = vadd.f32 %v2968, %v3219
      %v3268 = vadd.f32 %v2971, %v3222
      %v3269 = vadd.f32 %v2976, %v3227
      %v3270 = vadd.f32 %v2979, %v3230
      %v3271 = vadd.f32 %v2984, %v3235
      %v3272 = vadd.f32 %v2987, %v3238
      %3273 = vset.pattern.permute.xlu0 1
      %3274 = vperm.xlu0 %3273, %v1112
      %v3275 = vpop.permute.xlu0 %3274
      %3277 = vset.pattern.permute.xlu0 1
      %3278 = vperm.xlu0 %3277, %v1113
      %v3279 = vpop.permute.xlu0 %3278
      %3281 = vset.pattern.permute.xlu0 1
      %3282 = vperm.xlu0 %3281, %v1114
      %v3283 = vpop.permute.xlu0 %3282
      %3285 = vset.pattern.permute.xlu0 1
      %3286 = vperm.xlu0 %3285, %v1115
      %v3287 = vpop.permute.xlu0 %3286
      %3289 = vset.pattern.permute.xlu0 1
      %3290 = vperm.xlu0 %3289, %v1116
      %v3291 = vpop.permute.xlu0 %3290
      %3293 = vset.pattern.permute.xlu0 1
      %3294 = vperm.xlu0 %3293, %v1117
      %v3295 = vpop.permute.xlu0 %3294
      %3297 = vset.pattern.permute.xlu0 1
      %3298 = vperm.xlu0 %3297, %v1118
      %v3299 = vpop.permute.xlu0 %3298
      %3301 = vset.pattern.permute.xlu0 1
      %3302 = vperm.xlu0 %3301, %v1119
      %v3303 = vpop.permute.xlu0 %3302
      %3305 = vset.pattern.permute.xlu0 1
      %3306 = vperm.xlu0 %3305, %v1120
      %v3307 = vpop.permute.xlu0 %3306
      %3309 = vset.pattern.permute.xlu0 1
      %3310 = vperm.xlu0 %3309, %v1121
      %v3311 = vpop.permute.xlu0 %3310
      %3313 = vset.pattern.permute.xlu0 1
      %3314 = vperm.xlu0 %3313, %v1122
      %v3315 = vpop.permute.xlu0 %3314
      %3317 = vset.pattern.permute.xlu0 1
      %3318 = vperm.xlu0 %3317, %v1123
      %v3319 = vpop.permute.xlu0 %3318
      %3321 = vset.pattern.permute.xlu0 1
      %3322 = vperm.xlu0 %3321, %v1124
      %v3323 = vpop.permute.xlu0 %3322
      %3325 = vset.pattern.permute.xlu0 1
      %3326 = vperm.xlu0 %3325, %v1125
      %v3327 = vpop.permute.xlu0 %3326
      %3329 = vset.pattern.permute.xlu0 1
      %3330 = vperm.xlu0 %3329, %v1126
      %v3331 = vpop.permute.xlu0 %3330
      %3333 = vset.pattern.permute.xlu0 1
      %3334 = vperm.xlu0 %3333, %v1127
      %v3335 = vpop.permute.xlu0 %3334
      %3337 = vset.pattern.permute.xlu0 1
      %3338 = vperm.xlu0 %3337, %v1128
      %v3339 = vpop.permute.xlu0 %3338
      %3341 = vset.pattern.permute.xlu0 1
      %3342 = vperm.xlu0 %3341, %v1129
      %v3343 = vpop.permute.xlu0 %3342
      %3345 = vset.pattern.permute.xlu0 1
      %3346 = vperm.xlu0 %3345, %v1130
      %v3347 = vpop.permute.xlu0 %3346
      %3349 = vset.pattern.permute.xlu0 1
      %3350 = vperm.xlu0 %3349, %v1131
      %v3351 = vpop.permute.xlu0 %3350
      %3353 = vset.pattern.permute.xlu0 1
      %3354 = vperm.xlu0 %3353, %v1132
      %v3355 = vpop.permute.xlu0 %3354
      %3357 = vset.pattern.permute.xlu0 1
      %3358 = vperm.xlu0 %3357, %v1133
      %v3359 = vpop.permute.xlu0 %3358
      %3361 = vset.pattern.permute.xlu0 1
      %3362 = vperm.xlu0 %3361, %v1134
      %v3363 = vpop.permute.xlu0 %3362
      %3365 = vset.pattern.permute.xlu0 1
      %3366 = vperm.xlu0 %3365, %v1135
      %v3367 = vpop.permute.xlu0 %3366
      %3369 = vset.pattern.permute.xlu0 1
      %3370 = vperm.xlu0 %3369, %v1136
      %v3371 = vpop.permute.xlu0 %3370
      %3373 = vset.pattern.permute.xlu0 1
      %3374 = vperm.xlu0 %3373, %v1137
      %v3375 = vpop.permute.xlu0 %3374
      %3377 = vset.pattern.permute.xlu0 1
      %3378 = vperm.xlu0 %3377, %v1138
      %v3379 = vpop.permute.xlu0 %3378
      %3381 = vset.pattern.permute.xlu0 1
      %3382 = vperm.xlu0 %3381, %v1139
      %v3383 = vpop.permute.xlu0 %3382
      %3385 = vset.pattern.permute.xlu0 1
      %3386 = vperm.xlu0 %3385, %v1140
      %v3387 = vpop.permute.xlu0 %3386
      %3389 = vset.pattern.permute.xlu0 1
      %3390 = vperm.xlu0 %3389, %v1141
      %v3391 = vpop.permute.xlu0 %3390
      %3393 = vset.pattern.permute.xlu0 1
      %3394 = vperm.xlu0 %3393, %v1142
      %v3395 = vpop.permute.xlu0 %3394
      %3397 = vset.pattern.permute.xlu0 1
      %3398 = vperm.xlu0 %3397, %v1143
      %v3399 = vpop.permute.xlu0 %3398
      %v3401 = vmul.f32 %v3241, %v3275
      %v3402 = vmul.f32 %v3242, %v3279
      %v3403 = vmul.f32 %v3243, %v3283
      %v3404 = vmul.f32 %v3244, %v3287
      %v3405 = vmul.f32 %v3245, %v3291
      %v3406 = vmul.f32 %v3246, %v3295
      %v3407 = vmul.f32 %v3247, %v3299
      %v3408 = vmul.f32 %v3248, %v3303
      %v3409 = vmul.f32 %v3249, %v3307
      %v3410 = vmul.f32 %v3250, %v3311
      %v3411 = vmul.f32 %v3251, %v3315
      %v3412 = vmul.f32 %v3252, %v3319
      %v3413 = vmul.f32 %v3253, %v3323
      %v3414 = vmul.f32 %v3254, %v3327
      %v3415 = vmul.f32 %v3255, %v3331
      %v3416 = vmul.f32 %v3256, %v3335
      %v3417 = vmul.f32 %v3257, %v3339
      %v3418 = vmul.f32 %v3258, %v3343
      %v3419 = vmul.f32 %v3259, %v3347
      %v3420 = vmul.f32 %v3260, %v3351
      %v3421 = vmul.f32 %v3261, %v3355
      %v3422 = vmul.f32 %v3262, %v3359
      %v3423 = vmul.f32 %v3263, %v3363
      %v3424 = vmul.f32 %v3264, %v3367
      %v3425 = vmul.f32 %v3265, %v3371
      %v3426 = vmul.f32 %v3266, %v3375
      %v3427 = vmul.f32 %v3267, %v3379
      %v3428 = vmul.f32 %v3268, %v3383
      %v3429 = vmul.f32 %v3269, %v3387
      %v3430 = vmul.f32 %v3270, %v3391
      %v3431 = vmul.f32 %v3271, %v3395
      %v3432 = vmul.f32 %v3272, %v3399
      %v3433 = vadd.f32 %v2521, %v3401
      %v3434 = vadd.f32 %v2522, %v3402
      %v3435 = vadd.f32 %v2523, %v3403
      %v3436 = vadd.f32 %v2524, %v3404
      %v3437 = vadd.f32 %v2525, %v3405
      %v3438 = vadd.f32 %v2526, %v3406
      %v3439 = vadd.f32 %v2527, %v3407
      %v3440 = vadd.f32 %v2528, %v3408
      %v3441 = vadd.f32 %v2529, %v3409
      %v3442 = vadd.f32 %v2530, %v3410
      %v3443 = vadd.f32 %v2531, %v3411
      %v3444 = vadd.f32 %v2532, %v3412
      %v3445 = vadd.f32 %v2533, %v3413
      %v3446 = vadd.f32 %v2534, %v3414
      %v3447 = vadd.f32 %v2535, %v3415
      %v3448 = vadd.f32 %v2536, %v3416
      %v3449 = vadd.f32 %v2537, %v3417
      %v3450 = vadd.f32 %v2538, %v3418
      %v3451 = vadd.f32 %v2539, %v3419
      %v3452 = vadd.f32 %v2540, %v3420
      %v3453 = vadd.f32 %v2541, %v3421
      %v3454 = vadd.f32 %v2542, %v3422
      %v3455 = vadd.f32 %v2543, %v3423
      %v3456 = vadd.f32 %v2544, %v3424
      %v3457 = vadd.f32 %v2545, %v3425
      %v3458 = vadd.f32 %v2546, %v3426
      %v3459 = vadd.f32 %v2547, %v3427
      %v3460 = vadd.f32 %v2548, %v3428
      %v3461 = vadd.f32 %v2549, %v3429
      %v3462 = vadd.f32 %v2550, %v3430
      %v3463 = vadd.f32 %v2551, %v3431
      %v3464 = vadd.f32 %v2552, %v3432
      %v3465 = vld [vmem:[%s3] sm:$0x1]
      %v3467 = vlaneseq
      %v3468 = vshrl.u32 %v3467, 7
      %v3469 = vsub.s32 0, %v3468
      %v3470 = vrot.slane %v3465, %v3469
      %v3472 = vadd.f32 %v3433, %v3470
      %v3473 = vadd.f32 %v3434, %v3470
      %v3474 = vadd.f32 %v3435, %v3470
      %v3475 = vadd.f32 %v3436, %v3470
      %v3476 = vadd.f32 %v3437, %v3470
      %v3477 = vadd.f32 %v3438, %v3470
      %v3478 = vadd.f32 %v3439, %v3470
      %v3479 = vadd.f32 %v3440, %v3470
      %v3480 = vadd.f32 %v3441, %v3470
      %v3481 = vadd.f32 %v3442, %v3470
      %v3482 = vadd.f32 %v3443, %v3470
      %v3483 = vadd.f32 %v3444, %v3470
      %v3484 = vadd.f32 %v3445, %v3470
      %v3485 = vadd.f32 %v3446, %v3470
      %v3486 = vadd.f32 %v3447, %v3470
      %v3487 = vadd.f32 %v3448, %v3470
      %v3488 = vadd.f32 %v3449, %v3470
      %v3489 = vadd.f32 %v3450, %v3470
      %v3490 = vadd.f32 %v3451, %v3470
      %v3491 = vadd.f32 %v3452, %v3470
      %v3492 = vadd.f32 %v3453, %v3470
      %v3493 = vadd.f32 %v3454, %v3470
      %v3494 = vadd.f32 %v3455, %v3470
      %v3495 = vadd.f32 %v3456, %v3470
      %v3496 = vadd.f32 %v3457, %v3470
      %v3497 = vadd.f32 %v3458, %v3470
      %v3498 = vadd.f32 %v3459, %v3470
      %v3499 = vadd.f32 %v3460, %v3470
      %v3500 = vadd.f32 %v3461, %v3470
      %v3501 = vadd.f32 %v3462, %v3470
      %v3502 = vadd.f32 %v3463, %v3470
      %v3503 = vadd.f32 %v3464, %v3470
      %v3504 = vmax.f32 %v3472, 0.0
      %v3505 = vmax.f32 %v3473, 0.0
      %v3506 = vmax.f32 %v3474, 0.0
      %v3507 = vmax.f32 %v3475, 0.0
      %v3508 = vmax.f32 %v3476, 0.0
      %v3509 = vmax.f32 %v3477, 0.0
      %v3510 = vmax.f32 %v3478, 0.0
      %v3511 = vmax.f32 %v3479, 0.0
      %v3512 = vmax.f32 %v3480, 0.0
      %v3513 = vmax.f32 %v3481, 0.0
      %v3514 = vmax.f32 %v3482, 0.0
      %v3515 = vmax.f32 %v3483, 0.0
      %v3516 = vmax.f32 %v3484, 0.0
      %v3517 = vmax.f32 %v3485, 0.0
      %v3518 = vmax.f32 %v3486, 0.0
      %v3519 = vmax.f32 %v3487, 0.0
      %v3520 = vmax.f32 %v3488, 0.0
      %v3521 = vmax.f32 %v3489, 0.0
      %v3522 = vmax.f32 %v3490, 0.0
      %v3523 = vmax.f32 %v3491, 0.0
      %v3524 = vmax.f32 %v3492, 0.0
      %v3525 = vmax.f32 %v3493, 0.0
      %v3526 = vmax.f32 %v3494, 0.0
      %v3527 = vmax.f32 %v3495, 0.0
      %v3528 = vmax.f32 %v3496, 0.0
      %v3529 = vmax.f32 %v3497, 0.0
      %v3530 = vmax.f32 %v3498, 0.0
      %v3531 = vmax.f32 %v3499, 0.0
      %v3532 = vmax.f32 %v3500, 0.0
      %v3533 = vmax.f32 %v3501, 0.0
      %v3534 = vmax.f32 %v3502, 0.0
      %v3535 = vmax.f32 %v3503, 0.0
      %vm3536 = vcmask 130048
      %v3537 = vsel %vm3536, %v3504, 0.0
      %v3538 = vsel %vm3536, %v3505, 0.0
      %v3539 = vadd.f32 %v3537, %v3538
      %v3540 = vsel %vm3536, %v3506, 0.0
      %v3541 = vadd.f32 %v3539, %v3540
      %v3542 = vsel %vm3536, %v3507, 0.0
      %v3543 = vadd.f32 %v3541, %v3542
      %v3544 = vsel %vm3536, %v3508, 0.0
      %v3545 = vadd.f32 %v3543, %v3544
      %v3546 = vsel %vm3536, %v3509, 0.0
      %v3547 = vadd.f32 %v3545, %v3546
      %v3548 = vsel %vm3536, %v3510, 0.0
      %v3549 = vadd.f32 %v3547, %v3548
      %v3550 = vsel %vm3536, %v3511, 0.0
      %v3551 = vadd.f32 %v3549, %v3550
      %v3552 = vsel %vm3536, %v3512, 0.0
      %v3553 = vadd.f32 %v3551, %v3552
      %v3554 = vsel %vm3536, %v3513, 0.0
      %v3555 = vadd.f32 %v3553, %v3554
      %v3556 = vsel %vm3536, %v3514, 0.0
      %v3557 = vadd.f32 %v3555, %v3556
      %v3558 = vsel %vm3536, %v3515, 0.0
      %v3559 = vadd.f32 %v3557, %v3558
      %v3560 = vsel %vm3536, %v3516, 0.0
      %v3561 = vadd.f32 %v3559, %v3560
      %v3562 = vsel %vm3536, %v3517, 0.0
      %v3563 = vadd.f32 %v3561, %v3562
      %v3564 = vsel %vm3536, %v3518, 0.0
      %v3565 = vadd.f32 %v3563, %v3564
      %v3566 = vsel %vm3536, %v3519, 0.0
      %v3567 = vadd.f32 %v3565, %v3566
      %v3568 = vsel %vm3536, %v3520, 0.0
      %v3569 = vadd.f32 %v3567, %v3568
      %v3570 = vsel %vm3536, %v3521, 0.0
      %v3571 = vadd.f32 %v3569, %v3570
      %v3572 = vsel %vm3536, %v3522, 0.0
      %v3573 = vadd.f32 %v3571, %v3572
      %v3574 = vsel %vm3536, %v3523, 0.0
      %v3575 = vadd.f32 %v3573, %v3574
      %v3576 = vsel %vm3536, %v3524, 0.0
      %v3577 = vadd.f32 %v3575, %v3576
      %v3578 = vsel %vm3536, %v3525, 0.0
      %v3579 = vadd.f32 %v3577, %v3578
      %v3580 = vsel %vm3536, %v3526, 0.0
      %v3581 = vadd.f32 %v3579, %v3580
      %v3582 = vsel %vm3536, %v3527, 0.0
      %v3583 = vadd.f32 %v3581, %v3582
      %v3584 = vsel %vm3536, %v3528, 0.0
      %v3585 = vadd.f32 %v3583, %v3584
      %v3586 = vsel %vm3536, %v3529, 0.0
      %v3587 = vadd.f32 %v3585, %v3586
      %v3588 = vsel %vm3536, %v3530, 0.0
      %v3589 = vadd.f32 %v3587, %v3588
      %v3590 = vsel %vm3536, %v3531, 0.0
      %v3591 = vadd.f32 %v3589, %v3590
      %v3592 = vsel %vm3536, %v3532, 0.0
      %v3593 = vadd.f32 %v3591, %v3592
      %v3594 = vsel %vm3536, %v3533, 0.0
      %v3595 = vadd.f32 %v3593, %v3594
      %v3596 = vsel %vm3536, %v3534, 0.0
      %v3597 = vadd.f32 %v3595, %v3596
      %v3598 = vsel %vm3536, %v3535, 0.0
      %v3599 = vadd.f32 %v3597, %v3598
      %v3600 = vrot.slane %v3599, 4
      %v3601 = vadd.f32 %v3599, %v3600
      %v3602 = vrot.slane %v3601, 2
      %v3603 = vadd.f32 %v3601, %v3602
      %v3604 = vrot.slane %v3603, 1
      %v3605 = vadd.f32 %v3603, %v3604
      %v3606 = vmul.f32 %v3605, 0.00390625
      %v3607 = vld [vmem:[%s4] sm:$0xff]
      %v3608 = vld [vmem:[%s4 + $0x8] sm:$0xff]
      %v3609 = vld [vmem:[%s5] sm:$0x1]
      %v3611 = vsel %vm3536, %v3606, 0
      %3613 = vmatprep.subr.mxu0 0.0
      %3614 = vmatpush1.msra.mxu0 %v3607
      %3615 = vmatprep.subr.mxu0 0.0
      %3616 = vmatpush1.msra.mxu0 %v3608
      %3617 = vmatprep.subr.mxu0 0.0
      %3618 = vmatpush1.msra.mxu0 0.0
      %3619 = vmatprep.subr.mxu0 0.0
      %3620 = vmatpush1.msra.mxu0 0.0
      %3621 = vmatprep.subr.mxu0 0.0
      %3622 = vmatpush1.msra.mxu0 0.0
      %3623 = vmatprep.subr.mxu0 0.0
      %3624 = vmatpush1.msra.mxu0 0.0
      %3625 = vmatprep.subr.mxu0 0.0
      %3626 = vmatpush1.msra.mxu0 0.0
      %3627 = vmatprep.subr.mxu0 0.0
      %3628 = vmatpush1.msra.mxu0 0.0
      %3629 = vmatprep.subr.mxu0 0.0
      %3630 = vmatpush1.msra.mxu0 0.0
      %3631 = vmatprep.subr.mxu0 0.0
      %3632 = vmatpush1.msra.mxu0 0.0
      %3633 = vmatprep.subr.mxu0 0.0
      %3634 = vmatpush1.msra.mxu0 0.0
      %3635 = vmatprep.subr.mxu0 0.0
      %3636 = vmatpush1.msra.mxu0 0.0
      %3637 = vmatprep.subr.mxu0 0.0
      %3638 = vmatpush1.msra.mxu0 0.0
      %3639 = vmatprep.subr.mxu0 0.0
      %3640 = vmatpush1.msra.mxu0 0.0
      %3641 = vmatprep.subr.mxu0 0.0
      %3642 = vmatpush1.msra.mxu0 0.0
      %3643 = vmatprep.subr.mxu0 0.0
      %3644 = vmatpush1.msra.mxu0 0.0
      %3645 = vmatprep.subr.mxu0 0.0
      %3646 = vmatpush1.msra.mxu0 0.0
      %3647 = vmatprep.subr.mxu0 0.0
      %3648 = vmatpush1.msra.mxu0 0.0
      %3649 = vmatprep.subr.mxu0 0.0
      %3650 = vmatpush1.msra.mxu0 0.0
      %3651 = vmatprep.subr.mxu0 0.0
      %3652 = vmatpush1.msra.mxu0 0.0
      %3653 = vmatprep.subr.mxu0 0.0
      %3654 = vmatpush1.msra.mxu0 0.0
      %3655 = vmatprep.subr.mxu0 0.0
      %3656 = vmatpush1.msra.mxu0 0.0
      %3657 = vmatprep.subr.mxu0 0.0
      %3658 = vmatpush1.msra.mxu0 0.0
      %3659 = vmatprep.subr.mxu0 0.0
      %3660 = vmatpush1.msra.mxu0 0.0
      %3661 = vmatprep.subr.mxu0 0.0
      %3662 = vmatpush1.msra.mxu0 0.0
      %3663 = vmatprep.subr.mxu0 0.0
      %3664 = vmatpush1.msra.mxu0 0.0
      %3665 = vmatprep.subr.mxu0 0.0
      %3666 = vmatpush1.msra.mxu0 0.0
      %3667 = vmatprep.subr.mxu0 0.0
      %3668 = vmatpush1.msra.mxu0 0.0
      %3669 = vmatprep.subr.mxu0 0.0
      %3670 = vmatpush1.msra.mxu0 0.0
      %3671 = vmatprep.subr.mxu0 0.0
      %3672 = vmatpush1.msra.mxu0 0.0
      %3673 = vmatprep.subr.mxu0 0.0
      %3674 = vmatpush1.msra.mxu0 0.0
      %3675 = vmatprep.subr.mxu0 0.0
      %3676 = vmatpush1.msra.mxu0 0.0
      %3677 = vmatprep.mubr.f32.mxu0 0.0
      %3678 = vmatmul.mubr.f32.gmra.mrb[0].mxu0 %v3611
      %v3679 = vpop.f32.mrb[0].mxu0
      %v3680 = vadd.f32 %v3609, %v3679
      %v3681 = vpop.f32.mrb[0].mxu0
      %3682 = vdwg.mxu0
      %v3683 = vlaneseq
      %v3684 = vshrl.u32 %v3683, 7
      %v3685 = vsub.s32 0, %v3684
      %v3686 = vrot.slane %v3680, %v3685
      %3687 = vst [vmem:[%s249] sm:$0xff] %v3686
      %p3688 = scmp.lt.s32.totalorder %s17, 1
      %s3689 = scalar_select %p3688, %s17, 1
      %s3690 = smul.addr %s3689, 8
      %s3691 = scalar_lea.vmem %s6, %s3690
      // Predicated region
      $region45: #{_fused_forward.1} parent=43 // pred_check
        %p3692 = pneg %p166
      $region46: #{_fused_forward.1} parent=43 // pred_check_branch
        %3694 = sbr.rel (%p3692) target = $region48
      $region47: #{_fused_forward.1} parent=43 // pred_region
        _
      $region48: #{_fused_forward.1} parent=43 // pred_fallthru
        _
    $region44: #{_fused_forward.1} parent=5 // pred_fallthru
      _
    %p3695 = scmp.le.s32.totalorder 2, %s12
    // Predicated region
    $region49: #{_fused_forward.1} parent=5 // pred_check
      %p3696 = pneg %p3695
    $region50: #{_fused_forward.1} parent=5 // pred_check_branch
      %3698 = sbr.rel (%p3696) target = $region52
    $region51: #{_fused_forward.1} parent=5 // pred_region
      %s3699 = ssub.s32 %s12, 2
      // Predicated region
      $region53: #{_fused_forward.1} parent=51 // pred_check
        %p3700 = pneg %p172
      $region54: #{_fused_forward.1} parent=51 // pred_check_branch
        %3702 = sbr.rel (%p3700) target = $region56
      $region55: #{_fused_forward.1} parent=51 // pred_region
        %p3703 = scmp.lt.s32.totalorder %s18, 1
        %s3704 = scalar_select %p3703, %s18, 1
        %s3705 = smul.addr %s3704, 8
        %s3706 = scalar_lea.vmem %s6, %s3705
      $region56: #{_fused_forward.1} parent=51 // pred_fallthru
        _
    $region52: #{_fused_forward.1} parent=5 // pred_fallthru
      _
  $region6: #{_fused_forward.1} parent=0 // loop_footer
    %s16 = sadd.s32 1, %s12
  $region7: #{_fused_forward.1} parent=0 // loop_footer_branch
    %11 = sbr.rel target = $region3
  $region8: #{_fused_forward.1} parent=0 // loop_exit
    _

</llo_original>
